<compile_context>
chip_gen: v6e
topology: v6e:2x2x1
jax: 0.10.0
libtpu: 0.0.40
codegen_flags: <defaults>
</compile_context>

<pallas_src>
import jax
import jax.numpy as jnp
from jax import lax
from jax.experimental import pallas as pl
from jax.experimental.pallas import tpu as pltpu


# ----------------------------------------------------------------------------
# Fused Pallas kernel: num_layers x LSTM  ->  Linear  ->  Sigmoid
# ----------------------------------------------------------------------------
def _build_lstm_net_kernel(num_layers, T, Bc, H, O, mxu_dtype, time_major_out):
    fuse_act = (H % 128) != 0        # per-gate lane slices are not lane-clean
    # Full unroll only while the per-step working set (h, c, fused gate tile)
    # comfortably fits the 64-vreg file; otherwise a fori_loop with small unroll.
    unroll_t_max = 64 if Bc * H <= 64 * 128 else 8
    loop_unroll = 2 if Bc * H >= 128 * 128 else 4

    def kernel(*args):
        x_ref = args[0]
        w_refs = args[1:1 + 3 * num_layers]
        wfc_ref = args[1 + 3 * num_layers]          # (O, H)   == W_fc
        bfc_ref = args[2 + 3 * num_layers]          # (1, O)
        out_ref = args[3 + 3 * num_layers]          # (T, Bc) or (Bc, T*O)
        pg_scr = args[4 + 3 * num_layers]           # VMEM (T, Bc, 4H) f32
        seq_scr = args[5 + 3 * num_layers]          # VMEM (T, Bc, H)  f32

        if fuse_act:
            # Hoisted once: lane mask selecting the tanh (g) gate inside the
            # fused (Bc, 4H) tile.
            lane = lax.broadcasted_iota(jnp.int32, (Bc, 4 * H), 1)
            g_mask = (lane >= 2 * H) & (lane < 3 * H)

        for layer in range(num_layers):
            wih_ref = w_refs[3 * layer + 0]         # (d_in, 4H) == W_ih^T
            whh_ref = w_refs[3 * layer + 1]         # (H, 4H)    == W_hh^T (fused gates)
            b_ref = w_refs[3 * layer + 2]           # (1, 4H)    == b_ih + b_hh

            if layer == 0:
                d_in = x_ref.shape[-1]
                cur = x_ref[...].reshape(T * Bc, d_in)
            else:
                cur = seq_scr[...].reshape(T * Bc, H)

            # Hoisted input projection (no sequential dependence): one big MXU
            # matmul, written straight into VMEM scratch.
            pg = jnp.dot(cur.astype(mxu_dtype), wih_ref[...],
                         preferred_element_type=jnp.float32)
            pg_scr[...] = (pg + b_ref[...]).reshape(T, Bc, 4 * H)

            whh = whh_ref[...]                      # hoisted out of the recurrence

            def cell(h, c, pre):
                # ONE fused (Bc,H)@(H,4H) recurrent matmul per step.
                z = pre + jnp.dot(h.astype(mxu_dtype), whh,
                                  preferred_element_type=jnp.float32)
                if fuse_act:
                    # 1 sigmoid + 1 tanh over the whole 4H tile (EUP) + select
                    # instead of 4 activations on quarter-filled vregs.
                    act = jnp.where(g_mask, jnp.tanh(z), jax.nn.sigmoid(z))
                    c_new = act[:, H:2 * H] * c + act[:, 0:H] * act[:, 2 * H:3 * H]
                    h_new = act[:, 3 * H:4 * H] * jnp.tanh(c_new)
                else:
                    # H % 128 == 0 -> per-gate slices are lane-clean.
                    i_g = jax.nn.sigmoid(z[:, 0:H])
                    f_g = jax.nn.sigmoid(z[:, H:2 * H])
                    g_g = jnp.tanh(z[:, 2 * H:3 * H])
                    c_new = f_g * c + i_g * g_g
                    o_g = jax.nn.sigmoid(z[:, 3 * H:4 * H])
                    h_new = o_g * jnp.tanh(c_new)
                return h_new, c_new

            h = jnp.zeros((Bc, H), jnp.float32)
            c = jnp.zeros((Bc, H), jnp.float32)

            if T <= unroll_t_max:
                # Full unroll: scheduler overlaps step t's EUP with t+1's matmul.
                for t in range(T):
                    h, c = cell(h, c, pg_scr[t])
                    seq_scr[t] = h
            else:
                # TODO(synk): for very long sequences, stream pre-gates / the
                # hidden sequence over T chunks (emit_pipeline) instead of
                # holding the whole sequence in VMEM (v7x has only 64 MiB).
                def step(t, carry):
                    hh, cc = carry
                    hh, cc = cell(hh, cc, pg_scr[t])
                    seq_scr[t] = hh
                    return (hh, cc)

                h, c = lax.fori_loop(0, T, step, (h, c), unroll=loop_unroll)

        # ---- fused fc + sigmoid head ----------------------------------------
        if O == 1:
            # VPU multiply + lane reduction: a 1-column MXU matmul would use
            # 1/128th of the MXU and pop masked 1-lane results.
            w_row = wfc_ref[...].astype(jnp.float32).reshape(1, 1, H)
            y2 = jnp.sum(seq_scr[...] * w_row, axis=-1) + bfc_ref[...]   # (T, Bc)
            y2 = jax.nn.sigmoid(y2)
            if time_major_out:
                out_ref[...] = y2.astype(out_ref.dtype)                  # (T, Bc)
            else:
                out_ref[...] = jnp.transpose(y2).astype(out_ref.dtype)   # (Bc, T)
        else:
            cur = seq_scr[...].reshape(T * Bc, H)
            y = lax.dot_general(cur.astype(mxu_dtype), wfc_ref[...],
                                (((1,), (1,)), ((), ())),
                                preferred_element_type=jnp.float32) + bfc_ref[...]
            y = jax.nn.sigmoid(y).reshape(T, Bc, O)
            out_ref[...] = (jnp.transpose(y, (1, 0, 2))
                            .reshape(Bc, T * O).astype(out_ref.dtype))

    return kernel


# ----------------------------------------------------------------------------
# Wrapper: layout plumbing (time-major transpose, batch tiling/padding, weight
# packing) done once on the host side.
# ----------------------------------------------------------------------------
def _round_up(n, m):
    return -(-n // m) * m


def _whole_vmem_spec():
    # Grid-invariant operand: whole array, single-buffered, resident in VMEM.
    return pl.BlockSpec(memory_space=pltpu.MemorySpace.VMEM)


def lstm_forward(x, layer_params, fc_params, *, batch_chunk=None,
                 min_batch_chunks=1, mxu_dtype=jnp.float32):
    """x: (B, T, D) batch-first.  Returns sigmoid(fc(lstm(x))) of shape (B, T, O).

    batch_chunk:       override batch tile rows (e.g. 256 on v6e fills its
                       256-wide MXU; default caps at 128 rows per tile).
    min_batch_chunks:  minimum number of batch tiles (set 2 on v7x so both
                       TensorCores get a grid step even for small batches).
    mxu_dtype:         jnp.bfloat16 casts the matmul operands (weights, h, x)
                       for ~2-3x MXU throughput; elementwise math stays f32.
                       Accuracy-gated (loosens the 1e-5 match), default f32.
    """
    B, T, D = x.shape
    num_layers = len(layer_params)
    H = layer_params[0][1].shape[1]          # w_hh: (4H, H)
    w_fc, b_fc = fc_params
    O = w_fc.shape[0]

    # ---- batch tiling: <=128 rows per tile, low padding waste ---------------
    Bp = _round_up(B, 8)
    if batch_chunk is not None:
        Bc = _round_up(min(batch_chunk, Bp), 8)
    else:
        n_chunks = max(pl.cdiv(Bp, 128), min_batch_chunks)
        Bc = _round_up(pl.cdiv(Bp, n_chunks), 8)
    Bp = _round_up(Bp, Bc)

    xt = jnp.transpose(x.astype(jnp.float32), (1, 0, 2))        # (T, B, D) time-major
    if Bp != B:
        xt = jnp.pad(xt, ((0, 0), (0, Bp - B), (0, 0)))

    # Pack weights:
    #   W_ih^T : (d_in, 4H)  -> hoisted whole-sequence input projection
    #   W_hh^T : (H, 4H)     -> single fused recurrent matmul per step
    #   bias   : (1, 4H)     == b_ih + b_hh
    operands = [xt]
    in_specs = [pl.BlockSpec((T, Bc, D), lambda b: (0, b, 0))]
    w_bytes = 0
    for (w_ih, w_hh, b_ih, b_hh) in layer_params:
        wih_t = jnp.transpose(w_ih).astype(mxu_dtype)            # (d_in, 4H)
        whh_t = jnp.transpose(w_hh).astype(mxu_dtype)            # (H, 4H)
        bias = (b_ih + b_hh).astype(jnp.float32)[None, :]        # (1, 4H)
        operands += [wih_t, whh_t, bias]
        in_specs += [_whole_vmem_spec(), _whole_vmem_spec(), _whole_vmem_spec()]
        w_bytes += (wih_t.size * wih_t.dtype.itemsize
                    + whh_t.size * whh_t.dtype.itemsize + bias.size * 4)
    wfc = w_fc.astype(mxu_dtype)
    bfc = b_fc.astype(jnp.float32)[None, :]
    operands += [wfc, bfc]
    in_specs += [_whole_vmem_spec(), _whole_vmem_spec()]
    w_bytes += wfc.size * wfc.dtype.itemsize + bfc.size * 4

    # Lane-dense output layout: batch tile in the lane dimension when it is
    # lane-aligned (always true for a single tile or Bc % 128 == 0); otherwise
    # (Bc, T*O) with T*O in lanes.  Either way the masked size-1 store is gone.
    time_major_out = (O == 1) and (Bc == Bp or Bc % 128 == 0)
    if time_major_out:
        out_shape = jax.ShapeDtypeStruct((T, Bp), jnp.float32)
        out_spec = pl.BlockSpec((T, Bc), lambda b: (0, b))
    else:
        out_shape = jax.ShapeDtypeStruct((Bp, T * O), jnp.float32)
        out_spec = pl.BlockSpec((Bc, T * O), lambda b: (b, 0))

    # Explicit VMEM budget (v5e scoped default is only 16 MiB; cap below v7x's
    # 64 MiB physical).
    act_bytes = 4 * (2 * T * Bc * D            # double-buffered input block
                     + T * Bc * 4 * H          # pre-gate scratch
                     + T * Bc * H              # inter-layer sequence scratch
                     + 2 * T * Bc * O)         # double-buffered output block
    vmem_limit = int(min(60 * 2**20, max(32 * 2**20, 2 * (act_bytes + w_bytes))))

    kernel = _build_lstm_net_kernel(num_layers, T, Bc, H, O, mxu_dtype,
                                    time_major_out)

    y = pl.pallas_call(
        kernel,
        out_shape=out_shape,
        grid_spec=pltpu.PrefetchScalarGridSpec(
            num_scalar_prefetch=0,
            grid=(Bp // Bc,),
            in_specs=in_specs,
            out_specs=out_spec,
            scratch_shapes=[
                pltpu.VMEM((T, Bc, 4 * H), jnp.float32),   # pre-gates
                pltpu.VMEM((T, Bc, H), jnp.float32),       # inter-layer sequence
            ],
        ),
        compiler_params=pltpu.CompilerParams(
            dimension_semantics=("parallel",),
            vmem_limit_bytes=vmem_limit,
        ),
    )(*operands)

    if time_major_out:
        y = jnp.transpose(y)[:B].reshape(B, T, O)   # (T, Bp) -> (B, T, 1)
    else:
        y = y[:B].reshape(B, T, O)                  # (Bp, T*O) -> (B, T, O)
    return y


# ----------------------------------------------------------------------------
# Deterministic parameter init (PyTorch shapes / default init ranges)
# ----------------------------------------------------------------------------
def init_params(key, input_dim, num_layers, hidden_dim, output_dim):
    k = 1.0 / jnp.sqrt(hidden_dim)
    layers = []
    for layer in range(num_layers):
        d_in = input_dim if layer == 0 else hidden_dim
        key, k1, k2, k3, k4 = jax.random.split(key, 5)
        w_ih = jax.random.uniform(k1, (4 * hidden_dim, d_in), jnp.float32, -k, k)
        w_hh = jax.random.uniform(k2, (4 * hidden_dim, hidden_dim), jnp.float32, -k, k)
        b_ih = jax.random.uniform(k3, (4 * hidden_dim,), jnp.float32, -k, k)
        b_hh = jax.random.uniform(k4, (4 * hidden_dim,), jnp.float32, -k, k)
        layers.append((w_ih, w_hh, b_ih, b_hh))
    key, k1, k2 = jax.random.split(key, 3)
    kf = 1.0 / jnp.sqrt(hidden_dim)
    w_fc = jax.random.uniform(k1, (output_dim, hidden_dim), jnp.float32, -kf, kf)
    b_fc = jax.random.uniform(k2, (output_dim,), jnp.float32, -kf, kf)
    return layers, (w_fc, b_fc)


# ----------------------------------------------------------------------------
# Pure-JAX reference (PyTorch LSTM semantics)
# ----------------------------------------------------------------------------
def lstm_forward_ref(x, layer_params, fc_params):
    B, T, _ = x.shape
    h_seq = x.astype(jnp.float32)
    for (w_ih, w_hh, b_ih, b_hh) in layer_params:
        H = w_hh.shape[1]

        def step(carry, x_t):
            h, c = carry
            gates = x_t @ w_ih.T + h @ w_hh.T + b_ih + b_hh
            i, f, g, o = jnp.split(gates, 4, axis=-1)
            c = jax.nn.sigmoid(f) * c + jax.nn.sigmoid(i) * jnp.tanh(g)
            h = jax.nn.sigmoid(o) * jnp.tanh(c)
            return (h, c), h

        init = (jnp.zeros((B, H), jnp.float32), jnp.zeros((B, H), jnp.float32))
        _, outs = lax.scan(step, init, jnp.transpose(h_seq, (1, 0, 2)))
        h_seq = jnp.transpose(outs, (1, 0, 2))
    w_fc, b_fc = fc_params
    return jax.nn.sigmoid(h_seq @ w_fc.T + b_fc)


if __name__ == "__main__":
    # small shapes consistent with the module
    batch = 4
    seq = 8
    lstm_input_dim = 16
    lstm_num_layer = 2
    lstm_hidden_dim = 32
    lstm_output_dim = 1

    key = jax.random.PRNGKey(0)
    key, kx = jax.random.split(key)
    x = jax.random.normal(kx, (batch, seq, lstm_input_dim), jnp.float32)

    layer_params, fc_params = init_params(
        key, lstm_input_dim, lstm_num_layer, lstm_hidden_dim, lstm_output_dim
    )

    y = lstm_forward(x, layer_params, fc_params)
    y = jax.block_until_ready(y)

    y_ref = lstm_forward_ref(x, layer_params, fc_params)
    assert y.shape == (batch, seq, lstm_output_dim)
    assert jnp.allclose(y, y_ref, atol=1e-5, rtol=1e-5), "mismatch vs pure-JAX reference"

    print("KERNEL_OK")
</pallas_src>

<mosaic_0001>
module attributes {stable_mosaic.version = 11 : i64} {
  func.func @kernel(%arg0: i32, %arg1: memref<8x8x16xf32, #tpu.memory_space<vmem>>, %arg2: memref<16x128xf32, #tpu.memory_space<vmem>>, %arg3: memref<32x128xf32, #tpu.memory_space<vmem>>, %arg4: memref<1x128xf32, #tpu.memory_space<vmem>>, %arg5: memref<32x128xf32, #tpu.memory_space<vmem>>, %arg6: memref<32x128xf32, #tpu.memory_space<vmem>>, %arg7: memref<1x128xf32, #tpu.memory_space<vmem>>, %arg8: memref<1x32xf32, #tpu.memory_space<vmem>>, %arg9: memref<1x1xf32, #tpu.memory_space<vmem>>, %arg10: memref<8x8xf32, #tpu.memory_space<vmem>>, %arg11: memref<8x8x128xf32, #tpu.memory_space<vmem>>, %arg12: memref<8x8x32xf32, #tpu.memory_space<vmem>>) attributes {dimension_semantics = [#tpu.dimension_semantics<parallel>], iteration_bounds = array<i64: 1>, scalar_prefetch = 0 : i64, scratch_operands = 2 : i64, tpu.core_type = #tpu.core_type<tc>, window_params = [{transform_indices = @transform_0, window_bounds = array<i64: 8, 8, 16>}, {pipeline_mode = #tpu.pipeline_mode<synchronous>, transform_indices = @transform_1, window_bounds = array<i64: 16, 128>}, {pipeline_mode = #tpu.pipeline_mode<synchronous>, transform_indices = @transform_2, window_bounds = array<i64: 32, 128>}, {pipeline_mode = #tpu.pipeline_mode<synchronous>, transform_indices = @transform_3, window_bounds = array<i64: 1, 128>}, {pipeline_mode = #tpu.pipeline_mode<synchronous>, transform_indices = @transform_4, window_bounds = array<i64: 32, 128>}, {pipeline_mode = #tpu.pipeline_mode<synchronous>, transform_indices = @transform_5, window_bounds = array<i64: 32, 128>}, {pipeline_mode = #tpu.pipeline_mode<synchronous>, transform_indices = @transform_6, window_bounds = array<i64: 1, 128>}, {pipeline_mode = #tpu.pipeline_mode<synchronous>, transform_indices = @transform_7, window_bounds = array<i64: 1, 32>}, {pipeline_mode = #tpu.pipeline_mode<synchronous>, transform_indices = @transform_8, window_bounds = array<i64: 1, 1>}, {transform_indices = @transform_9, window_bounds = array<i64: 8, 8>}]} {
    %0 = tpu.iota {dimensions = array<i32: 1>} : vector<8x128xi32>
    %c64_i32 = arith.constant 64 : i32
    %1 = vector.broadcast %c64_i32 : i32 to vector<8x128xi32>
    %2 = arith.cmpi sge, %0, %1 : vector<8x128xi32>
    %c96_i32 = arith.constant 96 : i32
    %3 = vector.broadcast %c96_i32 : i32 to vector<8x128xi32>
    %4 = arith.cmpi slt, %0, %3 : vector<8x128xi32>
    %5 = arith.andi %2, %4 : vector<8x128xi1>
    %c0 = arith.constant 0 : index
    %c0_0 = arith.constant 0 : index
    %c0_1 = arith.constant 0 : index
    %6 = vector.load %arg1[%c0, %c0_0, %c0_1] : memref<8x8x16xf32, #tpu.memory_space<vmem>>, vector<8x8x16xf32>
    %7 = vector.shape_cast %6 : vector<8x8x16xf32> to vector<64x16xf32>
    %c0_2 = arith.constant 0 : index
    %c0_3 = arith.constant 0 : index
    %8 = vector.load %arg2[%c0_2, %c0_3] : memref<16x128xf32, #tpu.memory_space<vmem>>, vector<16x128xf32>
    %cst = arith.constant dense<0.000000e+00> : vector<64x128xf32>
    %9 = tpu.matmul %7, %8, %cst {dimension_numbers = #tpu.dot_dimension_numbers<[1], [0], [0], [1], [0, 0, 1, 1], [], []>} : vector<64x16xf32>, vector<16x128xf32>, vector<64x128xf32> -> vector<64x128xf32>
    %c0_4 = arith.constant 0 : index
    %c0_5 = arith.constant 0 : index
    %10 = vector.load %arg4[%c0_4, %c0_5] : memref<1x128xf32, #tpu.memory_space<vmem>>, vector<1x128xf32>
    %11 = vector.broadcast %10 : vector<1x128xf32> to vector<64x128xf32>
    %12 = arith.addf %9, %11 : vector<64x128xf32>
    %13 = vector.shape_cast %12 : vector<64x128xf32> to vector<8x8x128xf32>
    %c0_6 = arith.constant 0 : index
    %c0_7 = arith.constant 0 : index
    %c0_8 = arith.constant 0 : index
    %14 = vector.load %arg11[%c0_6, %c0_7, %c0_8] : memref<8x8x128xf32, #tpu.memory_space<vmem>>, vector<8x8x128xf32>
    tpu.vector_store %arg11[%c0_6, %c0_7, %c0_8], %13 {strides = array<i32>} : memref<8x8x128xf32, #tpu.memory_space<vmem>>, vector<8x8x128xf32>,
    %c0_9 = arith.constant 0 : index
    %c0_10 = arith.constant 0 : index
    %15 = vector.load %arg3[%c0_9, %c0_10] : memref<32x128xf32, #tpu.memory_space<vmem>>, vector<32x128xf32>
    %cst_11 = arith.constant 0.000000e+00 : f32
    %16 = vector.broadcast %cst_11 : f32 to vector<8x32xf32>
    %cst_12 = arith.constant 0.000000e+00 : f32
    %17 = vector.broadcast %cst_12 : f32 to vector<8x32xf32>
    %c0_13 = arith.constant 0 : index
    %c0_14 = arith.constant 0 : index
    %c0_15 = arith.constant 0 : index
    %18 = vector.load %arg11[%c0_13, %c0_14, %c0_15] : memref<8x8x128xf32, #tpu.memory_space<vmem>>, vector<1x8x128xf32>
    %19 = vector.shape_cast %18 : vector<1x8x128xf32> to vector<8x128xf32>
    %cst_16 = arith.constant dense<0.000000e+00> : vector<8x128xf32>
    %20 = tpu.matmul %16, %15, %cst_16 {dimension_numbers = #tpu.dot_dimension_numbers<[1], [0], [0], [1], [0, 0, 1, 1], [], []>} : vector<8x32xf32>, vector<32x128xf32>, vector<8x128xf32> -> vector<8x128xf32>
    %21 = arith.addf %19, %20 : vector<8x128xf32>
    %22 = math.tanh %21 : vector<8x128xf32>
    %23 = arith.negf %21 : vector<8x128xf32>
    %24 = math.exp %23 : vector<8x128xf32>
    %cst_17 = arith.constant 1.000000e+00 : f32
    %25 = vector.broadcast %cst_17 : f32 to vector<8x128xf32>
    %26 = arith.addf %25, %24 : vector<8x128xf32>
    %27 = arith.divf %25, %26 : vector<8x128xf32>
    %28 = arith.select %5, %22, %27 : vector<8x128xi1>, vector<8x128xf32>
    %29 = vector.extract_strided_slice %28 {offsets = [0, 32], sizes = [8, 32], strides = [1, 1]} : vector<8x128xf32> to vector<8x32xf32>
    %30 = arith.mulf %29, %17 : vector<8x32xf32>
    %31 = vector.extract_strided_slice %28 {offsets = [0, 0], sizes = [8, 32], strides = [1, 1]} : vector<8x128xf32> to vector<8x32xf32>
    %32 = vector.extract_strided_slice %28 {offsets = [0, 64], sizes = [8, 32], strides = [1, 1]} : vector<8x128xf32> to vector<8x32xf32>
    %33 = arith.mulf %31, %32 : vector<8x32xf32>
    %34 = arith.addf %30, %33 : vector<8x32xf32>
    %35 = vector.extract_strided_slice %28 {offsets = [0, 96], sizes = [8, 32], strides = [1, 1]} : vector<8x128xf32> to vector<8x32xf32>
    %36 = math.tanh %34 : vector<8x32xf32>
    %37 = arith.mulf %35, %36 : vector<8x32xf32>
    %c0_18 = arith.constant 0 : index
    %c0_19 = arith.constant 0 : index
    %c0_20 = arith.constant 0 : index
    %38 = vector.load %arg12[%c0_18, %c0_19, %c0_20] : memref<8x8x32xf32, #tpu.memory_space<vmem>>, vector<1x8x32xf32>
    %39 = vector.shape_cast %38 : vector<1x8x32xf32> to vector<8x32xf32>
    %40 = vector.shape_cast %37 : vector<8x32xf32> to vector<1x8x32xf32>
    tpu.vector_store %arg12[%c0_18, %c0_19, %c0_20], %40 {strides = array<i32>} : memref<8x8x32xf32, #tpu.memory_space<vmem>>, vector<1x8x32xf32>,
    %c1 = arith.constant 1 : index
    %c0_21 = arith.constant 0 : index
    %c0_22 = arith.constant 0 : index
    %41 = vector.load %arg11[%c1, %c0_21, %c0_22] : memref<8x8x128xf32, #tpu.memory_space<vmem>>, vector<1x8x128xf32>
    %42 = vector.shape_cast %41 : vector<1x8x128xf32> to vector<8x128xf32>
    %cst_23 = arith.constant dense<0.000000e+00> : vector<8x128xf32>
    %43 = tpu.matmul %37, %15, %cst_23 {dimension_numbers = #tpu.dot_dimension_numbers<[1], [0], [0], [1], [0, 0, 1, 1], [], []>} : vector<8x32xf32>, vector<32x128xf32>, vector<8x128xf32> -> vector<8x128xf32>
    %44 = arith.addf %42, %43 : vector<8x128xf32>
    %45 = math.tanh %44 : vector<8x128xf32>
    %46 = arith.negf %44 : vector<8x128xf32>
    %47 = math.exp %46 : vector<8x128xf32>
    %cst_24 = arith.constant 1.000000e+00 : f32
    %48 = vector.broadcast %cst_24 : f32 to vector<8x128xf32>
    %49 = arith.addf %48, %47 : vector<8x128xf32>
    %50 = arith.divf %48, %49 : vector<8x128xf32>
    %51 = arith.select %5, %45, %50 : vector<8x128xi1>, vector<8x128xf32>
    %52 = vector.extract_strided_slice %51 {offsets = [0, 32], sizes = [8, 32], strides = [1, 1]} : vector<8x128xf32> to vector<8x32xf32>
    %53 = arith.mulf %52, %34 : vector<8x32xf32>
    %54 = vector.extract_strided_slice %51 {offsets = [0, 0], sizes = [8, 32], strides = [1, 1]} : vector<8x128xf32> to vector<8x32xf32>
    %55 = vector.extract_strided_slice %51 {offsets = [0, 64], sizes = [8, 32], strides = [1, 1]} : vector<8x128xf32> to vector<8x32xf32>
    %56 = arith.mulf %54, %55 : vector<8x32xf32>
    %57 = arith.addf %53, %56 : vector<8x32xf32>
    %58 = vector.extract_strided_slice %51 {offsets = [0, 96], sizes = [8, 32], strides = [1, 1]} : vector<8x128xf32> to vector<8x32xf32>
    %59 = math.tanh %57 : vector<8x32xf32>
    %60 = arith.mulf %58, %59 : vector<8x32xf32>
    %c1_25 = arith.constant 1 : index
    %c0_26 = arith.constant 0 : index
    %c0_27 = arith.constant 0 : index
    %61 = vector.load %arg12[%c1_25, %c0_26, %c0_27] : memref<8x8x32xf32, #tpu.memory_space<vmem>>, vector<1x8x32xf32>
    %62 = vector.shape_cast %61 : vector<1x8x32xf32> to vector<8x32xf32>
    %63 = vector.shape_cast %60 : vector<8x32xf32> to vector<1x8x32xf32>
    tpu.vector_store %arg12[%c1_25, %c0_26, %c0_27], %63 {strides = array<i32>} : memref<8x8x32xf32, #tpu.memory_space<vmem>>, vector<1x8x32xf32>,
    %c2 = arith.constant 2 : index
    %c0_28 = arith.constant 0 : index
    %c0_29 = arith.constant 0 : index
    %64 = vector.load %arg11[%c2, %c0_28, %c0_29] : memref<8x8x128xf32, #tpu.memory_space<vmem>>, vector<1x8x128xf32>
    %65 = vector.shape_cast %64 : vector<1x8x128xf32> to vector<8x128xf32>
    %cst_30 = arith.constant dense<0.000000e+00> : vector<8x128xf32>
    %66 = tpu.matmul %60, %15, %cst_30 {dimension_numbers = #tpu.dot_dimension_numbers<[1], [0], [0], [1], [0, 0, 1, 1], [], []>} : vector<8x32xf32>, vector<32x128xf32>, vector<8x128xf32> -> vector<8x128xf32>
    %67 = arith.addf %65, %66 : vector<8x128xf32>
    %68 = math.tanh %67 : vector<8x128xf32>
    %69 = arith.negf %67 : vector<8x128xf32>
    %70 = math.exp %69 : vector<8x128xf32>
    %cst_31 = arith.constant 1.000000e+00 : f32
    %71 = vector.broadcast %cst_31 : f32 to vector<8x128xf32>
    %72 = arith.addf %71, %70 : vector<8x128xf32>
    %73 = arith.divf %71, %72 : vector<8x128xf32>
    %74 = arith.select %5, %68, %73 : vector<8x128xi1>, vector<8x128xf32>
    %75 = vector.extract_strided_slice %74 {offsets = [0, 32], sizes = [8, 32], strides = [1, 1]} : vector<8x128xf32> to vector<8x32xf32>
    %76 = arith.mulf %75, %57 : vector<8x32xf32>
    %77 = vector.extract_strided_slice %74 {offsets = [0, 0], sizes = [8, 32], strides = [1, 1]} : vector<8x128xf32> to vector<8x32xf32>
    %78 = vector.extract_strided_slice %74 {offsets = [0, 64], sizes = [8, 32], strides = [1, 1]} : vector<8x128xf32> to vector<8x32xf32>
    %79 = arith.mulf %77, %78 : vector<8x32xf32>
    %80 = arith.addf %76, %79 : vector<8x32xf32>
    %81 = vector.extract_strided_slice %74 {offsets = [0, 96], sizes = [8, 32], strides = [1, 1]} : vector<8x128xf32> to vector<8x32xf32>
    %82 = math.tanh %80 : vector<8x32xf32>
    %83 = arith.mulf %81, %82 : vector<8x32xf32>
    %c2_32 = arith.constant 2 : index
    %c0_33 = arith.constant 0 : index
    %c0_34 = arith.constant 0 : index
    %84 = vector.load %arg12[%c2_32, %c0_33, %c0_34] : memref<8x8x32xf32, #tpu.memory_space<vmem>>, vector<1x8x32xf32>
    %85 = vector.shape_cast %84 : vector<1x8x32xf32> to vector<8x32xf32>
    %86 = vector.shape_cast %83 : vector<8x32xf32> to vector<1x8x32xf32>
    tpu.vector_store %arg12[%c2_32, %c0_33, %c0_34], %86 {strides = array<i32>} : memref<8x8x32xf32, #tpu.memory_space<vmem>>, vector<1x8x32xf32>,
    %c3 = arith.constant 3 : index
    %c0_35 = arith.constant 0 : index
    %c0_36 = arith.constant 0 : index
    %87 = vector.load %arg11[%c3, %c0_35, %c0_36] : memref<8x8x128xf32, #tpu.memory_space<vmem>>, vector<1x8x128xf32>
    %88 = vector.shape_cast %87 : vector<1x8x128xf32> to vector<8x128xf32>
    %cst_37 = arith.constant dense<0.000000e+00> : vector<8x128xf32>
    %89 = tpu.matmul %83, %15, %cst_37 {dimension_numbers = #tpu.dot_dimension_numbers<[1], [0], [0], [1], [0, 0, 1, 1], [], []>} : vector<8x32xf32>, vector<32x128xf32>, vector<8x128xf32> -> vector<8x128xf32>
    %90 = arith.addf %88, %89 : vector<8x128xf32>
    %91 = math.tanh %90 : vector<8x128xf32>
    %92 = arith.negf %90 : vector<8x128xf32>
    %93 = math.exp %92 : vector<8x128xf32>
    %cst_38 = arith.constant 1.000000e+00 : f32
    %94 = vector.broadcast %cst_38 : f32 to vector<8x128xf32>
    %95 = arith.addf %94, %93 : vector<8x128xf32>
    %96 = arith.divf %94, %95 : vector<8x128xf32>
    %97 = arith.select %5, %91, %96 : vector<8x128xi1>, vector<8x128xf32>
    %98 = vector.extract_strided_slice %97 {offsets = [0, 32], sizes = [8, 32], strides = [1, 1]} : vector<8x128xf32> to vector<8x32xf32>
    %99 = arith.mulf %98, %80 : vector<8x32xf32>
    %100 = vector.extract_strided_slice %97 {offsets = [0, 0], sizes = [8, 32], strides = [1, 1]} : vector<8x128xf32> to vector<8x32xf32>
    %101 = vector.extract_strided_slice %97 {offsets = [0, 64], sizes = [8, 32], strides = [1, 1]} : vector<8x128xf32> to vector<8x32xf32>
    %102 = arith.mulf %100, %101 : vector<8x32xf32>
    %103 = arith.addf %99, %102 : vector<8x32xf32>
    %104 = vector.extract_strided_slice %97 {offsets = [0, 96], sizes = [8, 32], strides = [1, 1]} : vector<8x128xf32> to vector<8x32xf32>
    %105 = math.tanh %103 : vector<8x32xf32>
    %106 = arith.mulf %104, %105 : vector<8x32xf32>
    %c3_39 = arith.constant 3 : index
    %c0_40 = arith.constant 0 : index
    %c0_41 = arith.constant 0 : index
    %107 = vector.load %arg12[%c3_39, %c0_40, %c0_41] : memref<8x8x32xf32, #tpu.memory_space<vmem>>, vector<1x8x32xf32>
    %108 = vector.shape_cast %107 : vector<1x8x32xf32> to vector<8x32xf32>
    %109 = vector.shape_cast %106 : vector<8x32xf32> to vector<1x8x32xf32>
    tpu.vector_store %arg12[%c3_39, %c0_40, %c0_41], %109 {strides = array<i32>} : memref<8x8x32xf32, #tpu.memory_space<vmem>>, vector<1x8x32xf32>,
    %c4 = arith.constant 4 : index
    %c0_42 = arith.constant 0 : index
    %c0_43 = arith.constant 0 : index
    %110 = vector.load %arg11[%c4, %c0_42, %c0_43] : memref<8x8x128xf32, #tpu.memory_space<vmem>>, vector<1x8x128xf32>
    %111 = vector.shape_cast %110 : vector<1x8x128xf32> to vector<8x128xf32>
    %cst_44 = arith.constant dense<0.000000e+00> : vector<8x128xf32>
    %112 = tpu.matmul %106, %15, %cst_44 {dimension_numbers = #tpu.dot_dimension_numbers<[1], [0], [0], [1], [0, 0, 1, 1], [], []>} : vector<8x32xf32>, vector<32x128xf32>, vector<8x128xf32> -> vector<8x128xf32>
    %113 = arith.addf %111, %112 : vector<8x128xf32>
    %114 = math.tanh %113 : vector<8x128xf32>
    %115 = arith.negf %113 : vector<8x128xf32>
    %116 = math.exp %115 : vector<8x128xf32>
    %cst_45 = arith.constant 1.000000e+00 : f32
    %117 = vector.broadcast %cst_45 : f32 to vector<8x128xf32>
    %118 = arith.addf %117, %116 : vector<8x128xf32>
    %119 = arith.divf %117, %118 : vector<8x128xf32>
    %120 = arith.select %5, %114, %119 : vector<8x128xi1>, vector<8x128xf32>
    %121 = vector.extract_strided_slice %120 {offsets = [0, 32], sizes = [8, 32], strides = [1, 1]} : vector<8x128xf32> to vector<8x32xf32>
    %122 = arith.mulf %121, %103 : vector<8x32xf32>
    %123 = vector.extract_strided_slice %120 {offsets = [0, 0], sizes = [8, 32], strides = [1, 1]} : vector<8x128xf32> to vector<8x32xf32>
    %124 = vector.extract_strided_slice %120 {offsets = [0, 64], sizes = [8, 32], strides = [1, 1]} : vector<8x128xf32> to vector<8x32xf32>
    %125 = arith.mulf %123, %124 : vector<8x32xf32>
    %126 = arith.addf %122, %125 : vector<8x32xf32>
    %127 = vector.extract_strided_slice %120 {offsets = [0, 96], sizes = [8, 32], strides = [1, 1]} : vector<8x128xf32> to vector<8x32xf32>
    %128 = math.tanh %126 : vector<8x32xf32>
    %129 = arith.mulf %127, %128 : vector<8x32xf32>
    %c4_46 = arith.constant 4 : index
    %c0_47 = arith.constant 0 : index
    %c0_48 = arith.constant 0 : index
    %130 = vector.load %arg12[%c4_46, %c0_47, %c0_48] : memref<8x8x32xf32, #tpu.memory_space<vmem>>, vector<1x8x32xf32>
    %131 = vector.shape_cast %130 : vector<1x8x32xf32> to vector<8x32xf32>
    %132 = vector.shape_cast %129 : vector<8x32xf32> to vector<1x8x32xf32>
    tpu.vector_store %arg12[%c4_46, %c0_47, %c0_48], %132 {strides = array<i32>} : memref<8x8x32xf32, #tpu.memory_space<vmem>>, vector<1x8x32xf32>,
    %c5 = arith.constant 5 : index
    %c0_49 = arith.constant 0 : index
    %c0_50 = arith.constant 0 : index
    %133 = vector.load %arg11[%c5, %c0_49, %c0_50] : memref<8x8x128xf32, #tpu.memory_space<vmem>>, vector<1x8x128xf32>
    %134 = vector.shape_cast %133 : vector<1x8x128xf32> to vector<8x128xf32>
    %cst_51 = arith.constant dense<0.000000e+00> : vector<8x128xf32>
    %135 = tpu.matmul %129, %15, %cst_51 {dimension_numbers = #tpu.dot_dimension_numbers<[1], [0], [0], [1], [0, 0, 1, 1], [], []>} : vector<8x32xf32>, vector<32x128xf32>, vector<8x128xf32> -> vector<8x128xf32>
    %136 = arith.addf %134, %135 : vector<8x128xf32>
    %137 = math.tanh %136 : vector<8x128xf32>
    %138 = arith.negf %136 : vector<8x128xf32>
    %139 = math.exp %138 : vector<8x128xf32>
    %cst_52 = arith.constant 1.000000e+00 : f32
    %140 = vector.broadcast %cst_52 : f32 to vector<8x128xf32>
    %141 = arith.addf %140, %139 : vector<8x128xf32>
    %142 = arith.divf %140, %141 : vector<8x128xf32>
    %143 = arith.select %5, %137, %142 : vector<8x128xi1>, vector<8x128xf32>
    %144 = vector.extract_strided_slice %143 {offsets = [0, 32], sizes = [8, 32], strides = [1, 1]} : vector<8x128xf32> to vector<8x32xf32>
    %145 = arith.mulf %144, %126 : vector<8x32xf32>
    %146 = vector.extract_strided_slice %143 {offsets = [0, 0], sizes = [8, 32], strides = [1, 1]} : vector<8x128xf32> to vector<8x32xf32>
    %147 = vector.extract_strided_slice %143 {offsets = [0, 64], sizes = [8, 32], strides = [1, 1]} : vector<8x128xf32> to vector<8x32xf32>
    %148 = arith.mulf %146, %147 : vector<8x32xf32>
    %149 = arith.addf %145, %148 : vector<8x32xf32>
    %150 = vector.extract_strided_slice %143 {offsets = [0, 96], sizes = [8, 32], strides = [1, 1]} : vector<8x128xf32> to vector<8x32xf32>
    %151 = math.tanh %149 : vector<8x32xf32>
    %152 = arith.mulf %150, %151 : vector<8x32xf32>
    %c5_53 = arith.constant 5 : index
    %c0_54 = arith.constant 0 : index
    %c0_55 = arith.constant 0 : index
    %153 = vector.load %arg12[%c5_53, %c0_54, %c0_55] : memref<8x8x32xf32, #tpu.memory_space<vmem>>, vector<1x8x32xf32>
    %154 = vector.shape_cast %153 : vector<1x8x32xf32> to vector<8x32xf32>
    %155 = vector.shape_cast %152 : vector<8x32xf32> to vector<1x8x32xf32>
    tpu.vector_store %arg12[%c5_53, %c0_54, %c0_55], %155 {strides = array<i32>} : memref<8x8x32xf32, #tpu.memory_space<vmem>>, vector<1x8x32xf32>,
    %c6 = arith.constant 6 : index
    %c0_56 = arith.constant 0 : index
    %c0_57 = arith.constant 0 : index
    %156 = vector.load %arg11[%c6, %c0_56, %c0_57] : memref<8x8x128xf32, #tpu.memory_space<vmem>>, vector<1x8x128xf32>
    %157 = vector.shape_cast %156 : vector<1x8x128xf32> to vector<8x128xf32>
    %cst_58 = arith.constant dense<0.000000e+00> : vector<8x128xf32>
    %158 = tpu.matmul %152, %15, %cst_58 {dimension_numbers = #tpu.dot_dimension_numbers<[1], [0], [0], [1], [0, 0, 1, 1], [], []>} : vector<8x32xf32>, vector<32x128xf32>, vector<8x128xf32> -> vector<8x128xf32>
    %159 = arith.addf %157, %158 : vector<8x128xf32>
    %160 = math.tanh %159 : vector<8x128xf32>
    %161 = arith.negf %159 : vector<8x128xf32>
    %162 = math.exp %161 : vector<8x128xf32>
    %cst_59 = arith.constant 1.000000e+00 : f32
    %163 = vector.broadcast %cst_59 : f32 to vector<8x128xf32>
    %164 = arith.addf %163, %162 : vector<8x128xf32>
    %165 = arith.divf %163, %164 : vector<8x128xf32>
    %166 = arith.select %5, %160, %165 : vector<8x128xi1>, vector<8x128xf32>
    %167 = vector.extract_strided_slice %166 {offsets = [0, 32], sizes = [8, 32], strides = [1, 1]} : vector<8x128xf32> to vector<8x32xf32>
    %168 = arith.mulf %167, %149 : vector<8x32xf32>
    %169 = vector.extract_strided_slice %166 {offsets = [0, 0], sizes = [8, 32], strides = [1, 1]} : vector<8x128xf32> to vector<8x32xf32>
    %170 = vector.extract_strided_slice %166 {offsets = [0, 64], sizes = [8, 32], strides = [1, 1]} : vector<8x128xf32> to vector<8x32xf32>
    %171 = arith.mulf %169, %170 : vector<8x32xf32>
    %172 = arith.addf %168, %171 : vector<8x32xf32>
    %173 = vector.extract_strided_slice %166 {offsets = [0, 96], sizes = [8, 32], strides = [1, 1]} : vector<8x128xf32> to vector<8x32xf32>
    %174 = math.tanh %172 : vector<8x32xf32>
    %175 = arith.mulf %173, %174 : vector<8x32xf32>
    %c6_60 = arith.constant 6 : index
    %c0_61 = arith.constant 0 : index
    %c0_62 = arith.constant 0 : index
    %176 = vector.load %arg12[%c6_60, %c0_61, %c0_62] : memref<8x8x32xf32, #tpu.memory_space<vmem>>, vector<1x8x32xf32>
    %177 = vector.shape_cast %176 : vector<1x8x32xf32> to vector<8x32xf32>
    %178 = vector.shape_cast %175 : vector<8x32xf32> to vector<1x8x32xf32>
    tpu.vector_store %arg12[%c6_60, %c0_61, %c0_62], %178 {strides = array<i32>} : memref<8x8x32xf32, #tpu.memory_space<vmem>>, vector<1x8x32xf32>,
    %c7 = arith.constant 7 : index
    %c0_63 = arith.constant 0 : index
    %c0_64 = arith.constant 0 : index
    %179 = vector.load %arg11[%c7, %c0_63, %c0_64] : memref<8x8x128xf32, #tpu.memory_space<vmem>>, vector<1x8x128xf32>
    %180 = vector.shape_cast %179 : vector<1x8x128xf32> to vector<8x128xf32>
    %cst_65 = arith.constant dense<0.000000e+00> : vector<8x128xf32>
    %181 = tpu.matmul %175, %15, %cst_65 {dimension_numbers = #tpu.dot_dimension_numbers<[1], [0], [0], [1], [0, 0, 1, 1], [], []>} : vector<8x32xf32>, vector<32x128xf32>, vector<8x128xf32> -> vector<8x128xf32>
    %182 = arith.addf %180, %181 : vector<8x128xf32>
    %183 = math.tanh %182 : vector<8x128xf32>
    %184 = arith.negf %182 : vector<8x128xf32>
    %185 = math.exp %184 : vector<8x128xf32>
    %cst_66 = arith.constant 1.000000e+00 : f32
    %186 = vector.broadcast %cst_66 : f32 to vector<8x128xf32>
    %187 = arith.addf %186, %185 : vector<8x128xf32>
    %188 = arith.divf %186, %187 : vector<8x128xf32>
    %189 = arith.select %5, %183, %188 : vector<8x128xi1>, vector<8x128xf32>
    %190 = vector.extract_strided_slice %189 {offsets = [0, 32], sizes = [8, 32], strides = [1, 1]} : vector<8x128xf32> to vector<8x32xf32>
    %191 = arith.mulf %190, %172 : vector<8x32xf32>
    %192 = vector.extract_strided_slice %189 {offsets = [0, 0], sizes = [8, 32], strides = [1, 1]} : vector<8x128xf32> to vector<8x32xf32>
    %193 = vector.extract_strided_slice %189 {offsets = [0, 64], sizes = [8, 32], strides = [1, 1]} : vector<8x128xf32> to vector<8x32xf32>
    %194 = arith.mulf %192, %193 : vector<8x32xf32>
    %195 = arith.addf %191, %194 : vector<8x32xf32>
    %196 = vector.extract_strided_slice %189 {offsets = [0, 96], sizes = [8, 32], strides = [1, 1]} : vector<8x128xf32> to vector<8x32xf32>
    %197 = math.tanh %195 : vector<8x32xf32>
    %198 = arith.mulf %196, %197 : vector<8x32xf32>
    %c7_67 = arith.constant 7 : index
    %c0_68 = arith.constant 0 : index
    %c0_69 = arith.constant 0 : index
    %199 = vector.load %arg12[%c7_67, %c0_68, %c0_69] : memref<8x8x32xf32, #tpu.memory_space<vmem>>, vector<1x8x32xf32>
    %200 = vector.shape_cast %199 : vector<1x8x32xf32> to vector<8x32xf32>
    %201 = vector.shape_cast %198 : vector<8x32xf32> to vector<1x8x32xf32>
    tpu.vector_store %arg12[%c7_67, %c0_68, %c0_69], %201 {strides = array<i32>} : memref<8x8x32xf32, #tpu.memory_space<vmem>>, vector<1x8x32xf32>,
    %c0_70 = arith.constant 0 : index
    %c0_71 = arith.constant 0 : index
    %c0_72 = arith.constant 0 : index
    %202 = vector.load %arg12[%c0_70, %c0_71, %c0_72] : memref<8x8x32xf32, #tpu.memory_space<vmem>>, vector<8x8x32xf32>
    %203 = vector.shape_cast %202 : vector<8x8x32xf32> to vector<64x32xf32>
    %c0_73 = arith.constant 0 : index
    %c0_74 = arith.constant 0 : index
    %204 = vector.load %arg5[%c0_73, %c0_74] : memref<32x128xf32, #tpu.memory_space<vmem>>, vector<32x128xf32>
    %cst_75 = arith.constant dense<0.000000e+00> : vector<64x128xf32>
    %205 = tpu.matmul %203, %204, %cst_75 {dimension_numbers = #tpu.dot_dimension_numbers<[1], [0], [0], [1], [0, 0, 1, 1], [], []>} : vector<64x32xf32>, vector<32x128xf32>, vector<64x128xf32> -> vector<64x128xf32>
    %c0_76 = arith.constant 0 : index
    %c0_77 = arith.constant 0 : index
    %206 = vector.load %arg7[%c0_76, %c0_77] : memref<1x128xf32, #tpu.memory_space<vmem>>, vector<1x128xf32>
    %207 = vector.broadcast %206 : vector<1x128xf32> to vector<64x128xf32>
    %208 = arith.addf %205, %207 : vector<64x128xf32>
    %209 = vector.shape_cast %208 : vector<64x128xf32> to vector<8x8x128xf32>
    %c0_78 = arith.constant 0 : index
    %c0_79 = arith.constant 0 : index
    %c0_80 = arith.constant 0 : index
    %210 = vector.load %arg11[%c0_78, %c0_79, %c0_80] : memref<8x8x128xf32, #tpu.memory_space<vmem>>, vector<8x8x128xf32>
    tpu.vector_store %arg11[%c0_78, %c0_79, %c0_80], %209 {strides = array<i32>} : memref<8x8x128xf32, #tpu.memory_space<vmem>>, vector<8x8x128xf32>,
    %c0_81 = arith.constant 0 : index
    %c0_82 = arith.constant 0 : index
    %211 = vector.load %arg6[%c0_81, %c0_82] : memref<32x128xf32, #tpu.memory_space<vmem>>, vector<32x128xf32>
    %cst_83 = arith.constant 0.000000e+00 : f32
    %212 = vector.broadcast %cst_83 : f32 to vector<8x32xf32>
    %cst_84 = arith.constant 0.000000e+00 : f32
    %213 = vector.broadcast %cst_84 : f32 to vector<8x32xf32>
    %c0_85 = arith.constant 0 : index
    %c0_86 = arith.constant 0 : index
    %c0_87 = arith.constant 0 : index
    %214 = vector.load %arg11[%c0_85, %c0_86, %c0_87] : memref<8x8x128xf32, #tpu.memory_space<vmem>>, vector<1x8x128xf32>
    %215 = vector.shape_cast %214 : vector<1x8x128xf32> to vector<8x128xf32>
    %cst_88 = arith.constant dense<0.000000e+00> : vector<8x128xf32>
    %216 = tpu.matmul %212, %211, %cst_88 {dimension_numbers = #tpu.dot_dimension_numbers<[1], [0], [0], [1], [0, 0, 1, 1], [], []>} : vector<8x32xf32>, vector<32x128xf32>, vector<8x128xf32> -> vector<8x128xf32>
    %217 = arith.addf %215, %216 : vector<8x128xf32>
    %218 = math.tanh %217 : vector<8x128xf32>
    %219 = arith.negf %217 : vector<8x128xf32>
    %220 = math.exp %219 : vector<8x128xf32>
    %cst_89 = arith.constant 1.000000e+00 : f32
    %221 = vector.broadcast %cst_89 : f32 to vector<8x128xf32>
    %222 = arith.addf %221, %220 : vector<8x128xf32>
    %223 = arith.divf %221, %222 : vector<8x128xf32>
    %224 = arith.select %5, %218, %223 : vector<8x128xi1>, vector<8x128xf32>
    %225 = vector.extract_strided_slice %224 {offsets = [0, 32], sizes = [8, 32], strides = [1, 1]} : vector<8x128xf32> to vector<8x32xf32>
    %226 = arith.mulf %225, %213 : vector<8x32xf32>
    %227 = vector.extract_strided_slice %224 {offsets = [0, 0], sizes = [8, 32], strides = [1, 1]} : vector<8x128xf32> to vector<8x32xf32>
    %228 = vector.extract_strided_slice %224 {offsets = [0, 64], sizes = [8, 32], strides = [1, 1]} : vector<8x128xf32> to vector<8x32xf32>
    %229 = arith.mulf %227, %228 : vector<8x32xf32>
    %230 = arith.addf %226, %229 : vector<8x32xf32>
    %231 = vector.extract_strided_slice %224 {offsets = [0, 96], sizes = [8, 32], strides = [1, 1]} : vector<8x128xf32> to vector<8x32xf32>
    %232 = math.tanh %230 : vector<8x32xf32>
    %233 = arith.mulf %231, %232 : vector<8x32xf32>
    %c0_90 = arith.constant 0 : index
    %c0_91 = arith.constant 0 : index
    %c0_92 = arith.constant 0 : index
    %234 = vector.load %arg12[%c0_90, %c0_91, %c0_92] : memref<8x8x32xf32, #tpu.memory_space<vmem>>, vector<1x8x32xf32>
    %235 = vector.shape_cast %234 : vector<1x8x32xf32> to vector<8x32xf32>
    %236 = vector.shape_cast %233 : vector<8x32xf32> to vector<1x8x32xf32>
    tpu.vector_store %arg12[%c0_90, %c0_91, %c0_92], %236 {strides = array<i32>} : memref<8x8x32xf32, #tpu.memory_space<vmem>>, vector<1x8x32xf32>,
    %c1_93 = arith.constant 1 : index
    %c0_94 = arith.constant 0 : index
    %c0_95 = arith.constant 0 : index
    %237 = vector.load %arg11[%c1_93, %c0_94, %c0_95] : memref<8x8x128xf32, #tpu.memory_space<vmem>>, vector<1x8x128xf32>
    %238 = vector.shape_cast %237 : vector<1x8x128xf32> to vector<8x128xf32>
    %cst_96 = arith.constant dense<0.000000e+00> : vector<8x128xf32>
    %239 = tpu.matmul %233, %211, %cst_96 {dimension_numbers = #tpu.dot_dimension_numbers<[1], [0], [0], [1], [0, 0, 1, 1], [], []>} : vector<8x32xf32>, vector<32x128xf32>, vector<8x128xf32> -> vector<8x128xf32>
    %240 = arith.addf %238, %239 : vector<8x128xf32>
    %241 = math.tanh %240 : vector<8x128xf32>
    %242 = arith.negf %240 : vector<8x128xf32>
    %243 = math.exp %242 : vector<8x128xf32>
    %cst_97 = arith.constant 1.000000e+00 : f32
    %244 = vector.broadcast %cst_97 : f32 to vector<8x128xf32>
    %245 = arith.addf %244, %243 : vector<8x128xf32>
    %246 = arith.divf %244, %245 : vector<8x128xf32>
    %247 = arith.select %5, %241, %246 : vector<8x128xi1>, vector<8x128xf32>
    %248 = vector.extract_strided_slice %247 {offsets = [0, 32], sizes = [8, 32], strides = [1, 1]} : vector<8x128xf32> to vector<8x32xf32>
    %249 = arith.mulf %248, %230 : vector<8x32xf32>
    %250 = vector.extract_strided_slice %247 {offsets = [0, 0], sizes = [8, 32], strides = [1, 1]} : vector<8x128xf32> to vector<8x32xf32>
    %251 = vector.extract_strided_slice %247 {offsets = [0, 64], sizes = [8, 32], strides = [1, 1]} : vector<8x128xf32> to vector<8x32xf32>
    %252 = arith.mulf %250, %251 : vector<8x32xf32>
    %253 = arith.addf %249, %252 : vector<8x32xf32>
    %254 = vector.extract_strided_slice %247 {offsets = [0, 96], sizes = [8, 32], strides = [1, 1]} : vector<8x128xf32> to vector<8x32xf32>
    %255 = math.tanh %253 : vector<8x32xf32>
    %256 = arith.mulf %254, %255 : vector<8x32xf32>
    %c1_98 = arith.constant 1 : index
    %c0_99 = arith.constant 0 : index
    %c0_100 = arith.constant 0 : index
    %257 = vector.load %arg12[%c1_98, %c0_99, %c0_100] : memref<8x8x32xf32, #tpu.memory_space<vmem>>, vector<1x8x32xf32>
    %258 = vector.shape_cast %257 : vector<1x8x32xf32> to vector<8x32xf32>
    %259 = vector.shape_cast %256 : vector<8x32xf32> to vector<1x8x32xf32>
    tpu.vector_store %arg12[%c1_98, %c0_99, %c0_100], %259 {strides = array<i32>} : memref<8x8x32xf32, #tpu.memory_space<vmem>>, vector<1x8x32xf32>,
    %c2_101 = arith.constant 2 : index
    %c0_102 = arith.constant 0 : index
    %c0_103 = arith.constant 0 : index
    %260 = vector.load %arg11[%c2_101, %c0_102, %c0_103] : memref<8x8x128xf32, #tpu.memory_space<vmem>>, vector<1x8x128xf32>
    %261 = vector.shape_cast %260 : vector<1x8x128xf32> to vector<8x128xf32>
    %cst_104 = arith.constant dense<0.000000e+00> : vector<8x128xf32>
    %262 = tpu.matmul %256, %211, %cst_104 {dimension_numbers = #tpu.dot_dimension_numbers<[1], [0], [0], [1], [0, 0, 1, 1], [], []>} : vector<8x32xf32>, vector<32x128xf32>, vector<8x128xf32> -> vector<8x128xf32>
    %263 = arith.addf %261, %262 : vector<8x128xf32>
    %264 = math.tanh %263 : vector<8x128xf32>
    %265 = arith.negf %263 : vector<8x128xf32>
    %266 = math.exp %265 : vector<8x128xf32>
    %cst_105 = arith.constant 1.000000e+00 : f32
    %267 = vector.broadcast %cst_105 : f32 to vector<8x128xf32>
    %268 = arith.addf %267, %266 : vector<8x128xf32>
    %269 = arith.divf %267, %268 : vector<8x128xf32>
    %270 = arith.select %5, %264, %269 : vector<8x128xi1>, vector<8x128xf32>
    %271 = vector.extract_strided_slice %270 {offsets = [0, 32], sizes = [8, 32], strides = [1, 1]} : vector<8x128xf32> to vector<8x32xf32>
    %272 = arith.mulf %271, %253 : vector<8x32xf32>
    %273 = vector.extract_strided_slice %270 {offsets = [0, 0], sizes = [8, 32], strides = [1, 1]} : vector<8x128xf32> to vector<8x32xf32>
    %274 = vector.extract_strided_slice %270 {offsets = [0, 64], sizes = [8, 32], strides = [1, 1]} : vector<8x128xf32> to vector<8x32xf32>
    %275 = arith.mulf %273, %274 : vector<8x32xf32>
    %276 = arith.addf %272, %275 : vector<8x32xf32>
    %277 = vector.extract_strided_slice %270 {offsets = [0, 96], sizes = [8, 32], strides = [1, 1]} : vector<8x128xf32> to vector<8x32xf32>
    %278 = math.tanh %276 : vector<8x32xf32>
    %279 = arith.mulf %277, %278 : vector<8x32xf32>
    %c2_106 = arith.constant 2 : index
    %c0_107 = arith.constant 0 : index
    %c0_108 = arith.constant 0 : index
    %280 = vector.load %arg12[%c2_106, %c0_107, %c0_108] : memref<8x8x32xf32, #tpu.memory_space<vmem>>, vector<1x8x32xf32>
    %281 = vector.shape_cast %280 : vector<1x8x32xf32> to vector<8x32xf32>
    %282 = vector.shape_cast %279 : vector<8x32xf32> to vector<1x8x32xf32>
    tpu.vector_store %arg12[%c2_106, %c0_107, %c0_108], %282 {strides = array<i32>} : memref<8x8x32xf32, #tpu.memory_space<vmem>>, vector<1x8x32xf32>,
    %c3_109 = arith.constant 3 : index
    %c0_110 = arith.constant 0 : index
    %c0_111 = arith.constant 0 : index
    %283 = vector.load %arg11[%c3_109, %c0_110, %c0_111] : memref<8x8x128xf32, #tpu.memory_space<vmem>>, vector<1x8x128xf32>
    %284 = vector.shape_cast %283 : vector<1x8x128xf32> to vector<8x128xf32>
    %cst_112 = arith.constant dense<0.000000e+00> : vector<8x128xf32>
    %285 = tpu.matmul %279, %211, %cst_112 {dimension_numbers = #tpu.dot_dimension_numbers<[1], [0], [0], [1], [0, 0, 1, 1], [], []>} : vector<8x32xf32>, vector<32x128xf32>, vector<8x128xf32> -> vector<8x128xf32>
    %286 = arith.addf %284, %285 : vector<8x128xf32>
    %287 = math.tanh %286 : vector<8x128xf32>
    %288 = arith.negf %286 : vector<8x128xf32>
    %289 = math.exp %288 : vector<8x128xf32>
    %cst_113 = arith.constant 1.000000e+00 : f32
    %290 = vector.broadcast %cst_113 : f32 to vector<8x128xf32>
    %291 = arith.addf %290, %289 : vector<8x128xf32>
    %292 = arith.divf %290, %291 : vector<8x128xf32>
    %293 = arith.select %5, %287, %292 : vector<8x128xi1>, vector<8x128xf32>
    %294 = vector.extract_strided_slice %293 {offsets = [0, 32], sizes = [8, 32], strides = [1, 1]} : vector<8x128xf32> to vector<8x32xf32>
    %295 = arith.mulf %294, %276 : vector<8x32xf32>
    %296 = vector.extract_strided_slice %293 {offsets = [0, 0], sizes = [8, 32], strides = [1, 1]} : vector<8x128xf32> to vector<8x32xf32>
    %297 = vector.extract_strided_slice %293 {offsets = [0, 64], sizes = [8, 32], strides = [1, 1]} : vector<8x128xf32> to vector<8x32xf32>
    %298 = arith.mulf %296, %297 : vector<8x32xf32>
    %299 = arith.addf %295, %298 : vector<8x32xf32>
    %300 = vector.extract_strided_slice %293 {offsets = [0, 96], sizes = [8, 32], strides = [1, 1]} : vector<8x128xf32> to vector<8x32xf32>
    %301 = math.tanh %299 : vector<8x32xf32>
    %302 = arith.mulf %300, %301 : vector<8x32xf32>
    %c3_114 = arith.constant 3 : index
    %c0_115 = arith.constant 0 : index
    %c0_116 = arith.constant 0 : index
    %303 = vector.load %arg12[%c3_114, %c0_115, %c0_116] : memref<8x8x32xf32, #tpu.memory_space<vmem>>, vector<1x8x32xf32>
    %304 = vector.shape_cast %303 : vector<1x8x32xf32> to vector<8x32xf32>
    %305 = vector.shape_cast %302 : vector<8x32xf32> to vector<1x8x32xf32>
    tpu.vector_store %arg12[%c3_114, %c0_115, %c0_116], %305 {strides = array<i32>} : memref<8x8x32xf32, #tpu.memory_space<vmem>>, vector<1x8x32xf32>,
    %c4_117 = arith.constant 4 : index
    %c0_118 = arith.constant 0 : index
    %c0_119 = arith.constant 0 : index
    %306 = vector.load %arg11[%c4_117, %c0_118, %c0_119] : memref<8x8x128xf32, #tpu.memory_space<vmem>>, vector<1x8x128xf32>
    %307 = vector.shape_cast %306 : vector<1x8x128xf32> to vector<8x128xf32>
    %cst_120 = arith.constant dense<0.000000e+00> : vector<8x128xf32>
    %308 = tpu.matmul %302, %211, %cst_120 {dimension_numbers = #tpu.dot_dimension_numbers<[1], [0], [0], [1], [0, 0, 1, 1], [], []>} : vector<8x32xf32>, vector<32x128xf32>, vector<8x128xf32> -> vector<8x128xf32>
    %309 = arith.addf %307, %308 : vector<8x128xf32>
    %310 = math.tanh %309 : vector<8x128xf32>
    %311 = arith.negf %309 : vector<8x128xf32>
    %312 = math.exp %311 : vector<8x128xf32>
    %cst_121 = arith.constant 1.000000e+00 : f32
    %313 = vector.broadcast %cst_121 : f32 to vector<8x128xf32>
    %314 = arith.addf %313, %312 : vector<8x128xf32>
    %315 = arith.divf %313, %314 : vector<8x128xf32>
    %316 = arith.select %5, %310, %315 : vector<8x128xi1>, vector<8x128xf32>
    %317 = vector.extract_strided_slice %316 {offsets = [0, 32], sizes = [8, 32], strides = [1, 1]} : vector<8x128xf32> to vector<8x32xf32>
    %318 = arith.mulf %317, %299 : vector<8x32xf32>
    %319 = vector.extract_strided_slice %316 {offsets = [0, 0], sizes = [8, 32], strides = [1, 1]} : vector<8x128xf32> to vector<8x32xf32>
    %320 = vector.extract_strided_slice %316 {offsets = [0, 64], sizes = [8, 32], strides = [1, 1]} : vector<8x128xf32> to vector<8x32xf32>
    %321 = arith.mulf %319, %320 : vector<8x32xf32>
    %322 = arith.addf %318, %321 : vector<8x32xf32>
    %323 = vector.extract_strided_slice %316 {offsets = [0, 96], sizes = [8, 32], strides = [1, 1]} : vector<8x128xf32> to vector<8x32xf32>
    %324 = math.tanh %322 : vector<8x32xf32>
    %325 = arith.mulf %323, %324 : vector<8x32xf32>
    %c4_122 = arith.constant 4 : index
    %c0_123 = arith.constant 0 : index
    %c0_124 = arith.constant 0 : index
    %326 = vector.load %arg12[%c4_122, %c0_123, %c0_124] : memref<8x8x32xf32, #tpu.memory_space<vmem>>, vector<1x8x32xf32>
    %327 = vector.shape_cast %326 : vector<1x8x32xf32> to vector<8x32xf32>
    %328 = vector.shape_cast %325 : vector<8x32xf32> to vector<1x8x32xf32>
    tpu.vector_store %arg12[%c4_122, %c0_123, %c0_124], %328 {strides = array<i32>} : memref<8x8x32xf32, #tpu.memory_space<vmem>>, vector<1x8x32xf32>,
    %c5_125 = arith.constant 5 : index
    %c0_126 = arith.constant 0 : index
    %c0_127 = arith.constant 0 : index
    %329 = vector.load %arg11[%c5_125, %c0_126, %c0_127] : memref<8x8x128xf32, #tpu.memory_space<vmem>>, vector<1x8x128xf32>
    %330 = vector.shape_cast %329 : vector<1x8x128xf32> to vector<8x128xf32>
    %cst_128 = arith.constant dense<0.000000e+00> : vector<8x128xf32>
    %331 = tpu.matmul %325, %211, %cst_128 {dimension_numbers = #tpu.dot_dimension_numbers<[1], [0], [0], [1], [0, 0, 1, 1], [], []>} : vector<8x32xf32>, vector<32x128xf32>, vector<8x128xf32> -> vector<8x128xf32>
    %332 = arith.addf %330, %331 : vector<8x128xf32>
    %333 = math.tanh %332 : vector<8x128xf32>
    %334 = arith.negf %332 : vector<8x128xf32>
    %335 = math.exp %334 : vector<8x128xf32>
    %cst_129 = arith.constant 1.000000e+00 : f32
    %336 = vector.broadcast %cst_129 : f32 to vector<8x128xf32>
    %337 = arith.addf %336, %335 : vector<8x128xf32>
    %338 = arith.divf %336, %337 : vector<8x128xf32>
    %339 = arith.select %5, %333, %338 : vector<8x128xi1>, vector<8x128xf32>
    %340 = vector.extract_strided_slice %339 {offsets = [0, 32], sizes = [8, 32], strides = [1, 1]} : vector<8x128xf32> to vector<8x32xf32>
    %341 = arith.mulf %340, %322 : vector<8x32xf32>
    %342 = vector.extract_strided_slice %339 {offsets = [0, 0], sizes = [8, 32], strides = [1, 1]} : vector<8x128xf32> to vector<8x32xf32>
    %343 = vector.extract_strided_slice %339 {offsets = [0, 64], sizes = [8, 32], strides = [1, 1]} : vector<8x128xf32> to vector<8x32xf32>
    %344 = arith.mulf %342, %343 : vector<8x32xf32>
    %345 = arith.addf %341, %344 : vector<8x32xf32>
    %346 = vector.extract_strided_slice %339 {offsets = [0, 96], sizes = [8, 32], strides = [1, 1]} : vector<8x128xf32> to vector<8x32xf32>
    %347 = math.tanh %345 : vector<8x32xf32>
    %348 = arith.mulf %346, %347 : vector<8x32xf32>
    %c5_130 = arith.constant 5 : index
    %c0_131 = arith.constant 0 : index
    %c0_132 = arith.constant 0 : index
    %349 = vector.load %arg12[%c5_130, %c0_131, %c0_132] : memref<8x8x32xf32, #tpu.memory_space<vmem>>, vector<1x8x32xf32>
    %350 = vector.shape_cast %349 : vector<1x8x32xf32> to vector<8x32xf32>
    %351 = vector.shape_cast %348 : vector<8x32xf32> to vector<1x8x32xf32>
    tpu.vector_store %arg12[%c5_130, %c0_131, %c0_132], %351 {strides = array<i32>} : memref<8x8x32xf32, #tpu.memory_space<vmem>>, vector<1x8x32xf32>,
    %c6_133 = arith.constant 6 : index
    %c0_134 = arith.constant 0 : index
    %c0_135 = arith.constant 0 : index
    %352 = vector.load %arg11[%c6_133, %c0_134, %c0_135] : memref<8x8x128xf32, #tpu.memory_space<vmem>>, vector<1x8x128xf32>
    %353 = vector.shape_cast %352 : vector<1x8x128xf32> to vector<8x128xf32>
    %cst_136 = arith.constant dense<0.000000e+00> : vector<8x128xf32>
    %354 = tpu.matmul %348, %211, %cst_136 {dimension_numbers = #tpu.dot_dimension_numbers<[1], [0], [0], [1], [0, 0, 1, 1], [], []>} : vector<8x32xf32>, vector<32x128xf32>, vector<8x128xf32> -> vector<8x128xf32>
    %355 = arith.addf %353, %354 : vector<8x128xf32>
    %356 = math.tanh %355 : vector<8x128xf32>
    %357 = arith.negf %355 : vector<8x128xf32>
    %358 = math.exp %357 : vector<8x128xf32>
    %cst_137 = arith.constant 1.000000e+00 : f32
    %359 = vector.broadcast %cst_137 : f32 to vector<8x128xf32>
    %360 = arith.addf %359, %358 : vector<8x128xf32>
    %361 = arith.divf %359, %360 : vector<8x128xf32>
    %362 = arith.select %5, %356, %361 : vector<8x128xi1>, vector<8x128xf32>
    %363 = vector.extract_strided_slice %362 {offsets = [0, 32], sizes = [8, 32], strides = [1, 1]} : vector<8x128xf32> to vector<8x32xf32>
    %364 = arith.mulf %363, %345 : vector<8x32xf32>
    %365 = vector.extract_strided_slice %362 {offsets = [0, 0], sizes = [8, 32], strides = [1, 1]} : vector<8x128xf32> to vector<8x32xf32>
    %366 = vector.extract_strided_slice %362 {offsets = [0, 64], sizes = [8, 32], strides = [1, 1]} : vector<8x128xf32> to vector<8x32xf32>
    %367 = arith.mulf %365, %366 : vector<8x32xf32>
    %368 = arith.addf %364, %367 : vector<8x32xf32>
    %369 = vector.extract_strided_slice %362 {offsets = [0, 96], sizes = [8, 32], strides = [1, 1]} : vector<8x128xf32> to vector<8x32xf32>
    %370 = math.tanh %368 : vector<8x32xf32>
    %371 = arith.mulf %369, %370 : vector<8x32xf32>
    %c6_138 = arith.constant 6 : index
    %c0_139 = arith.constant 0 : index
    %c0_140 = arith.constant 0 : index
    %372 = vector.load %arg12[%c6_138, %c0_139, %c0_140] : memref<8x8x32xf32, #tpu.memory_space<vmem>>, vector<1x8x32xf32>
    %373 = vector.shape_cast %372 : vector<1x8x32xf32> to vector<8x32xf32>
    %374 = vector.shape_cast %371 : vector<8x32xf32> to vector<1x8x32xf32>
    tpu.vector_store %arg12[%c6_138, %c0_139, %c0_140], %374 {strides = array<i32>} : memref<8x8x32xf32, #tpu.memory_space<vmem>>, vector<1x8x32xf32>,
    %c7_141 = arith.constant 7 : index
    %c0_142 = arith.constant 0 : index
    %c0_143 = arith.constant 0 : index
    %375 = vector.load %arg11[%c7_141, %c0_142, %c0_143] : memref<8x8x128xf32, #tpu.memory_space<vmem>>, vector<1x8x128xf32>
    %376 = vector.shape_cast %375 : vector<1x8x128xf32> to vector<8x128xf32>
    %cst_144 = arith.constant dense<0.000000e+00> : vector<8x128xf32>
    %377 = tpu.matmul %371, %211, %cst_144 {dimension_numbers = #tpu.dot_dimension_numbers<[1], [0], [0], [1], [0, 0, 1, 1], [], []>} : vector<8x32xf32>, vector<32x128xf32>, vector<8x128xf32> -> vector<8x128xf32>
    %378 = arith.addf %376, %377 : vector<8x128xf32>
    %379 = math.tanh %378 : vector<8x128xf32>
    %380 = arith.negf %378 : vector<8x128xf32>
    %381 = math.exp %380 : vector<8x128xf32>
    %cst_145 = arith.constant 1.000000e+00 : f32
    %382 = vector.broadcast %cst_145 : f32 to vector<8x128xf32>
    %383 = arith.addf %382, %381 : vector<8x128xf32>
    %384 = arith.divf %382, %383 : vector<8x128xf32>
    %385 = arith.select %5, %379, %384 : vector<8x128xi1>, vector<8x128xf32>
    %386 = vector.extract_strided_slice %385 {offsets = [0, 32], sizes = [8, 32], strides = [1, 1]} : vector<8x128xf32> to vector<8x32xf32>
    %387 = arith.mulf %386, %368 : vector<8x32xf32>
    %388 = vector.extract_strided_slice %385 {offsets = [0, 0], sizes = [8, 32], strides = [1, 1]} : vector<8x128xf32> to vector<8x32xf32>
    %389 = vector.extract_strided_slice %385 {offsets = [0, 64], sizes = [8, 32], strides = [1, 1]} : vector<8x128xf32> to vector<8x32xf32>
    %390 = arith.mulf %388, %389 : vector<8x32xf32>
    %391 = arith.addf %387, %390 : vector<8x32xf32>
    %392 = vector.extract_strided_slice %385 {offsets = [0, 96], sizes = [8, 32], strides = [1, 1]} : vector<8x128xf32> to vector<8x32xf32>
    %393 = math.tanh %391 : vector<8x32xf32>
    %394 = arith.mulf %392, %393 : vector<8x32xf32>
    %c7_146 = arith.constant 7 : index
    %c0_147 = arith.constant 0 : index
    %c0_148 = arith.constant 0 : index
    %395 = vector.load %arg12[%c7_146, %c0_147, %c0_148] : memref<8x8x32xf32, #tpu.memory_space<vmem>>, vector<1x8x32xf32>
    %396 = vector.shape_cast %395 : vector<1x8x32xf32> to vector<8x32xf32>
    %397 = vector.shape_cast %394 : vector<8x32xf32> to vector<1x8x32xf32>
    tpu.vector_store %arg12[%c7_146, %c0_147, %c0_148], %397 {strides = array<i32>} : memref<8x8x32xf32, #tpu.memory_space<vmem>>, vector<1x8x32xf32>,
    %c0_149 = arith.constant 0 : index
    %c0_150 = arith.constant 0 : index
    %398 = vector.load %arg8[%c0_149, %c0_150] : memref<1x32xf32, #tpu.memory_space<vmem>>, vector<1x32xf32>
    %399 = vector.shape_cast %398 : vector<1x32xf32> to vector<1x1x32xf32>
    %c0_151 = arith.constant 0 : index
    %c0_152 = arith.constant 0 : index
    %c0_153 = arith.constant 0 : index
    %400 = vector.load %arg12[%c0_151, %c0_152, %c0_153] : memref<8x8x32xf32, #tpu.memory_space<vmem>>, vector<8x8x32xf32>
    %401 = vector.broadcast %399 : vector<1x1x32xf32> to vector<8x8x32xf32>
    %402 = arith.mulf %400, %401 : vector<8x8x32xf32>
    %cst_154 = arith.constant dense<0.000000e+00> : vector<8x8xf32>
    %403 = vector.multi_reduction <add>, %402, %cst_154 [2] : vector<8x8x32xf32> to vector<8x8xf32>
    %c0_155 = arith.constant 0 : index
    %c0_156 = arith.constant 0 : index
    %404 = vector.load %arg9[%c0_155, %c0_156] : memref<1x1xf32, #tpu.memory_space<vmem>>, vector<1x1xf32>
    %405 = vector.broadcast %404 : vector<1x1xf32> to vector<8x8xf32>
    %406 = arith.addf %403, %405 : vector<8x8xf32>
    %407 = arith.negf %406 : vector<8x8xf32>
    %408 = math.exp %407 : vector<8x8xf32>
    %cst_157 = arith.constant 1.000000e+00 : f32
    %409 = vector.broadcast %cst_157 : f32 to vector<8x8xf32>
    %410 = arith.addf %409, %408 : vector<8x8xf32>
    %411 = arith.divf %409, %410 : vector<8x8xf32>
    %c0_158 = arith.constant 0 : index
    %c0_159 = arith.constant 0 : index
    %412 = vector.load %arg10[%c0_158, %c0_159] : memref<8x8xf32, #tpu.memory_space<vmem>>, vector<8x8xf32>
    tpu.vector_store %arg10[%c0_158, %c0_159], %411 {strides = array<i32>} : memref<8x8xf32, #tpu.memory_space<vmem>>, vector<8x8xf32>,
    return
  }
  func.func @transform_0(%arg0: i32) -> (i32, i32, i32) {
    %c0_i32 = arith.constant 0 : i32
    %c0_i32_0 = arith.constant 0 : i32
    %c0_i32_1 = arith.constant 0 : i32
    return %c0_i32, %arg0, %c0_i32_0 : i32, i32, i32
  }
  func.func @transform_1(%arg0: i32) -> (i32, i32) {
    %c0_i32 = arith.constant 0 : i32
    %c0_i32_0 = arith.constant 0 : i32
    %c0_i32_1 = arith.constant 0 : i32
    return %c0_i32, %c0_i32_0 : i32, i32
  }
  func.func @transform_2(%arg0: i32) -> (i32, i32) {
    %c0_i32 = arith.constant 0 : i32
    %c0_i32_0 = arith.constant 0 : i32
    %c0_i32_1 = arith.constant 0 : i32
    return %c0_i32, %c0_i32_0 : i32, i32
  }
  func.func @transform_3(%arg0: i32) -> (i32, i32) {
    %c0_i32 = arith.constant 0 : i32
    %c0_i32_0 = arith.constant 0 : i32
    %c0_i32_1 = arith.constant 0 : i32
    return %c0_i32, %c0_i32_0 : i32, i32
  }
  func.func @transform_4(%arg0: i32) -> (i32, i32) {
    %c0_i32 = arith.constant 0 : i32
    %c0_i32_0 = arith.constant 0 : i32
    %c0_i32_1 = arith.constant 0 : i32
    return %c0_i32, %c0_i32_0 : i32, i32
  }
  func.func @transform_5(%arg0: i32) -> (i32, i32) {
    %c0_i32 = arith.constant 0 : i32
    %c0_i32_0 = arith.constant 0 : i32
    %c0_i32_1 = arith.constant 0 : i32
    return %c0_i32, %c0_i32_0 : i32, i32
  }
  func.func @transform_6(%arg0: i32) -> (i32, i32) {
    %c0_i32 = arith.constant 0 : i32
    %c0_i32_0 = arith.constant 0 : i32
    %c0_i32_1 = arith.constant 0 : i32
    return %c0_i32, %c0_i32_0 : i32, i32
  }
  func.func @transform_7(%arg0: i32) -> (i32, i32) {
    %c0_i32 = arith.constant 0 : i32
    %c0_i32_0 = arith.constant 0 : i32
    %c0_i32_1 = arith.constant 0 : i32
    return %c0_i32, %c0_i32_0 : i32, i32
  }
  func.func @transform_8(%arg0: i32) -> (i32, i32) {
    %c0_i32 = arith.constant 0 : i32
    %c0_i32_0 = arith.constant 0 : i32
    %c0_i32_1 = arith.constant 0 : i32
    return %c0_i32, %c0_i32_0 : i32, i32
  }
  func.func @transform_9(%arg0: i32) -> (i32, i32) {
    %c0_i32 = arith.constant 0 : i32
    %c0_i32_0 = arith.constant 0 : i32
    return %c0_i32, %arg0 : i32, i32
  }
}

</mosaic_0001>

<llo_original>
// kernel: tpu_custom_call.1
$region0: #{tpu_custom_call.1}
  #allocation0 [shape = 'u32[]', space=smem, size = 0x4, offset = 0x4, fixed_abs, tag = 'smem constant byte address 0x4 - core index']
  #allocation1 [shape = 'u32[144,128]{1,0:T(1,128)}', space=vmem, size = 0x12000, scoped, tag = 'internal scratch']
  #allocation2 [shape = 'f32[8,8,128]{2,1,0:T(8,128)}', space=vmem, size = 0x8000, scoped, tag = 'scratch operand']
  #allocation3 [shape = 'f32[8,8,32]{2,1,0:T(8,128)}', space=vmem, size = 0x8000, scoped, tag = 'scratch operand']
  #allocation4 [shape = 'f32[1,1]{1,0:T(1,128)S(1)}', space=vmem, size = 0x200, scoped, tag = 'scoped memory for tpu_custom_call.1']
  %s0 = inlined_call_operand.hbm [shape: f32[8,8,16], index: 0, kind: input, shape index: {}]
  %s1 = inlined_call_operand.hbm [shape: f32[16,128], index: 1, kind: input, shape index: {}]
  %s2 = inlined_call_operand.hbm [shape: f32[32,128], index: 2, kind: input, shape index: {}]
  %s3 = inlined_call_operand.vmem [shape: f32[1,128], index: 3, kind: input, shape index: {}]
  %s4 = inlined_call_operand.hbm [shape: f32[32,128], index: 4, kind: input, shape index: {}]
  %s5 = inlined_call_operand.hbm [shape: f32[32,128], index: 5, kind: input, shape index: {}]
  %s6 = inlined_call_operand.vmem [shape: f32[1,128], index: 6, kind: input, shape index: {}]
  %s7 = inlined_call_operand.vmem [shape: f32[1,32], index: 7, kind: input, shape index: {}]
  %s8 = inlined_call_operand.<no memory space> [shape: f32[1,1], index: 8, kind: input, shape index: {}]
  %s9 = inlined_call_operand.hbm [shape: f32[8,8], index: 9, kind: output, shape index: {}]
  %s10 = sld [smem:[#allocation0]]
  $region66: #{tpu_custom_call.1} parent=0
    _
  %s12 = ssub.s32 1, %s10
  %s13 = scalar_select 0, %s12, %s10
  %v14 = vstv %s8
  %15 = vst [vmem:[#allocation4] sm:$0x1] %v14
  $region1: #{tpu_custom_call.1} parent=0
    #allocation5 [shape = 'u8[32768]{0}', space=vmem, size = 0x8000, scoped, tag = 'input window, operand 0, single buffered']
    #allocation6 [shape = 's32[1]{0}', space=sflag, size = 0x4, scoped, tag = 'scoped memory for tpu_custom_call.1']
    #allocation7 [shape = 's32[1]{0}', space=sflag, size = 0x4, scoped, tag = 'scoped memory for tpu_custom_call.1']
    #allocation8 [shape = 'u8[8192]{0}', space=vmem, size = 0x2000, scoped, tag = 'input window, operand 1, single buffered']
    #allocation9 [shape = 's32[1]{0}', space=sflag, size = 0x4, scoped, tag = 'scoped memory for tpu_custom_call.1']
    #allocation10 [shape = 'u8[16384]{0}', space=vmem, size = 0x4000, scoped, tag = 'input window, operand 2, single buffered']
    #allocation11 [shape = 'u8[16384]{0}', space=vmem, size = 0x4000, scoped, tag = 'input window, operand 4, single buffered']
    #allocation12 [shape = 's32[1]{0}', space=sflag, size = 0x4, scoped, tag = 'scoped memory for tpu_custom_call.1']
    #allocation13 [shape = 'u8[16384]{0}', space=vmem, size = 0x4000, scoped, tag = 'input window, operand 5, single buffered']
    #allocation14 [shape = 'u8[4096]{0}', space=vmem, size = 0x1000, scoped, tag = 'output window, operand 0, single buffered']
    %16 = vsyncpa [#allocation6], 0
    %17 = vsyncpa [#allocation9], 0
    %18 = vsyncpa [#allocation12], 0
    %19 = vsyncpa [#allocation7], 0
    // Predicated region
    $region2: #{tpu_custom_call.1} parent=1 // pred_check
      _
    $region3: #{tpu_custom_call.1} parent=1 // pred_check_branch
      %21 = sbr.rel (0) target = $region5
    $region4: #{tpu_custom_call.1} parent=1 // pred_region
      %s23 = ssub.s32 1024, 1024
      %24 = vsyncadd [#allocation6], %s23
      %s25 = sshll.u32 [#allocation5], 4
      %s26 = int_to_ptr.vmem [resolvable:$true] %s25
      %31 = dma.hbm_to_vmem [thread:$0]  %s0, 1024, %s26, [#allocation6], 128, 128, 8
    $region5: #{tpu_custom_call.1} parent=1 // pred_fallthru
      _
    // Predicated region
    $region6: #{tpu_custom_call.1} parent=1 // pred_check
      _
    $region7: #{tpu_custom_call.1} parent=1 // pred_check_branch
      %33 = sbr.rel (0) target = $region9
    $region8: #{tpu_custom_call.1} parent=1 // pred_region
      %s35 = ssub.s32 256, 256
      %36 = vsyncadd [#allocation9], %s35
      %s37 = sshll.u32 [#allocation8], 4
      %s38 = int_to_ptr.vmem [resolvable:$true] %s37
      %43 = dma.hbm_to_vmem [thread:$0]  %s1, 256, %s38, [#allocation9], 128, 128, 8
    $region9: #{tpu_custom_call.1} parent=1 // pred_fallthru
      _
    // Predicated region
    $region10: #{tpu_custom_call.1} parent=1 // pred_check
      _
    $region11: #{tpu_custom_call.1} parent=1 // pred_check_branch
      %45 = sbr.rel (0) target = $region13
    $region12: #{tpu_custom_call.1} parent=1 // pred_region
      %s47 = ssub.s32 512, 512
      %48 = vsyncadd [#allocation9], %s47
      %s49 = sshll.u32 [#allocation10], 4
      %s50 = int_to_ptr.vmem [resolvable:$true] %s49
      %55 = dma.hbm_to_vmem [thread:$0]  %s2, 512, %s50, [#allocation9], 128, 128, 8
    $region13: #{tpu_custom_call.1} parent=1 // pred_fallthru
      _
    // Predicated region
    $region14: #{tpu_custom_call.1} parent=1 // pred_check
      _
    $region15: #{tpu_custom_call.1} parent=1 // pred_check_branch
      %57 = sbr.rel (0) target = $region17
    $region16: #{tpu_custom_call.1} parent=1 // pred_region
      _
    $region17: #{tpu_custom_call.1} parent=1 // pred_fallthru
      _
    // Predicated region
    $region18: #{tpu_custom_call.1} parent=1 // pred_check
      _
    $region19: #{tpu_custom_call.1} parent=1 // pred_check_branch
      %59 = sbr.rel (0) target = $region21
    $region20: #{tpu_custom_call.1} parent=1 // pred_region
      %s61 = ssub.s32 512, 512
      %62 = vsyncadd [#allocation12], %s61
      %s63 = sshll.u32 [#allocation11], 4
      %s64 = int_to_ptr.vmem [resolvable:$true] %s63
      %69 = dma.hbm_to_vmem [thread:$0]  %s4, 512, %s64, [#allocation12], 128, 128, 8
    $region21: #{tpu_custom_call.1} parent=1 // pred_fallthru
      _
    // Predicated region
    $region22: #{tpu_custom_call.1} parent=1 // pred_check
      _
    $region23: #{tpu_custom_call.1} parent=1 // pred_check_branch
      %71 = sbr.rel (0) target = $region25
    $region24: #{tpu_custom_call.1} parent=1 // pred_region
      %s73 = ssub.s32 512, 512
      %74 = vsyncadd [#allocation12], %s73
      %s75 = sshll.u32 [#allocation13], 4
      %s76 = int_to_ptr.vmem [resolvable:$true] %s75
      %81 = dma.hbm_to_vmem [thread:$0]  %s5, 512, %s76, [#allocation12], 128, 128, 8
    $region25: #{tpu_custom_call.1} parent=1 // pred_fallthru
      _
    // Predicated region
    $region26: #{tpu_custom_call.1} parent=1 // pred_check
      _
    $region27: #{tpu_custom_call.1} parent=1 // pred_check_branch
      %83 = sbr.rel (0) target = $region29
    $region28: #{tpu_custom_call.1} parent=1 // pred_region
      _
    $region29: #{tpu_custom_call.1} parent=1 // pred_fallthru
      _
    // Predicated region
    $region30: #{tpu_custom_call.1} parent=1 // pred_check
      _
    $region31: #{tpu_custom_call.1} parent=1 // pred_check_branch
      %85 = sbr.rel (0) target = $region33
    $region32: #{tpu_custom_call.1} parent=1 // pred_region
      _
    $region33: #{tpu_custom_call.1} parent=1 // pred_fallthru
      _
    // Predicated region
    $region34: #{tpu_custom_call.1} parent=1 // pred_check
      _
    $region35: #{tpu_custom_call.1} parent=1 // pred_check_branch
      %87 = sbr.rel (0) target = $region37
    $region36: #{tpu_custom_call.1} parent=1 // pred_region
      _
    $region37: #{tpu_custom_call.1} parent=1 // pred_fallthru
      _
    // Predicated region
    $region38: #{tpu_custom_call.1} parent=1 // pred_check
      _
    $region39: #{tpu_custom_call.1} parent=1 // pred_check_branch
      %89 = sbr.rel (0) target = $region41
    $region40: #{tpu_custom_call.1} parent=1 // pred_region
      %90 = dma.done [#allocation6], 1024
    $region41: #{tpu_custom_call.1} parent=1 // pred_fallthru
      _
    // Predicated region
    $region42: #{tpu_custom_call.1} parent=1 // pred_check
      _
    $region43: #{tpu_custom_call.1} parent=1 // pred_check_branch
      %92 = sbr.rel (0) target = $region45
    $region44: #{tpu_custom_call.1} parent=1 // pred_region
      %93 = dma.done [#allocation9], 256
    $region45: #{tpu_custom_call.1} parent=1 // pred_fallthru
      _
    // Predicated region
    $region46: #{tpu_custom_call.1} parent=1 // pred_check
      _
    $region47: #{tpu_custom_call.1} parent=1 // pred_check_branch
      %95 = sbr.rel (0) target = $region49
    $region48: #{tpu_custom_call.1} parent=1 // pred_region
      %96 = dma.done [#allocation9], 512
    $region49: #{tpu_custom_call.1} parent=1 // pred_fallthru
      _
    // Predicated region
    $region50: #{tpu_custom_call.1} parent=1 // pred_check
      _
    $region51: #{tpu_custom_call.1} parent=1 // pred_check_branch
      %98 = sbr.rel (0) target = $region53
    $region52: #{tpu_custom_call.1} parent=1 // pred_region
      %99 = dma.done [#allocation12], 512
    $region53: #{tpu_custom_call.1} parent=1 // pred_fallthru
      _
    // Predicated region
    $region54: #{tpu_custom_call.1} parent=1 // pred_check
      _
    $region55: #{tpu_custom_call.1} parent=1 // pred_check_branch
      %101 = sbr.rel (0) target = $region57
    $region56: #{tpu_custom_call.1} parent=1 // pred_region
      %102 = dma.done [#allocation12], 512
    $region57: #{tpu_custom_call.1} parent=1 // pred_fallthru
      _
    %v103 = vlaneseq
    %v104 = vand.u32 %v103, 127
    %vm105 = vcmp.ge.s32.totalorder %v104, 64
    %vm106 = vcmp.lt.s32.totalorder %v104, 96
    %vm107 = vmand %vm105, %vm106
    %v108 = vld [vmem:[#allocation5] sm:$0xff]
    %v109 = vld [vmem:[#allocation5 + $0x8] sm:$0xff]
    %v110 = vld [vmem:[#allocation5 + $0x10] sm:$0xff]
    %v111 = vld [vmem:[#allocation5 + $0x18] sm:$0xff]
    %v112 = vld [vmem:[#allocation5 + $0x20] sm:$0xff]
    %v113 = vld [vmem:[#allocation5 + $0x28] sm:$0xff]
    %v114 = vld [vmem:[#allocation5 + $0x30] sm:$0xff]
    %v115 = vld [vmem:[#allocation5 + $0x38] sm:$0xff]
    %v116 = vld [vmem:[#allocation8] sm:$0xff]
    %v117 = vld [vmem:[#allocation8 + $0x8] sm:$0xff]
    %v118 = vld [vmem:[%s3] sm:$0x1]
    %v120 = vlaneseq
    %v121 = vshrl.u32 %v120, 7
    %v122 = vsub.s32 0, %v121
    %v123 = vrot.slane %v118, %v122
    %vm125 = vcmask 130048
    %v127 = vsel %vm125, %v108, 0
    %v130 = vsel %vm125, %v109, 0
    %v133 = vsel %vm125, %v110, 0
    %v136 = vsel %vm125, %v111, 0
    %v139 = vsel %vm125, %v112, 0
    %v142 = vsel %vm125, %v113, 0
    %v145 = vsel %vm125, %v114, 0
    %v148 = vsel %vm125, %v115, 0
    %150 = vmatprep.subr.mxu0 0.0
    %151 = vmatpush1.msra.mxu0 0.0
    %152 = vmatprep.subr.mxu0 0.0
    %153 = vmatpush1.msra.mxu0 0.0
    %154 = vmatprep.subr.mxu0 0.0
    %155 = vmatpush1.msra.mxu0 0.0
    %156 = vmatprep.subr.mxu0 0.0
    %157 = vmatpush1.msra.mxu0 0.0
    %158 = vmatprep.subr.mxu0 0.0
    %159 = vmatpush1.msra.mxu0 0.0
    %160 = vmatprep.subr.mxu0 0.0
    %161 = vmatpush1.msra.mxu0 0.0
    %162 = vmatprep.subr.mxu0 0.0
    %163 = vmatpush1.msra.mxu0 0.0
    %164 = vmatprep.subr.mxu0 0.0
    %165 = vmatpush1.msra.mxu0 0.0
    %166 = vmatprep.subr.mxu0 0.0
    %167 = vmatpush1.msra.mxu0 0.0
    %168 = vmatprep.subr.mxu0 0.0
    %169 = vmatpush1.msra.mxu0 0.0
    %170 = vmatprep.subr.mxu0 0.0
    %171 = vmatpush1.msra.mxu0 0.0
    %172 = vmatprep.subr.mxu0 0.0
    %173 = vmatpush1.msra.mxu0 0.0
    %174 = vmatprep.subr.mxu0 0.0
    %175 = vmatpush1.msra.mxu0 0.0
    %176 = vmatprep.subr.mxu0 0.0
    %177 = vmatpush1.msra.mxu0 0.0
    %178 = vmatprep.subr.mxu0 0.0
    %179 = vmatpush1.msra.mxu0 %v117
    %180 = vmatprep.subr.mxu0 0.0
    %181 = vmatpush1.msra.mxu0 %v116
    %182 = vmatprep.subr.mxu0 0.0
    %183 = vmatpush2.msra.mxu0 0.0
    %184 = vmatprep.subr.mxu0 0.0
    %185 = vmatpush2.msra.mxu0 0.0
    %186 = vmatprep.subr.mxu0 0.0
    %187 = vmatpush2.msra.mxu0 0.0
    %188 = vmatprep.subr.mxu0 0.0
    %189 = vmatpush2.msra.mxu0 0.0
    %190 = vmatprep.subr.mxu0 0.0
    %191 = vmatpush2.msra.mxu0 0.0
    %192 = vmatprep.subr.mxu0 0.0
    %193 = vmatpush2.msra.mxu0 0.0
    %194 = vmatprep.subr.mxu0 0.0
    %195 = vmatpush2.msra.mxu0 0.0
    %196 = vmatprep.subr.mxu0 0.0
    %197 = vmatpush2.msra.mxu0 0.0
    %198 = vmatprep.subr.mxu0 0.0
    %199 = vmatpush2.msra.mxu0 0.0
    %200 = vmatprep.subr.mxu0 0.0
    %201 = vmatpush2.msra.mxu0 0.0
    %202 = vmatprep.subr.mxu0 0.0
    %203 = vmatpush2.msra.mxu0 0.0
    %204 = vmatprep.subr.mxu0 0.0
    %205 = vmatpush2.msra.mxu0 0.0
    %206 = vmatprep.subr.mxu0 0.0
    %207 = vmatpush2.msra.mxu0 0.0
    %208 = vmatprep.subr.mxu0 0.0
    %209 = vmatpush2.msra.mxu0 0.0
    %210 = vmatprep.subr.mxu0 0.0
    %211 = vmatpush2.msra.mxu0 0.0
    %212 = vmatprep.subr.mxu0 0.0
    %213 = vmatpush2.msra.mxu0 0.0
    %214 = vmatprep.mubr.f32.mxu0 0.0
    %215 = vmatmul.mubr.f32.gmra.mxu0 %v127
    %v216 = vpop.f32.mrf.mxu0
    %v217 = vadd.f32 %v123, %v216
    %v218 = vpop.f32.mrf.mxu0
    %219 = vmatprep.mubr.f32.mxu0 0.0
    %220 = vmatmul.mubr.f32.gmra.mxu0 %v130
    %v221 = vpop.f32.mrf.mxu0
    %v222 = vadd.f32 %v123, %v221
    %v223 = vpop.f32.mrf.mxu0
    %224 = vmatprep.mubr.f32.mxu0 0.0
    %225 = vmatmul.mubr.f32.gmra.mxu0 %v133
    %v226 = vpop.f32.mrf.mxu0
    %v227 = vadd.f32 %v123, %v226
    %v228 = vpop.f32.mrf.mxu0
    %229 = vmatprep.mubr.f32.mxu0 0.0
    %230 = vmatmul.mubr.f32.gmra.mxu0 %v136
    %v231 = vpop.f32.mrf.mxu0
    %v232 = vadd.f32 %v123, %v231
    %v233 = vpop.f32.mrf.mxu0
    %234 = vmatprep.mubr.f32.mxu0 0.0
    %235 = vmatmul.mubr.f32.gmra.mxu0 %v139
    %v236 = vpop.f32.mrf.mxu0
    %v237 = vadd.f32 %v123, %v236
    %v238 = vpop.f32.mrf.mxu0
    %239 = vmatprep.mubr.f32.mxu0 0.0
    %240 = vmatmul.mubr.f32.gmra.mxu0 %v142
    %v241 = vpop.f32.mrf.mxu0
    %v242 = vadd.f32 %v123, %v241
    %v243 = vpop.f32.mrf.mxu0
    %244 = vmatprep.mubr.f32.mxu0 0.0
    %245 = vmatmul.mubr.f32.gmra.mxu0 %v145
    %v246 = vpop.f32.mrf.mxu0
    %v247 = vadd.f32 %v123, %v246
    %v248 = vpop.f32.mrf.mxu0
    %249 = vmatprep.mubr.f32.mxu0 0.0
    %250 = vmatmul.mubr.f32.gmra.mxu0 %v148
    %v251 = vpop.f32.mrf.mxu0
    %v252 = vadd.f32 %v123, %v251
    %v253 = vpop.f32.mrf.mxu0
    %254 = vdwg.mxu0
    %255 = vst [vmem:[#allocation2] sm:$0xff] %v217
    %256 = vst [vmem:[#allocation2 + $0x8] sm:$0xff] %v222
    %257 = vst [vmem:[#allocation2 + $0x10] sm:$0xff] %v227
    %258 = vst [vmem:[#allocation2 + $0x18] sm:$0xff] %v232
    %259 = vst [vmem:[#allocation2 + $0x20] sm:$0xff] %v237
    %260 = vst [vmem:[#allocation2 + $0x28] sm:$0xff] %v242
    %261 = vst [vmem:[#allocation2 + $0x30] sm:$0xff] %v247
    %262 = vst [vmem:[#allocation2 + $0x38] sm:$0xff] %v252
    %v263 = vld [vmem:[#allocation10] sm:$0xff]
    %v264 = vld [vmem:[#allocation10 + $0x8] sm:$0xff]
    %v265 = vld [vmem:[#allocation10 + $0x10] sm:$0xff]
    %v266 = vld [vmem:[#allocation10 + $0x18] sm:$0xff]
    %v267 = vld [vmem:[#allocation2] sm:$0xff]
    %vm268 = vcmask 261120
    %v270 = vsel %vm268, 0.0, 0
    %272 = vmatprep.subr.mxu0 0.0
    %273 = vmatpush1.msra.mxu0 0.0
    %274 = vmatprep.subr.mxu0 0.0
    %275 = vmatpush1.msra.mxu0 0.0
    %276 = vmatprep.subr.mxu0 0.0
    %277 = vmatpush1.msra.mxu0 0.0
    %278 = vmatprep.subr.mxu0 0.0
    %279 = vmatpush1.msra.mxu0 0.0
    %280 = vmatprep.subr.mxu0 0.0
    %281 = vmatpush1.msra.mxu0 0.0
    %282 = vmatprep.subr.mxu0 0.0
    %283 = vmatpush1.msra.mxu0 0.0
    %284 = vmatprep.subr.mxu0 0.0
    %285 = vmatpush1.msra.mxu0 0.0
    %286 = vmatprep.subr.mxu0 0.0
    %287 = vmatpush1.msra.mxu0 0.0
    %288 = vmatprep.subr.mxu0 0.0
    %289 = vmatpush1.msra.mxu0 0.0
    %290 = vmatprep.subr.mxu0 0.0
    %291 = vmatpush1.msra.mxu0 0.0
    %292 = vmatprep.subr.mxu0 0.0
    %293 = vmatpush1.msra.mxu0 0.0
    %294 = vmatprep.subr.mxu0 0.0
    %295 = vmatpush1.msra.mxu0 0.0
    %296 = vmatprep.subr.mxu0 0.0
    %297 = vmatpush1.msra.mxu0 %v266
    %298 = vmatprep.subr.mxu0 0.0
    %299 = vmatpush1.msra.mxu0 %v265
    %300 = vmatprep.subr.mxu0 0.0
    %301 = vmatpush1.msra.mxu0 %v264
    %302 = vmatprep.subr.mxu0 0.0
    %303 = vmatpush1.msra.mxu0 %v263
    %304 = vmatprep.subr.mxu0 0.0
    %305 = vmatpush2.msra.mxu0 0.0
    %306 = vmatprep.subr.mxu0 0.0
    %307 = vmatpush2.msra.mxu0 0.0
    %308 = vmatprep.subr.mxu0 0.0
    %309 = vmatpush2.msra.mxu0 0.0
    %310 = vmatprep.subr.mxu0 0.0
    %311 = vmatpush2.msra.mxu0 0.0
    %312 = vmatprep.subr.mxu0 0.0
    %313 = vmatpush2.msra.mxu0 0.0
    %314 = vmatprep.subr.mxu0 0.0
    %315 = vmatpush2.msra.mxu0 0.0
    %316 = vmatprep.subr.mxu0 0.0
    %317 = vmatpush2.msra.mxu0 0.0
    %318 = vmatprep.subr.mxu0 0.0
    %319 = vmatpush2.msra.mxu0 0.0
    %320 = vmatprep.subr.mxu0 0.0
    %321 = vmatpush2.msra.mxu0 0.0
    %322 = vmatprep.subr.mxu0 0.0
    %323 = vmatpush2.msra.mxu0 0.0
    %324 = vmatprep.subr.mxu0 0.0
    %325 = vmatpush2.msra.mxu0 0.0
    %326 = vmatprep.subr.mxu0 0.0
    %327 = vmatpush2.msra.mxu0 0.0
    %328 = vmatprep.subr.mxu0 0.0
    %329 = vmatpush2.msra.mxu0 0.0
    %330 = vmatprep.subr.mxu0 0.0
    %331 = vmatpush2.msra.mxu0 0.0
    %332 = vmatprep.subr.mxu0 0.0
    %333 = vmatpush2.msra.mxu0 0.0
    %334 = vmatprep.subr.mxu0 0.0
    %335 = vmatpush2.msra.mxu0 0.0
    %336 = vmatprep.mubr.f32.mxu0 0.0
    %337 = vmatmul.mubr.f32.gmra.mxu0 %v270
    %v338 = vpop.f32.mrf.mxu0
    %v339 = vadd.f32 0.0, %v338
    %v340 = vpop.f32.mrf.mxu0
    %341 = vdwg.mxu0
    %v342 = vadd.f32 %v267, %v339
    %v343 = vtanh.pop %v342
    %v344 = vxor.u32 %v342, 2147483648
    %v345 = vmul.f32 %v344, 1.442695
    %v346 = vpow.pop %v345
    %v347 = vadd.f32 %v346, 1.0
    %v348 = vrcp.pop %v347
    %v349 = vmul.f32 1.0, %v348
    %v350 = vsel %vm107, %v343, %v349
    %v351 = vmul.f32 %v350, 0.0
    %353 = vrot.lane.b32.xlu0 %v350, 64
    %v354 = vpop.permute.xlu0 %353
    %v356 = vmul.f32 %v350, %v354
    %358 = vrot.lane.b32.xlu0 %v356, 32
    %v359 = vpop.permute.xlu0 %358
    %v361 = vadd.f32 %v351, %v359
    %v362 = vtanh.pop %v361
    %364 = vrot.lane.b32.xlu0 %v362, 64
    %v365 = vpop.permute.xlu0 %364
    %v367 = vmul.f32 %v350, %v365
    %369 = vrot.lane.b32.xlu0 %v367, 32
    %v370 = vpop.permute.xlu0 %369
    %372 = vst.msk [vmem:[#allocation3] sm:$0xff] %vm268, %v370
    %s373 = scalar_lea.vmem [#allocation2], 8
    %v374 = vld [vmem:[%s373] sm:$0xff]
    %v375 = vsel %vm268, %v370, 0
    %377 = vmatprep.subr.mxu0 0.0
    %378 = vmatpush1.msra.mxu0 0.0
    %379 = vmatprep.subr.mxu0 0.0
    %380 = vmatpush1.msra.mxu0 0.0
    %381 = vmatprep.subr.mxu0 0.0
    %382 = vmatpush1.msra.mxu0 0.0
    %383 = vmatprep.subr.mxu0 0.0
    %384 = vmatpush1.msra.mxu0 0.0
    %385 = vmatprep.subr.mxu0 0.0
    %386 = vmatpush1.msra.mxu0 0.0
    %387 = vmatprep.subr.mxu0 0.0
    %388 = vmatpush1.msra.mxu0 0.0
    %389 = vmatprep.subr.mxu0 0.0
    %390 = vmatpush1.msra.mxu0 0.0
    %391 = vmatprep.subr.mxu0 0.0
    %392 = vmatpush1.msra.mxu0 0.0
    %393 = vmatprep.subr.mxu0 0.0
    %394 = vmatpush1.msra.mxu0 0.0
    %395 = vmatprep.subr.mxu0 0.0
    %396 = vmatpush1.msra.mxu0 0.0
    %397 = vmatprep.subr.mxu0 0.0
    %398 = vmatpush1.msra.mxu0 0.0
    %399 = vmatprep.subr.mxu0 0.0
    %400 = vmatpush1.msra.mxu0 0.0
    %401 = vmatprep.subr.mxu0 0.0
    %402 = vmatpush1.msra.mxu0 %v266
    %403 = vmatprep.subr.mxu0 0.0
    %404 = vmatpush1.msra.mxu0 %v265
    %405 = vmatprep.subr.mxu0 0.0
    %406 = vmatpush1.msra.mxu0 %v264
    %407 = vmatprep.subr.mxu0 0.0
    %408 = vmatpush1.msra.mxu0 %v263
    %409 = vmatprep.subr.mxu0 0.0
    %410 = vmatpush2.msra.mxu0 0.0
    %411 = vmatprep.subr.mxu0 0.0
    %412 = vmatpush2.msra.mxu0 0.0
    %413 = vmatprep.subr.mxu0 0.0
    %414 = vmatpush2.msra.mxu0 0.0
    %415 = vmatprep.subr.mxu0 0.0
    %416 = vmatpush2.msra.mxu0 0.0
    %417 = vmatprep.subr.mxu0 0.0
    %418 = vmatpush2.msra.mxu0 0.0
    %419 = vmatprep.subr.mxu0 0.0
    %420 = vmatpush2.msra.mxu0 0.0
    %421 = vmatprep.subr.mxu0 0.0
    %422 = vmatpush2.msra.mxu0 0.0
    %423 = vmatprep.subr.mxu0 0.0
    %424 = vmatpush2.msra.mxu0 0.0
    %425 = vmatprep.subr.mxu0 0.0
    %426 = vmatpush2.msra.mxu0 0.0
    %427 = vmatprep.subr.mxu0 0.0
    %428 = vmatpush2.msra.mxu0 0.0
    %429 = vmatprep.subr.mxu0 0.0
    %430 = vmatpush2.msra.mxu0 0.0
    %431 = vmatprep.subr.mxu0 0.0
    %432 = vmatpush2.msra.mxu0 0.0
    %433 = vmatprep.subr.mxu0 0.0
    %434 = vmatpush2.msra.mxu0 0.0
    %435 = vmatprep.subr.mxu0 0.0
    %436 = vmatpush2.msra.mxu0 0.0
    %437 = vmatprep.subr.mxu0 0.0
    %438 = vmatpush2.msra.mxu0 0.0
    %439 = vmatprep.subr.mxu0 0.0
    %440 = vmatpush2.msra.mxu0 0.0
    %441 = vmatprep.mubr.f32.mxu0 0.0
    %442 = vmatmul.mubr.f32.gmra.mxu0 %v375
    %v443 = vpop.f32.mrf.mxu0
    %v444 = vadd.f32 0.0, %v443
    %v445 = vpop.f32.mrf.mxu0
    %446 = vdwg.mxu0
    %v447 = vadd.f32 %v374, %v444
    %v448 = vtanh.pop %v447
    %v449 = vxor.u32 %v447, 2147483648
    %v450 = vmul.f32 %v449, 1.442695
    %v451 = vpow.pop %v450
    %v452 = vadd.f32 %v451, 1.0
    %v453 = vrcp.pop %v452
    %v454 = vmul.f32 1.0, %v453
    %v455 = vsel %vm107, %v448, %v454
    %v456 = vmul.f32 %v455, %v361
    %458 = vrot.lane.b32.xlu0 %v455, 64
    %v459 = vpop.permute.xlu0 %458
    %v461 = vmul.f32 %v455, %v459
    %463 = vrot.lane.b32.xlu0 %v461, 32
    %v464 = vpop.permute.xlu0 %463
    %v466 = vadd.f32 %v456, %v464
    %v467 = vtanh.pop %v466
    %469 = vrot.lane.b32.xlu0 %v467, 64
    %v470 = vpop.permute.xlu0 %469
    %v472 = vmul.f32 %v455, %v470
    %474 = vrot.lane.b32.xlu0 %v472, 32
    %v475 = vpop.permute.xlu0 %474
    %s477 = scalar_lea.vmem [#allocation3], 8
    %478 = vst.msk [vmem:[%s477] sm:$0xff] %vm268, %v475
    %s479 = scalar_lea.vmem [#allocation2], 16
    %v480 = vld [vmem:[%s479] sm:$0xff]
    %v481 = vsel %vm268, %v475, 0
    %483 = vmatprep.subr.mxu0 0.0
    %484 = vmatpush1.msra.mxu0 0.0
    %485 = vmatprep.subr.mxu0 0.0
    %486 = vmatpush1.msra.mxu0 0.0
    %487 = vmatprep.subr.mxu0 0.0
    %488 = vmatpush1.msra.mxu0 0.0
    %489 = vmatprep.subr.mxu0 0.0
    %490 = vmatpush1.msra.mxu0 0.0
    %491 = vmatprep.subr.mxu0 0.0
    %492 = vmatpush1.msra.mxu0 0.0
    %493 = vmatprep.subr.mxu0 0.0
    %494 = vmatpush1.msra.mxu0 0.0
    %495 = vmatprep.subr.mxu0 0.0
    %496 = vmatpush1.msra.mxu0 0.0
    %497 = vmatprep.subr.mxu0 0.0
    %498 = vmatpush1.msra.mxu0 0.0
    %499 = vmatprep.subr.mxu0 0.0
    %500 = vmatpush1.msra.mxu0 0.0
    %501 = vmatprep.subr.mxu0 0.0
    %502 = vmatpush1.msra.mxu0 0.0
    %503 = vmatprep.subr.mxu0 0.0
    %504 = vmatpush1.msra.mxu0 0.0
    %505 = vmatprep.subr.mxu0 0.0
    %506 = vmatpush1.msra.mxu0 0.0
    %507 = vmatprep.subr.mxu0 0.0
    %508 = vmatpush1.msra.mxu0 %v266
    %509 = vmatprep.subr.mxu0 0.0
    %510 = vmatpush1.msra.mxu0 %v265
    %511 = vmatprep.subr.mxu0 0.0
    %512 = vmatpush1.msra.mxu0 %v264
    %513 = vmatprep.subr.mxu0 0.0
    %514 = vmatpush1.msra.mxu0 %v263
    %515 = vmatprep.subr.mxu0 0.0
    %516 = vmatpush2.msra.mxu0 0.0
    %517 = vmatprep.subr.mxu0 0.0
    %518 = vmatpush2.msra.mxu0 0.0
    %519 = vmatprep.subr.mxu0 0.0
    %520 = vmatpush2.msra.mxu0 0.0
    %521 = vmatprep.subr.mxu0 0.0
    %522 = vmatpush2.msra.mxu0 0.0
    %523 = vmatprep.subr.mxu0 0.0
    %524 = vmatpush2.msra.mxu0 0.0
    %525 = vmatprep.subr.mxu0 0.0
    %526 = vmatpush2.msra.mxu0 0.0
    %527 = vmatprep.subr.mxu0 0.0
    %528 = vmatpush2.msra.mxu0 0.0
    %529 = vmatprep.subr.mxu0 0.0
    %530 = vmatpush2.msra.mxu0 0.0
    %531 = vmatprep.subr.mxu0 0.0
    %532 = vmatpush2.msra.mxu0 0.0
    %533 = vmatprep.subr.mxu0 0.0
    %534 = vmatpush2.msra.mxu0 0.0
    %535 = vmatprep.subr.mxu0 0.0
    %536 = vmatpush2.msra.mxu0 0.0
    %537 = vmatprep.subr.mxu0 0.0
    %538 = vmatpush2.msra.mxu0 0.0
    %539 = vmatprep.subr.mxu0 0.0
    %540 = vmatpush2.msra.mxu0 0.0
    %541 = vmatprep.subr.mxu0 0.0
    %542 = vmatpush2.msra.mxu0 0.0
    %543 = vmatprep.subr.mxu0 0.0
    %544 = vmatpush2.msra.mxu0 0.0
    %545 = vmatprep.subr.mxu0 0.0
    %546 = vmatpush2.msra.mxu0 0.0
    %547 = vmatprep.mubr.f32.mxu0 0.0
    %548 = vmatmul.mubr.f32.gmra.mxu0 %v481
    %v549 = vpop.f32.mrf.mxu0
    %v550 = vadd.f32 0.0, %v549
    %v551 = vpop.f32.mrf.mxu0
    %552 = vdwg.mxu0
    %v553 = vadd.f32 %v480, %v550
    %v554 = vtanh.pop %v553
    %v555 = vxor.u32 %v553, 2147483648
    %v556 = vmul.f32 %v555, 1.442695
    %v557 = vpow.pop %v556
    %v558 = vadd.f32 %v557, 1.0
    %v559 = vrcp.pop %v558
    %v560 = vmul.f32 1.0, %v559
    %v561 = vsel %vm107, %v554, %v560
    %v562 = vmul.f32 %v561, %v466
    %564 = vrot.lane.b32.xlu0 %v561, 64
    %v565 = vpop.permute.xlu0 %564
    %v567 = vmul.f32 %v561, %v565
    %569 = vrot.lane.b32.xlu0 %v567, 32
    %v570 = vpop.permute.xlu0 %569
    %v572 = vadd.f32 %v562, %v570
    %v573 = vtanh.pop %v572
    %575 = vrot.lane.b32.xlu0 %v573, 64
    %v576 = vpop.permute.xlu0 %575
    %v578 = vmul.f32 %v561, %v576
    %580 = vrot.lane.b32.xlu0 %v578, 32
    %v581 = vpop.permute.xlu0 %580
    %s583 = scalar_lea.vmem [#allocation3], 16
    %584 = vst.msk [vmem:[%s583] sm:$0xff] %vm268, %v581
    %s585 = scalar_lea.vmem [#allocation2], 24
    %v586 = vld [vmem:[%s585] sm:$0xff]
    %v587 = vsel %vm268, %v581, 0
    %589 = vmatprep.subr.mxu0 0.0
    %590 = vmatpush1.msra.mxu0 0.0
    %591 = vmatprep.subr.mxu0 0.0
    %592 = vmatpush1.msra.mxu0 0.0
    %593 = vmatprep.subr.mxu0 0.0
    %594 = vmatpush1.msra.mxu0 0.0
    %595 = vmatprep.subr.mxu0 0.0
    %596 = vmatpush1.msra.mxu0 0.0
    %597 = vmatprep.subr.mxu0 0.0
    %598 = vmatpush1.msra.mxu0 0.0
    %599 = vmatprep.subr.mxu0 0.0
    %600 = vmatpush1.msra.mxu0 0.0
    %601 = vmatprep.subr.mxu0 0.0
    %602 = vmatpush1.msra.mxu0 0.0
    %603 = vmatprep.subr.mxu0 0.0
    %604 = vmatpush1.msra.mxu0 0.0
    %605 = vmatprep.subr.mxu0 0.0
    %606 = vmatpush1.msra.mxu0 0.0
    %607 = vmatprep.subr.mxu0 0.0
    %608 = vmatpush1.msra.mxu0 0.0
    %609 = vmatprep.subr.mxu0 0.0
    %610 = vmatpush1.msra.mxu0 0.0
    %611 = vmatprep.subr.mxu0 0.0
    %612 = vmatpush1.msra.mxu0 0.0
    %613 = vmatprep.subr.mxu0 0.0
    %614 = vmatpush1.msra.mxu0 %v266
    %615 = vmatprep.subr.mxu0 0.0
    %616 = vmatpush1.msra.mxu0 %v265
    %617 = vmatprep.subr.mxu0 0.0
    %618 = vmatpush1.msra.mxu0 %v264
    %619 = vmatprep.subr.mxu0 0.0
    %620 = vmatpush1.msra.mxu0 %v263
    %621 = vmatprep.subr.mxu0 0.0
    %622 = vmatpush2.msra.mxu0 0.0
    %623 = vmatprep.subr.mxu0 0.0
    %624 = vmatpush2.msra.mxu0 0.0
    %625 = vmatprep.subr.mxu0 0.0
    %626 = vmatpush2.msra.mxu0 0.0
    %627 = vmatprep.subr.mxu0 0.0
    %628 = vmatpush2.msra.mxu0 0.0
    %629 = vmatprep.subr.mxu0 0.0
    %630 = vmatpush2.msra.mxu0 0.0
    %631 = vmatprep.subr.mxu0 0.0
    %632 = vmatpush2.msra.mxu0 0.0
    %633 = vmatprep.subr.mxu0 0.0
    %634 = vmatpush2.msra.mxu0 0.0
    %635 = vmatprep.subr.mxu0 0.0
    %636 = vmatpush2.msra.mxu0 0.0
    %637 = vmatprep.subr.mxu0 0.0
    %638 = vmatpush2.msra.mxu0 0.0
    %639 = vmatprep.subr.mxu0 0.0
    %640 = vmatpush2.msra.mxu0 0.0
    %641 = vmatprep.subr.mxu0 0.0
    %642 = vmatpush2.msra.mxu0 0.0
    %643 = vmatprep.subr.mxu0 0.0
    %644 = vmatpush2.msra.mxu0 0.0
    %645 = vmatprep.subr.mxu0 0.0
    %646 = vmatpush2.msra.mxu0 0.0
    %647 = vmatprep.subr.mxu0 0.0
    %648 = vmatpush2.msra.mxu0 0.0
    %649 = vmatprep.subr.mxu0 0.0
    %650 = vmatpush2.msra.mxu0 0.0
    %651 = vmatprep.subr.mxu0 0.0
    %652 = vmatpush2.msra.mxu0 0.0
    %653 = vmatprep.mubr.f32.mxu0 0.0
    %654 = vmatmul.mubr.f32.gmra.mxu0 %v587
    %v655 = vpop.f32.mrf.mxu0
    %v656 = vadd.f32 0.0, %v655
    %v657 = vpop.f32.mrf.mxu0
    %658 = vdwg.mxu0
    %v659 = vadd.f32 %v586, %v656
    %v660 = vtanh.pop %v659
    %v661 = vxor.u32 %v659, 2147483648
    %v662 = vmul.f32 %v661, 1.442695
    %v663 = vpow.pop %v662
    %v664 = vadd.f32 %v663, 1.0
    %v665 = vrcp.pop %v664
    %v666 = vmul.f32 1.0, %v665
    %v667 = vsel %vm107, %v660, %v666
    %v668 = vmul.f32 %v667, %v572
    %670 = vrot.lane.b32.xlu0 %v667, 64
    %v671 = vpop.permute.xlu0 %670
    %v673 = vmul.f32 %v667, %v671
    %675 = vrot.lane.b32.xlu0 %v673, 32
    %v676 = vpop.permute.xlu0 %675
    %v678 = vadd.f32 %v668, %v676
    %v679 = vtanh.pop %v678
    %681 = vrot.lane.b32.xlu0 %v679, 64
    %v682 = vpop.permute.xlu0 %681
    %v684 = vmul.f32 %v667, %v682
    %686 = vrot.lane.b32.xlu0 %v684, 32
    %v687 = vpop.permute.xlu0 %686
    %s689 = scalar_lea.vmem [#allocation3], 24
    %690 = vst.msk [vmem:[%s689] sm:$0xff] %vm268, %v687
    %s691 = scalar_lea.vmem [#allocation2], 32
    %v692 = vld [vmem:[%s691] sm:$0xff]
    %v693 = vsel %vm268, %v687, 0
    %695 = vmatprep.subr.mxu0 0.0
    %696 = vmatpush1.msra.mxu0 0.0
    %697 = vmatprep.subr.mxu0 0.0
    %698 = vmatpush1.msra.mxu0 0.0
    %699 = vmatprep.subr.mxu0 0.0
    %700 = vmatpush1.msra.mxu0 0.0
    %701 = vmatprep.subr.mxu0 0.0
    %702 = vmatpush1.msra.mxu0 0.0
    %703 = vmatprep.subr.mxu0 0.0
    %704 = vmatpush1.msra.mxu0 0.0
    %705 = vmatprep.subr.mxu0 0.0
    %706 = vmatpush1.msra.mxu0 0.0
    %707 = vmatprep.subr.mxu0 0.0
    %708 = vmatpush1.msra.mxu0 0.0
    %709 = vmatprep.subr.mxu0 0.0
    %710 = vmatpush1.msra.mxu0 0.0
    %711 = vmatprep.subr.mxu0 0.0
    %712 = vmatpush1.msra.mxu0 0.0
    %713 = vmatprep.subr.mxu0 0.0
    %714 = vmatpush1.msra.mxu0 0.0
    %715 = vmatprep.subr.mxu0 0.0
    %716 = vmatpush1.msra.mxu0 0.0
    %717 = vmatprep.subr.mxu0 0.0
    %718 = vmatpush1.msra.mxu0 0.0
    %719 = vmatprep.subr.mxu0 0.0
    %720 = vmatpush1.msra.mxu0 %v266
    %721 = vmatprep.subr.mxu0 0.0
    %722 = vmatpush1.msra.mxu0 %v265
    %723 = vmatprep.subr.mxu0 0.0
    %724 = vmatpush1.msra.mxu0 %v264
    %725 = vmatprep.subr.mxu0 0.0
    %726 = vmatpush1.msra.mxu0 %v263
    %727 = vmatprep.subr.mxu0 0.0
    %728 = vmatpush2.msra.mxu0 0.0
    %729 = vmatprep.subr.mxu0 0.0
    %730 = vmatpush2.msra.mxu0 0.0
    %731 = vmatprep.subr.mxu0 0.0
    %732 = vmatpush2.msra.mxu0 0.0
    %733 = vmatprep.subr.mxu0 0.0
    %734 = vmatpush2.msra.mxu0 0.0
    %735 = vmatprep.subr.mxu0 0.0
    %736 = vmatpush2.msra.mxu0 0.0
    %737 = vmatprep.subr.mxu0 0.0
    %738 = vmatpush2.msra.mxu0 0.0
    %739 = vmatprep.subr.mxu0 0.0
    %740 = vmatpush2.msra.mxu0 0.0
    %741 = vmatprep.subr.mxu0 0.0
    %742 = vmatpush2.msra.mxu0 0.0
    %743 = vmatprep.subr.mxu0 0.0
    %744 = vmatpush2.msra.mxu0 0.0
    %745 = vmatprep.subr.mxu0 0.0
    %746 = vmatpush2.msra.mxu0 0.0
    %747 = vmatprep.subr.mxu0 0.0
    %748 = vmatpush2.msra.mxu0 0.0
    %749 = vmatprep.subr.mxu0 0.0
    %750 = vmatpush2.msra.mxu0 0.0
    %751 = vmatprep.subr.mxu0 0.0
    %752 = vmatpush2.msra.mxu0 0.0
    %753 = vmatprep.subr.mxu0 0.0
    %754 = vmatpush2.msra.mxu0 0.0
    %755 = vmatprep.subr.mxu0 0.0
    %756 = vmatpush2.msra.mxu0 0.0
    %757 = vmatprep.subr.mxu0 0.0
    %758 = vmatpush2.msra.mxu0 0.0
    %759 = vmatprep.mubr.f32.mxu0 0.0
    %760 = vmatmul.mubr.f32.gmra.mxu0 %v693
    %v761 = vpop.f32.mrf.mxu0
    %v762 = vadd.f32 0.0, %v761
    %v763 = vpop.f32.mrf.mxu0
    %764 = vdwg.mxu0
    %v765 = vadd.f32 %v692, %v762
    %v766 = vtanh.pop %v765
    %v767 = vxor.u32 %v765, 2147483648
    %v768 = vmul.f32 %v767, 1.442695
    %v769 = vpow.pop %v768
    %v770 = vadd.f32 %v769, 1.0
    %v771 = vrcp.pop %v770
    %v772 = vmul.f32 1.0, %v771
    %v773 = vsel %vm107, %v766, %v772
    %v774 = vmul.f32 %v773, %v678
    %776 = vrot.lane.b32.xlu0 %v773, 64
    %v777 = vpop.permute.xlu0 %776
    %v779 = vmul.f32 %v773, %v777
    %781 = vrot.lane.b32.xlu0 %v779, 32
    %v782 = vpop.permute.xlu0 %781
    %v784 = vadd.f32 %v774, %v782
    %v785 = vtanh.pop %v784
    %787 = vrot.lane.b32.xlu0 %v785, 64
    %v788 = vpop.permute.xlu0 %787
    %v790 = vmul.f32 %v773, %v788
    %792 = vrot.lane.b32.xlu0 %v790, 32
    %v793 = vpop.permute.xlu0 %792
    %s795 = scalar_lea.vmem [#allocation3], 32
    %796 = vst.msk [vmem:[%s795] sm:$0xff] %vm268, %v793
    %s797 = scalar_lea.vmem [#allocation2], 40
    %v798 = vld [vmem:[%s797] sm:$0xff]
    %v799 = vsel %vm268, %v793, 0
    %801 = vmatprep.subr.mxu0 0.0
    %802 = vmatpush1.msra.mxu0 0.0
    %803 = vmatprep.subr.mxu0 0.0
    %804 = vmatpush1.msra.mxu0 0.0
    %805 = vmatprep.subr.mxu0 0.0
    %806 = vmatpush1.msra.mxu0 0.0
    %807 = vmatprep.subr.mxu0 0.0
    %808 = vmatpush1.msra.mxu0 0.0
    %809 = vmatprep.subr.mxu0 0.0
    %810 = vmatpush1.msra.mxu0 0.0
    %811 = vmatprep.subr.mxu0 0.0
    %812 = vmatpush1.msra.mxu0 0.0
    %813 = vmatprep.subr.mxu0 0.0
    %814 = vmatpush1.msra.mxu0 0.0
    %815 = vmatprep.subr.mxu0 0.0
    %816 = vmatpush1.msra.mxu0 0.0
    %817 = vmatprep.subr.mxu0 0.0
    %818 = vmatpush1.msra.mxu0 0.0
    %819 = vmatprep.subr.mxu0 0.0
    %820 = vmatpush1.msra.mxu0 0.0
    %821 = vmatprep.subr.mxu0 0.0
    %822 = vmatpush1.msra.mxu0 0.0
    %823 = vmatprep.subr.mxu0 0.0
    %824 = vmatpush1.msra.mxu0 0.0
    %825 = vmatprep.subr.mxu0 0.0
    %826 = vmatpush1.msra.mxu0 %v266
    %827 = vmatprep.subr.mxu0 0.0
    %828 = vmatpush1.msra.mxu0 %v265
    %829 = vmatprep.subr.mxu0 0.0
    %830 = vmatpush1.msra.mxu0 %v264
    %831 = vmatprep.subr.mxu0 0.0
    %832 = vmatpush1.msra.mxu0 %v263
    %833 = vmatprep.subr.mxu0 0.0
    %834 = vmatpush2.msra.mxu0 0.0
    %835 = vmatprep.subr.mxu0 0.0
    %836 = vmatpush2.msra.mxu0 0.0
    %837 = vmatprep.subr.mxu0 0.0
    %838 = vmatpush2.msra.mxu0 0.0
    %839 = vmatprep.subr.mxu0 0.0
    %840 = vmatpush2.msra.mxu0 0.0
    %841 = vmatprep.subr.mxu0 0.0
    %842 = vmatpush2.msra.mxu0 0.0
    %843 = vmatprep.subr.mxu0 0.0
    %844 = vmatpush2.msra.mxu0 0.0
    %845 = vmatprep.subr.mxu0 0.0
    %846 = vmatpush2.msra.mxu0 0.0
    %847 = vmatprep.subr.mxu0 0.0
    %848 = vmatpush2.msra.mxu0 0.0
    %849 = vmatprep.subr.mxu0 0.0
    %850 = vmatpush2.msra.mxu0 0.0
    %851 = vmatprep.subr.mxu0 0.0
    %852 = vmatpush2.msra.mxu0 0.0
    %853 = vmatprep.subr.mxu0 0.0
    %854 = vmatpush2.msra.mxu0 0.0
    %855 = vmatprep.subr.mxu0 0.0
    %856 = vmatpush2.msra.mxu0 0.0
    %857 = vmatprep.subr.mxu0 0.0
    %858 = vmatpush2.msra.mxu0 0.0
    %859 = vmatprep.subr.mxu0 0.0
    %860 = vmatpush2.msra.mxu0 0.0
    %861 = vmatprep.subr.mxu0 0.0
    %862 = vmatpush2.msra.mxu0 0.0
    %863 = vmatprep.subr.mxu0 0.0
    %864 = vmatpush2.msra.mxu0 0.0
    %865 = vmatprep.mubr.f32.mxu0 0.0
    %866 = vmatmul.mubr.f32.gmra.mxu0 %v799
    %v867 = vpop.f32.mrf.mxu0
    %v868 = vadd.f32 0.0, %v867
    %v869 = vpop.f32.mrf.mxu0
    %870 = vdwg.mxu0
    %v871 = vadd.f32 %v798, %v868
    %v872 = vtanh.pop %v871
    %v873 = vxor.u32 %v871, 2147483648
    %v874 = vmul.f32 %v873, 1.442695
    %v875 = vpow.pop %v874
    %v876 = vadd.f32 %v875, 1.0
    %v877 = vrcp.pop %v876
    %v878 = vmul.f32 1.0, %v877
    %v879 = vsel %vm107, %v872, %v878
    %v880 = vmul.f32 %v879, %v784
    %882 = vrot.lane.b32.xlu0 %v879, 64
    %v883 = vpop.permute.xlu0 %882
    %v885 = vmul.f32 %v879, %v883
    %887 = vrot.lane.b32.xlu0 %v885, 32
    %v888 = vpop.permute.xlu0 %887
    %v890 = vadd.f32 %v880, %v888
    %v891 = vtanh.pop %v890
    %893 = vrot.lane.b32.xlu0 %v891, 64
    %v894 = vpop.permute.xlu0 %893
    %v896 = vmul.f32 %v879, %v894
    %898 = vrot.lane.b32.xlu0 %v896, 32
    %v899 = vpop.permute.xlu0 %898
    %s901 = scalar_lea.vmem [#allocation3], 40
    %902 = vst.msk [vmem:[%s901] sm:$0xff] %vm268, %v899
    %s903 = scalar_lea.vmem [#allocation2], 48
    %v904 = vld [vmem:[%s903] sm:$0xff]
    %v905 = vsel %vm268, %v899, 0
    %907 = vmatprep.subr.mxu0 0.0
    %908 = vmatpush1.msra.mxu0 0.0
    %909 = vmatprep.subr.mxu0 0.0
    %910 = vmatpush1.msra.mxu0 0.0
    %911 = vmatprep.subr.mxu0 0.0
    %912 = vmatpush1.msra.mxu0 0.0
    %913 = vmatprep.subr.mxu0 0.0
    %914 = vmatpush1.msra.mxu0 0.0
    %915 = vmatprep.subr.mxu0 0.0
    %916 = vmatpush1.msra.mxu0 0.0
    %917 = vmatprep.subr.mxu0 0.0
    %918 = vmatpush1.msra.mxu0 0.0
    %919 = vmatprep.subr.mxu0 0.0
    %920 = vmatpush1.msra.mxu0 0.0
    %921 = vmatprep.subr.mxu0 0.0
    %922 = vmatpush1.msra.mxu0 0.0
    %923 = vmatprep.subr.mxu0 0.0
    %924 = vmatpush1.msra.mxu0 0.0
    %925 = vmatprep.subr.mxu0 0.0
    %926 = vmatpush1.msra.mxu0 0.0
    %927 = vmatprep.subr.mxu0 0.0
    %928 = vmatpush1.msra.mxu0 0.0
    %929 = vmatprep.subr.mxu0 0.0
    %930 = vmatpush1.msra.mxu0 0.0
    %931 = vmatprep.subr.mxu0 0.0
    %932 = vmatpush1.msra.mxu0 %v266
    %933 = vmatprep.subr.mxu0 0.0
    %934 = vmatpush1.msra.mxu0 %v265
    %935 = vmatprep.subr.mxu0 0.0
    %936 = vmatpush1.msra.mxu0 %v264
    %937 = vmatprep.subr.mxu0 0.0
    %938 = vmatpush1.msra.mxu0 %v263
    %939 = vmatprep.subr.mxu0 0.0
    %940 = vmatpush2.msra.mxu0 0.0
    %941 = vmatprep.subr.mxu0 0.0
    %942 = vmatpush2.msra.mxu0 0.0
    %943 = vmatprep.subr.mxu0 0.0
    %944 = vmatpush2.msra.mxu0 0.0
    %945 = vmatprep.subr.mxu0 0.0
    %946 = vmatpush2.msra.mxu0 0.0
    %947 = vmatprep.subr.mxu0 0.0
    %948 = vmatpush2.msra.mxu0 0.0
    %949 = vmatprep.subr.mxu0 0.0
    %950 = vmatpush2.msra.mxu0 0.0
    %951 = vmatprep.subr.mxu0 0.0
    %952 = vmatpush2.msra.mxu0 0.0
    %953 = vmatprep.subr.mxu0 0.0
    %954 = vmatpush2.msra.mxu0 0.0
    %955 = vmatprep.subr.mxu0 0.0
    %956 = vmatpush2.msra.mxu0 0.0
    %957 = vmatprep.subr.mxu0 0.0
    %958 = vmatpush2.msra.mxu0 0.0
    %959 = vmatprep.subr.mxu0 0.0
    %960 = vmatpush2.msra.mxu0 0.0
    %961 = vmatprep.subr.mxu0 0.0
    %962 = vmatpush2.msra.mxu0 0.0
    %963 = vmatprep.subr.mxu0 0.0
    %964 = vmatpush2.msra.mxu0 0.0
    %965 = vmatprep.subr.mxu0 0.0
    %966 = vmatpush2.msra.mxu0 0.0
    %967 = vmatprep.subr.mxu0 0.0
    %968 = vmatpush2.msra.mxu0 0.0
    %969 = vmatprep.subr.mxu0 0.0
    %970 = vmatpush2.msra.mxu0 0.0
    %971 = vmatprep.mubr.f32.mxu0 0.0
    %972 = vmatmul.mubr.f32.gmra.mxu0 %v905
    %v973 = vpop.f32.mrf.mxu0
    %v974 = vadd.f32 0.0, %v973
    %v975 = vpop.f32.mrf.mxu0
    %976 = vdwg.mxu0
    %v977 = vadd.f32 %v904, %v974
    %v978 = vtanh.pop %v977
    %v979 = vxor.u32 %v977, 2147483648
    %v980 = vmul.f32 %v979, 1.442695
    %v981 = vpow.pop %v980
    %v982 = vadd.f32 %v981, 1.0
    %v983 = vrcp.pop %v982
    %v984 = vmul.f32 1.0, %v983
    %v985 = vsel %vm107, %v978, %v984
    %v986 = vmul.f32 %v985, %v890
    %988 = vrot.lane.b32.xlu0 %v985, 64
    %v989 = vpop.permute.xlu0 %988
    %v991 = vmul.f32 %v985, %v989
    %993 = vrot.lane.b32.xlu0 %v991, 32
    %v994 = vpop.permute.xlu0 %993
    %v996 = vadd.f32 %v986, %v994
    %v997 = vtanh.pop %v996
    %999 = vrot.lane.b32.xlu0 %v997, 64
    %v1000 = vpop.permute.xlu0 %999
    %v1002 = vmul.f32 %v985, %v1000
    %1004 = vrot.lane.b32.xlu0 %v1002, 32
    %v1005 = vpop.permute.xlu0 %1004
    %s1007 = scalar_lea.vmem [#allocation3], 48
    %1008 = vst.msk [vmem:[%s1007] sm:$0xff] %vm268, %v1005
    %s1009 = scalar_lea.vmem [#allocation2], 56
    %v1010 = vld [vmem:[%s1009] sm:$0xff]
    %v1011 = vsel %vm268, %v1005, 0
    %1013 = vmatprep.subr.mxu0 0.0
    %1014 = vmatpush1.msra.mxu0 0.0
    %1015 = vmatprep.subr.mxu0 0.0
    %1016 = vmatpush1.msra.mxu0 0.0
    %1017 = vmatprep.subr.mxu0 0.0
    %1018 = vmatpush1.msra.mxu0 0.0
    %1019 = vmatprep.subr.mxu0 0.0
    %1020 = vmatpush1.msra.mxu0 0.0
    %1021 = vmatprep.subr.mxu0 0.0
    %1022 = vmatpush1.msra.mxu0 0.0
    %1023 = vmatprep.subr.mxu0 0.0
    %1024 = vmatpush1.msra.mxu0 0.0
    %1025 = vmatprep.subr.mxu0 0.0
    %1026 = vmatpush1.msra.mxu0 0.0
    %1027 = vmatprep.subr.mxu0 0.0
    %1028 = vmatpush1.msra.mxu0 0.0
    %1029 = vmatprep.subr.mxu0 0.0
    %1030 = vmatpush1.msra.mxu0 0.0
    %1031 = vmatprep.subr.mxu0 0.0
    %1032 = vmatpush1.msra.mxu0 0.0
    %1033 = vmatprep.subr.mxu0 0.0
    %1034 = vmatpush1.msra.mxu0 0.0
    %1035 = vmatprep.subr.mxu0 0.0
    %1036 = vmatpush1.msra.mxu0 0.0
    %1037 = vmatprep.subr.mxu0 0.0
    %1038 = vmatpush1.msra.mxu0 %v266
    %1039 = vmatprep.subr.mxu0 0.0
    %1040 = vmatpush1.msra.mxu0 %v265
    %1041 = vmatprep.subr.mxu0 0.0
    %1042 = vmatpush1.msra.mxu0 %v264
    %1043 = vmatprep.subr.mxu0 0.0
    %1044 = vmatpush1.msra.mxu0 %v263
    %1045 = vmatprep.subr.mxu0 0.0
    %1046 = vmatpush2.msra.mxu0 0.0
    %1047 = vmatprep.subr.mxu0 0.0
    %1048 = vmatpush2.msra.mxu0 0.0
    %1049 = vmatprep.subr.mxu0 0.0
    %1050 = vmatpush2.msra.mxu0 0.0
    %1051 = vmatprep.subr.mxu0 0.0
    %1052 = vmatpush2.msra.mxu0 0.0
    %1053 = vmatprep.subr.mxu0 0.0
    %1054 = vmatpush2.msra.mxu0 0.0
    %1055 = vmatprep.subr.mxu0 0.0
    %1056 = vmatpush2.msra.mxu0 0.0
    %1057 = vmatprep.subr.mxu0 0.0
    %1058 = vmatpush2.msra.mxu0 0.0
    %1059 = vmatprep.subr.mxu0 0.0
    %1060 = vmatpush2.msra.mxu0 0.0
    %1061 = vmatprep.subr.mxu0 0.0
    %1062 = vmatpush2.msra.mxu0 0.0
    %1063 = vmatprep.subr.mxu0 0.0
    %1064 = vmatpush2.msra.mxu0 0.0
    %1065 = vmatprep.subr.mxu0 0.0
    %1066 = vmatpush2.msra.mxu0 0.0
    %1067 = vmatprep.subr.mxu0 0.0
    %1068 = vmatpush2.msra.mxu0 0.0
    %1069 = vmatprep.subr.mxu0 0.0
    %1070 = vmatpush2.msra.mxu0 0.0
    %1071 = vmatprep.subr.mxu0 0.0
    %1072 = vmatpush2.msra.mxu0 0.0
    %1073 = vmatprep.subr.mxu0 0.0
    %1074 = vmatpush2.msra.mxu0 0.0
    %1075 = vmatprep.subr.mxu0 0.0
    %1076 = vmatpush2.msra.mxu0 0.0
    %1077 = vmatprep.mubr.f32.mxu0 0.0
    %1078 = vmatmul.mubr.f32.gmra.mxu0 %v1011
    %v1079 = vpop.f32.mrf.mxu0
    %v1080 = vadd.f32 0.0, %v1079
    %v1081 = vpop.f32.mrf.mxu0
    %1082 = vdwg.mxu0
    %v1083 = vadd.f32 %v1010, %v1080
    %v1084 = vtanh.pop %v1083
    %v1085 = vxor.u32 %v1083, 2147483648
    %v1086 = vmul.f32 %v1085, 1.442695
    %v1087 = vpow.pop %v1086
    %v1088 = vadd.f32 %v1087, 1.0
    %v1089 = vrcp.pop %v1088
    %v1090 = vmul.f32 1.0, %v1089
    %v1091 = vsel %vm107, %v1084, %v1090
    %v1092 = vmul.f32 %v1091, %v996
    %1094 = vrot.lane.b32.xlu0 %v1091, 64
    %v1095 = vpop.permute.xlu0 %1094
    %v1097 = vmul.f32 %v1091, %v1095
    %1099 = vrot.lane.b32.xlu0 %v1097, 32
    %v1100 = vpop.permute.xlu0 %1099
    %v1102 = vadd.f32 %v1092, %v1100
    %v1103 = vtanh.pop %v1102
    %1105 = vrot.lane.b32.xlu0 %v1103, 64
    %v1106 = vpop.permute.xlu0 %1105
    %v1108 = vmul.f32 %v1091, %v1106
    %1110 = vrot.lane.b32.xlu0 %v1108, 32
    %v1111 = vpop.permute.xlu0 %1110
    %s1113 = scalar_lea.vmem [#allocation3], 56
    %1114 = vst.msk [vmem:[%s1113] sm:$0xff] %vm268, %v1111
    %v1115 = vld [vmem:[#allocation3] sm:$0xff]
    %v1116 = vld [vmem:[#allocation3 + $0x8] sm:$0xff]
    %v1117 = vld [vmem:[#allocation3 + $0x10] sm:$0xff]
    %v1118 = vld [vmem:[#allocation3 + $0x18] sm:$0xff]
    %v1119 = vld [vmem:[#allocation3 + $0x20] sm:$0xff]
    %v1120 = vld [vmem:[#allocation3 + $0x28] sm:$0xff]
    %v1121 = vld [vmem:[#allocation3 + $0x30] sm:$0xff]
    %v1122 = vld [vmem:[#allocation3 + $0x38] sm:$0xff]
    %v1123 = vld [vmem:[#allocation11] sm:$0xff]
    %v1124 = vld [vmem:[#allocation11 + $0x8] sm:$0xff]
    %v1125 = vld [vmem:[#allocation11 + $0x10] sm:$0xff]
    %v1126 = vld [vmem:[#allocation11 + $0x18] sm:$0xff]
    %v1127 = vld [vmem:[%s6] sm:$0x1]
    %v1129 = vlaneseq
    %v1130 = vshrl.u32 %v1129, 7
    %v1131 = vsub.s32 0, %v1130
    %v1132 = vrot.slane %v1127, %v1131
    %v1135 = vsel %vm268, %v1115, 0
    %v1138 = vsel %vm268, %v1116, 0
    %v1141 = vsel %vm268, %v1117, 0
    %v1144 = vsel %vm268, %v1118, 0
    %v1147 = vsel %vm268, %v1119, 0
    %v1150 = vsel %vm268, %v1120, 0
    %v1153 = vsel %vm268, %v1121, 0
    %v1156 = vsel %vm268, %v1122, 0
    %1158 = vmatprep.subr.mxu0 0.0
    %1159 = vmatpush1.msra.mxu0 0.0
    %1160 = vmatprep.subr.mxu0 0.0
    %1161 = vmatpush1.msra.mxu0 0.0
    %1162 = vmatprep.subr.mxu0 0.0
    %1163 = vmatpush1.msra.mxu0 0.0
    %1164 = vmatprep.subr.mxu0 0.0
    %1165 = vmatpush1.msra.mxu0 0.0
    %1166 = vmatprep.subr.mxu0 0.0
    %1167 = vmatpush1.msra.mxu0 0.0
    %1168 = vmatprep.subr.mxu0 0.0
    %1169 = vmatpush1.msra.mxu0 0.0
    %1170 = vmatprep.subr.mxu0 0.0
    %1171 = vmatpush1.msra.mxu0 0.0
    %1172 = vmatprep.subr.mxu0 0.0
    %1173 = vmatpush1.msra.mxu0 0.0
    %1174 = vmatprep.subr.mxu0 0.0
    %1175 = vmatpush1.msra.mxu0 0.0
    %1176 = vmatprep.subr.mxu0 0.0
    %1177 = vmatpush1.msra.mxu0 0.0
    %1178 = vmatprep.subr.mxu0 0.0
    %1179 = vmatpush1.msra.mxu0 0.0
    %1180 = vmatprep.subr.mxu0 0.0
    %1181 = vmatpush1.msra.mxu0 0.0
    %1182 = vmatprep.subr.mxu0 0.0
    %1183 = vmatpush1.msra.mxu0 %v1126
    %1184 = vmatprep.subr.mxu0 0.0
    %1185 = vmatpush1.msra.mxu0 %v1125
    %1186 = vmatprep.subr.mxu0 0.0
    %1187 = vmatpush1.msra.mxu0 %v1124
    %1188 = vmatprep.subr.mxu0 0.0
    %1189 = vmatpush1.msra.mxu0 %v1123
    %1190 = vmatprep.subr.mxu0 0.0
    %1191 = vmatpush2.msra.mxu0 0.0
    %1192 = vmatprep.subr.mxu0 0.0
    %1193 = vmatpush2.msra.mxu0 0.0
    %1194 = vmatprep.subr.mxu0 0.0
    %1195 = vmatpush2.msra.mxu0 0.0
    %1196 = vmatprep.subr.mxu0 0.0
    %1197 = vmatpush2.msra.mxu0 0.0
    %1198 = vmatprep.subr.mxu0 0.0
    %1199 = vmatpush2.msra.mxu0 0.0
    %1200 = vmatprep.subr.mxu0 0.0
    %1201 = vmatpush2.msra.mxu0 0.0
    %1202 = vmatprep.subr.mxu0 0.0
    %1203 = vmatpush2.msra.mxu0 0.0
    %1204 = vmatprep.subr.mxu0 0.0
    %1205 = vmatpush2.msra.mxu0 0.0
    %1206 = vmatprep.subr.mxu0 0.0
    %1207 = vmatpush2.msra.mxu0 0.0
    %1208 = vmatprep.subr.mxu0 0.0
    %1209 = vmatpush2.msra.mxu0 0.0
    %1210 = vmatprep.subr.mxu0 0.0
    %1211 = vmatpush2.msra.mxu0 0.0
    %1212 = vmatprep.subr.mxu0 0.0
    %1213 = vmatpush2.msra.mxu0 0.0
    %1214 = vmatprep.subr.mxu0 0.0
    %1215 = vmatpush2.msra.mxu0 0.0
    %1216 = vmatprep.subr.mxu0 0.0
    %1217 = vmatpush2.msra.mxu0 0.0
    %1218 = vmatprep.subr.mxu0 0.0
    %1219 = vmatpush2.msra.mxu0 0.0
    %1220 = vmatprep.subr.mxu0 0.0
    %1221 = vmatpush2.msra.mxu0 0.0
    %1222 = vmatprep.mubr.f32.mxu0 0.0
    %1223 = vmatmul.mubr.f32.gmra.mxu0 %v1135
    %v1224 = vpop.f32.mrf.mxu0
    %v1225 = vadd.f32 %v1132, %v1224
    %v1226 = vpop.f32.mrf.mxu0
    %1227 = vmatprep.mubr.f32.mxu0 0.0
    %1228 = vmatmul.mubr.f32.gmra.mxu0 %v1138
    %v1229 = vpop.f32.mrf.mxu0
    %v1230 = vadd.f32 %v1132, %v1229
    %v1231 = vpop.f32.mrf.mxu0
    %1232 = vmatprep.mubr.f32.mxu0 0.0
    %1233 = vmatmul.mubr.f32.gmra.mxu0 %v1141
    %v1234 = vpop.f32.mrf.mxu0
    %v1235 = vadd.f32 %v1132, %v1234
    %v1236 = vpop.f32.mrf.mxu0
    %1237 = vmatprep.mubr.f32.mxu0 0.0
    %1238 = vmatmul.mubr.f32.gmra.mxu0 %v1144
    %v1239 = vpop.f32.mrf.mxu0
    %v1240 = vadd.f32 %v1132, %v1239
    %v1241 = vpop.f32.mrf.mxu0
    %1242 = vmatprep.mubr.f32.mxu0 0.0
    %1243 = vmatmul.mubr.f32.gmra.mxu0 %v1147
    %v1244 = vpop.f32.mrf.mxu0
    %v1245 = vadd.f32 %v1132, %v1244
    %v1246 = vpop.f32.mrf.mxu0
    %1247 = vmatprep.mubr.f32.mxu0 0.0
    %1248 = vmatmul.mubr.f32.gmra.mxu0 %v1150
    %v1249 = vpop.f32.mrf.mxu0
    %v1250 = vadd.f32 %v1132, %v1249
    %v1251 = vpop.f32.mrf.mxu0
    %1252 = vmatprep.mubr.f32.mxu0 0.0
    %1253 = vmatmul.mubr.f32.gmra.mxu0 %v1153
    %v1254 = vpop.f32.mrf.mxu0
    %v1255 = vadd.f32 %v1132, %v1254
    %v1256 = vpop.f32.mrf.mxu0
    %1257 = vmatprep.mubr.f32.mxu0 0.0
    %1258 = vmatmul.mubr.f32.gmra.mxu0 %v1156
    %v1259 = vpop.f32.mrf.mxu0
    %v1260 = vadd.f32 %v1132, %v1259
    %v1261 = vpop.f32.mrf.mxu0
    %1262 = vdwg.mxu0
    %1263 = vst [vmem:[#allocation2] sm:$0xff] %v1225
    %1264 = vst [vmem:[#allocation2 + $0x8] sm:$0xff] %v1230
    %1265 = vst [vmem:[#allocation2 + $0x10] sm:$0xff] %v1235
    %1266 = vst [vmem:[#allocation2 + $0x18] sm:$0xff] %v1240
    %1267 = vst [vmem:[#allocation2 + $0x20] sm:$0xff] %v1245
    %1268 = vst [vmem:[#allocation2 + $0x28] sm:$0xff] %v1250
    %1269 = vst [vmem:[#allocation2 + $0x30] sm:$0xff] %v1255
    %1270 = vst [vmem:[#allocation2 + $0x38] sm:$0xff] %v1260
    %v1271 = vld [vmem:[#allocation13] sm:$0xff]
    %v1272 = vld [vmem:[#allocation13 + $0x8] sm:$0xff]
    %v1273 = vld [vmem:[#allocation13 + $0x10] sm:$0xff]
    %v1274 = vld [vmem:[#allocation13 + $0x18] sm:$0xff]
    %v1275 = vld [vmem:[#allocation2] sm:$0xff]
    %1276 = vmatprep.subr.mxu0 0.0
    %1277 = vmatpush1.msra.mxu0 0.0
    %1278 = vmatprep.subr.mxu0 0.0
    %1279 = vmatpush1.msra.mxu0 0.0
    %1280 = vmatprep.subr.mxu0 0.0
    %1281 = vmatpush1.msra.mxu0 0.0
    %1282 = vmatprep.subr.mxu0 0.0
    %1283 = vmatpush1.msra.mxu0 0.0
    %1284 = vmatprep.subr.mxu0 0.0
    %1285 = vmatpush1.msra.mxu0 0.0
    %1286 = vmatprep.subr.mxu0 0.0
    %1287 = vmatpush1.msra.mxu0 0.0
    %1288 = vmatprep.subr.mxu0 0.0
    %1289 = vmatpush1.msra.mxu0 0.0
    %1290 = vmatprep.subr.mxu0 0.0
    %1291 = vmatpush1.msra.mxu0 0.0
    %1292 = vmatprep.subr.mxu0 0.0
    %1293 = vmatpush1.msra.mxu0 0.0
    %1294 = vmatprep.subr.mxu0 0.0
    %1295 = vmatpush1.msra.mxu0 0.0
    %1296 = vmatprep.subr.mxu0 0.0
    %1297 = vmatpush1.msra.mxu0 0.0
    %1298 = vmatprep.subr.mxu0 0.0
    %1299 = vmatpush1.msra.mxu0 0.0
    %1300 = vmatprep.subr.mxu0 0.0
    %1301 = vmatpush1.msra.mxu0 %v1274
    %1302 = vmatprep.subr.mxu0 0.0
    %1303 = vmatpush1.msra.mxu0 %v1273
    %1304 = vmatprep.subr.mxu0 0.0
    %1305 = vmatpush1.msra.mxu0 %v1272
    %1306 = vmatprep.subr.mxu0 0.0
    %1307 = vmatpush1.msra.mxu0 %v1271
    %1308 = vmatprep.subr.mxu0 0.0
    %1309 = vmatpush2.msra.mxu0 0.0
    %1310 = vmatprep.subr.mxu0 0.0
    %1311 = vmatpush2.msra.mxu0 0.0
    %1312 = vmatprep.subr.mxu0 0.0
    %1313 = vmatpush2.msra.mxu0 0.0
    %1314 = vmatprep.subr.mxu0 0.0
    %1315 = vmatpush2.msra.mxu0 0.0
    %1316 = vmatprep.subr.mxu0 0.0
    %1317 = vmatpush2.msra.mxu0 0.0
    %1318 = vmatprep.subr.mxu0 0.0
    %1319 = vmatpush2.msra.mxu0 0.0
    %1320 = vmatprep.subr.mxu0 0.0
    %1321 = vmatpush2.msra.mxu0 0.0
    %1322 = vmatprep.subr.mxu0 0.0
    %1323 = vmatpush2.msra.mxu0 0.0
    %1324 = vmatprep.subr.mxu0 0.0
    %1325 = vmatpush2.msra.mxu0 0.0
    %1326 = vmatprep.subr.mxu0 0.0
    %1327 = vmatpush2.msra.mxu0 0.0
    %1328 = vmatprep.subr.mxu0 0.0
    %1329 = vmatpush2.msra.mxu0 0.0
    %1330 = vmatprep.subr.mxu0 0.0
    %1331 = vmatpush2.msra.mxu0 0.0
    %1332 = vmatprep.subr.mxu0 0.0
    %1333 = vmatpush2.msra.mxu0 0.0
    %1334 = vmatprep.subr.mxu0 0.0
    %1335 = vmatpush2.msra.mxu0 0.0
    %1336 = vmatprep.subr.mxu0 0.0
    %1337 = vmatpush2.msra.mxu0 0.0
    %1338 = vmatprep.subr.mxu0 0.0
    %1339 = vmatpush2.msra.mxu0 0.0
    %1340 = vmatprep.mubr.f32.mxu0 0.0
    %1341 = vmatmul.mubr.f32.gmra.mxu0 %v270
    %v1342 = vpop.f32.mrf.mxu0
    %v1343 = vadd.f32 0.0, %v1342
    %v1344 = vpop.f32.mrf.mxu0
    %1345 = vdwg.mxu0
    %v1346 = vadd.f32 %v1275, %v1343
    %v1347 = vtanh.pop %v1346
    %v1348 = vxor.u32 %v1346, 2147483648
    %v1349 = vmul.f32 %v1348, 1.442695
    %v1350 = vpow.pop %v1349
    %v1351 = vadd.f32 %v1350, 1.0
    %v1352 = vrcp.pop %v1351
    %v1353 = vmul.f32 1.0, %v1352
    %v1354 = vsel %vm107, %v1347, %v1353
    %v1355 = vmul.f32 %v1354, 0.0
    %1357 = vrot.lane.b32.xlu0 %v1354, 64
    %v1358 = vpop.permute.xlu0 %1357
    %v1360 = vmul.f32 %v1354, %v1358
    %1362 = vrot.lane.b32.xlu0 %v1360, 32
    %v1363 = vpop.permute.xlu0 %1362
    %v1365 = vadd.f32 %v1355, %v1363
    %v1366 = vtanh.pop %v1365
    %1368 = vrot.lane.b32.xlu0 %v1366, 64
    %v1369 = vpop.permute.xlu0 %1368
    %v1371 = vmul.f32 %v1354, %v1369
    %1373 = vrot.lane.b32.xlu0 %v1371, 32
    %v1374 = vpop.permute.xlu0 %1373
    %1376 = vst.msk [vmem:[#allocation3] sm:$0xff] %vm268, %v1374
    %v1377 = vld [vmem:[%s373] sm:$0xff]
    %v1378 = vsel %vm268, %v1374, 0
    %1380 = vmatprep.subr.mxu0 0.0
    %1381 = vmatpush1.msra.mxu0 0.0
    %1382 = vmatprep.subr.mxu0 0.0
    %1383 = vmatpush1.msra.mxu0 0.0
    %1384 = vmatprep.subr.mxu0 0.0
    %1385 = vmatpush1.msra.mxu0 0.0
    %1386 = vmatprep.subr.mxu0 0.0
    %1387 = vmatpush1.msra.mxu0 0.0
    %1388 = vmatprep.subr.mxu0 0.0
    %1389 = vmatpush1.msra.mxu0 0.0
    %1390 = vmatprep.subr.mxu0 0.0
    %1391 = vmatpush1.msra.mxu0 0.0
    %1392 = vmatprep.subr.mxu0 0.0
    %1393 = vmatpush1.msra.mxu0 0.0
    %1394 = vmatprep.subr.mxu0 0.0
    %1395 = vmatpush1.msra.mxu0 0.0
    %1396 = vmatprep.subr.mxu0 0.0
    %1397 = vmatpush1.msra.mxu0 0.0
    %1398 = vmatprep.subr.mxu0 0.0
    %1399 = vmatpush1.msra.mxu0 0.0
    %1400 = vmatprep.subr.mxu0 0.0
    %1401 = vmatpush1.msra.mxu0 0.0
    %1402 = vmatprep.subr.mxu0 0.0
    %1403 = vmatpush1.msra.mxu0 0.0
    %1404 = vmatprep.subr.mxu0 0.0
    %1405 = vmatpush1.msra.mxu0 %v1274
    %1406 = vmatprep.subr.mxu0 0.0
    %1407 = vmatpush1.msra.mxu0 %v1273
    %1408 = vmatprep.subr.mxu0 0.0
    %1409 = vmatpush1.msra.mxu0 %v1272
    %1410 = vmatprep.subr.mxu0 0.0
    %1411 = vmatpush1.msra.mxu0 %v1271
    %1412 = vmatprep.subr.mxu0 0.0
    %1413 = vmatpush2.msra.mxu0 0.0
    %1414 = vmatprep.subr.mxu0 0.0
    %1415 = vmatpush2.msra.mxu0 0.0
    %1416 = vmatprep.subr.mxu0 0.0
    %1417 = vmatpush2.msra.mxu0 0.0
    %1418 = vmatprep.subr.mxu0 0.0
    %1419 = vmatpush2.msra.mxu0 0.0
    %1420 = vmatprep.subr.mxu0 0.0
    %1421 = vmatpush2.msra.mxu0 0.0
    %1422 = vmatprep.subr.mxu0 0.0
    %1423 = vmatpush2.msra.mxu0 0.0
    %1424 = vmatprep.subr.mxu0 0.0
    %1425 = vmatpush2.msra.mxu0 0.0
    %1426 = vmatprep.subr.mxu0 0.0
    %1427 = vmatpush2.msra.mxu0 0.0
    %1428 = vmatprep.subr.mxu0 0.0
    %1429 = vmatpush2.msra.mxu0 0.0
    %1430 = vmatprep.subr.mxu0 0.0
    %1431 = vmatpush2.msra.mxu0 0.0
    %1432 = vmatprep.subr.mxu0 0.0
    %1433 = vmatpush2.msra.mxu0 0.0
    %1434 = vmatprep.subr.mxu0 0.0
    %1435 = vmatpush2.msra.mxu0 0.0
    %1436 = vmatprep.subr.mxu0 0.0
    %1437 = vmatpush2.msra.mxu0 0.0
    %1438 = vmatprep.subr.mxu0 0.0
    %1439 = vmatpush2.msra.mxu0 0.0
    %1440 = vmatprep.subr.mxu0 0.0
    %1441 = vmatpush2.msra.mxu0 0.0
    %1442 = vmatprep.subr.mxu0 0.0
    %1443 = vmatpush2.msra.mxu0 0.0
    %1444 = vmatprep.mubr.f32.mxu0 0.0
    %1445 = vmatmul.mubr.f32.gmra.mxu0 %v1378
    %v1446 = vpop.f32.mrf.mxu0
    %v1447 = vadd.f32 0.0, %v1446
    %v1448 = vpop.f32.mrf.mxu0
    %1449 = vdwg.mxu0
    %v1450 = vadd.f32 %v1377, %v1447
    %v1451 = vtanh.pop %v1450
    %v1452 = vxor.u32 %v1450, 2147483648
    %v1453 = vmul.f32 %v1452, 1.442695
    %v1454 = vpow.pop %v1453
    %v1455 = vadd.f32 %v1454, 1.0
    %v1456 = vrcp.pop %v1455
    %v1457 = vmul.f32 1.0, %v1456
    %v1458 = vsel %vm107, %v1451, %v1457
    %v1459 = vmul.f32 %v1458, %v1365
    %1461 = vrot.lane.b32.xlu0 %v1458, 64
    %v1462 = vpop.permute.xlu0 %1461
    %v1464 = vmul.f32 %v1458, %v1462
    %1466 = vrot.lane.b32.xlu0 %v1464, 32
    %v1467 = vpop.permute.xlu0 %1466
    %v1469 = vadd.f32 %v1459, %v1467
    %v1470 = vtanh.pop %v1469
    %1472 = vrot.lane.b32.xlu0 %v1470, 64
    %v1473 = vpop.permute.xlu0 %1472
    %v1475 = vmul.f32 %v1458, %v1473
    %1477 = vrot.lane.b32.xlu0 %v1475, 32
    %v1478 = vpop.permute.xlu0 %1477
    %1480 = vst.msk [vmem:[%s477] sm:$0xff] %vm268, %v1478
    %v1481 = vld [vmem:[%s479] sm:$0xff]
    %v1482 = vsel %vm268, %v1478, 0
    %1484 = vmatprep.subr.mxu0 0.0
    %1485 = vmatpush1.msra.mxu0 0.0
    %1486 = vmatprep.subr.mxu0 0.0
    %1487 = vmatpush1.msra.mxu0 0.0
    %1488 = vmatprep.subr.mxu0 0.0
    %1489 = vmatpush1.msra.mxu0 0.0
    %1490 = vmatprep.subr.mxu0 0.0
    %1491 = vmatpush1.msra.mxu0 0.0
    %1492 = vmatprep.subr.mxu0 0.0
    %1493 = vmatpush1.msra.mxu0 0.0
    %1494 = vmatprep.subr.mxu0 0.0
    %1495 = vmatpush1.msra.mxu0 0.0
    %1496 = vmatprep.subr.mxu0 0.0
    %1497 = vmatpush1.msra.mxu0 0.0
    %1498 = vmatprep.subr.mxu0 0.0
    %1499 = vmatpush1.msra.mxu0 0.0
    %1500 = vmatprep.subr.mxu0 0.0
    %1501 = vmatpush1.msra.mxu0 0.0
    %1502 = vmatprep.subr.mxu0 0.0
    %1503 = vmatpush1.msra.mxu0 0.0
    %1504 = vmatprep.subr.mxu0 0.0
    %1505 = vmatpush1.msra.mxu0 0.0
    %1506 = vmatprep.subr.mxu0 0.0
    %1507 = vmatpush1.msra.mxu0 0.0
    %1508 = vmatprep.subr.mxu0 0.0
    %1509 = vmatpush1.msra.mxu0 %v1274
    %1510 = vmatprep.subr.mxu0 0.0
    %1511 = vmatpush1.msra.mxu0 %v1273
    %1512 = vmatprep.subr.mxu0 0.0
    %1513 = vmatpush1.msra.mxu0 %v1272
    %1514 = vmatprep.subr.mxu0 0.0
    %1515 = vmatpush1.msra.mxu0 %v1271
    %1516 = vmatprep.subr.mxu0 0.0
    %1517 = vmatpush2.msra.mxu0 0.0
    %1518 = vmatprep.subr.mxu0 0.0
    %1519 = vmatpush2.msra.mxu0 0.0
    %1520 = vmatprep.subr.mxu0 0.0
    %1521 = vmatpush2.msra.mxu0 0.0
    %1522 = vmatprep.subr.mxu0 0.0
    %1523 = vmatpush2.msra.mxu0 0.0
    %1524 = vmatprep.subr.mxu0 0.0
    %1525 = vmatpush2.msra.mxu0 0.0
    %1526 = vmatprep.subr.mxu0 0.0
    %1527 = vmatpush2.msra.mxu0 0.0
    %1528 = vmatprep.subr.mxu0 0.0
    %1529 = vmatpush2.msra.mxu0 0.0
    %1530 = vmatprep.subr.mxu0 0.0
    %1531 = vmatpush2.msra.mxu0 0.0
    %1532 = vmatprep.subr.mxu0 0.0
    %1533 = vmatpush2.msra.mxu0 0.0
    %1534 = vmatprep.subr.mxu0 0.0
    %1535 = vmatpush2.msra.mxu0 0.0
    %1536 = vmatprep.subr.mxu0 0.0
    %1537 = vmatpush2.msra.mxu0 0.0
    %1538 = vmatprep.subr.mxu0 0.0
    %1539 = vmatpush2.msra.mxu0 0.0
    %1540 = vmatprep.subr.mxu0 0.0
    %1541 = vmatpush2.msra.mxu0 0.0
    %1542 = vmatprep.subr.mxu0 0.0
    %1543 = vmatpush2.msra.mxu0 0.0
    %1544 = vmatprep.subr.mxu0 0.0
    %1545 = vmatpush2.msra.mxu0 0.0
    %1546 = vmatprep.subr.mxu0 0.0
    %1547 = vmatpush2.msra.mxu0 0.0
    %1548 = vmatprep.mubr.f32.mxu0 0.0
    %1549 = vmatmul.mubr.f32.gmra.mxu0 %v1482
    %v1550 = vpop.f32.mrf.mxu0
    %v1551 = vadd.f32 0.0, %v1550
    %v1552 = vpop.f32.mrf.mxu0
    %1553 = vdwg.mxu0
    %v1554 = vadd.f32 %v1481, %v1551
    %v1555 = vtanh.pop %v1554
    %v1556 = vxor.u32 %v1554, 2147483648
    %v1557 = vmul.f32 %v1556, 1.442695
    %v1558 = vpow.pop %v1557
    %v1559 = vadd.f32 %v1558, 1.0
    %v1560 = vrcp.pop %v1559
    %v1561 = vmul.f32 1.0, %v1560
    %v1562 = vsel %vm107, %v1555, %v1561
    %v1563 = vmul.f32 %v1562, %v1469
    %1565 = vrot.lane.b32.xlu0 %v1562, 64
    %v1566 = vpop.permute.xlu0 %1565
    %v1568 = vmul.f32 %v1562, %v1566
    %1570 = vrot.lane.b32.xlu0 %v1568, 32
    %v1571 = vpop.permute.xlu0 %1570
    %v1573 = vadd.f32 %v1563, %v1571
    %v1574 = vtanh.pop %v1573
    %1576 = vrot.lane.b32.xlu0 %v1574, 64
    %v1577 = vpop.permute.xlu0 %1576
    %v1579 = vmul.f32 %v1562, %v1577
    %1581 = vrot.lane.b32.xlu0 %v1579, 32
    %v1582 = vpop.permute.xlu0 %1581
    %1584 = vst.msk [vmem:[%s583] sm:$0xff] %vm268, %v1582
    %v1585 = vld [vmem:[%s585] sm:$0xff]
    %v1586 = vsel %vm268, %v1582, 0
    %1588 = vmatprep.subr.mxu0 0.0
    %1589 = vmatpush1.msra.mxu0 0.0
    %1590 = vmatprep.subr.mxu0 0.0
    %1591 = vmatpush1.msra.mxu0 0.0
    %1592 = vmatprep.subr.mxu0 0.0
    %1593 = vmatpush1.msra.mxu0 0.0
    %1594 = vmatprep.subr.mxu0 0.0
    %1595 = vmatpush1.msra.mxu0 0.0
    %1596 = vmatprep.subr.mxu0 0.0
    %1597 = vmatpush1.msra.mxu0 0.0
    %1598 = vmatprep.subr.mxu0 0.0
    %1599 = vmatpush1.msra.mxu0 0.0
    %1600 = vmatprep.subr.mxu0 0.0
    %1601 = vmatpush1.msra.mxu0 0.0
    %1602 = vmatprep.subr.mxu0 0.0
    %1603 = vmatpush1.msra.mxu0 0.0
    %1604 = vmatprep.subr.mxu0 0.0
    %1605 = vmatpush1.msra.mxu0 0.0
    %1606 = vmatprep.subr.mxu0 0.0
    %1607 = vmatpush1.msra.mxu0 0.0
    %1608 = vmatprep.subr.mxu0 0.0
    %1609 = vmatpush1.msra.mxu0 0.0
    %1610 = vmatprep.subr.mxu0 0.0
    %1611 = vmatpush1.msra.mxu0 0.0
    %1612 = vmatprep.subr.mxu0 0.0
    %1613 = vmatpush1.msra.mxu0 %v1274
    %1614 = vmatprep.subr.mxu0 0.0
    %1615 = vmatpush1.msra.mxu0 %v1273
    %1616 = vmatprep.subr.mxu0 0.0
    %1617 = vmatpush1.msra.mxu0 %v1272
    %1618 = vmatprep.subr.mxu0 0.0
    %1619 = vmatpush1.msra.mxu0 %v1271
    %1620 = vmatprep.subr.mxu0 0.0
    %1621 = vmatpush2.msra.mxu0 0.0
    %1622 = vmatprep.subr.mxu0 0.0
    %1623 = vmatpush2.msra.mxu0 0.0
    %1624 = vmatprep.subr.mxu0 0.0
    %1625 = vmatpush2.msra.mxu0 0.0
    %1626 = vmatprep.subr.mxu0 0.0
    %1627 = vmatpush2.msra.mxu0 0.0
    %1628 = vmatprep.subr.mxu0 0.0
    %1629 = vmatpush2.msra.mxu0 0.0
    %1630 = vmatprep.subr.mxu0 0.0
    %1631 = vmatpush2.msra.mxu0 0.0
    %1632 = vmatprep.subr.mxu0 0.0
    %1633 = vmatpush2.msra.mxu0 0.0
    %1634 = vmatprep.subr.mxu0 0.0
    %1635 = vmatpush2.msra.mxu0 0.0
    %1636 = vmatprep.subr.mxu0 0.0
    %1637 = vmatpush2.msra.mxu0 0.0
    %1638 = vmatprep.subr.mxu0 0.0
    %1639 = vmatpush2.msra.mxu0 0.0
    %1640 = vmatprep.subr.mxu0 0.0
    %1641 = vmatpush2.msra.mxu0 0.0
    %1642 = vmatprep.subr.mxu0 0.0
    %1643 = vmatpush2.msra.mxu0 0.0
    %1644 = vmatprep.subr.mxu0 0.0
    %1645 = vmatpush2.msra.mxu0 0.0
    %1646 = vmatprep.subr.mxu0 0.0
    %1647 = vmatpush2.msra.mxu0 0.0
    %1648 = vmatprep.subr.mxu0 0.0
    %1649 = vmatpush2.msra.mxu0 0.0
    %1650 = vmatprep.subr.mxu0 0.0
    %1651 = vmatpush2.msra.mxu0 0.0
    %1652 = vmatprep.mubr.f32.mxu0 0.0
    %1653 = vmatmul.mubr.f32.gmra.mxu0 %v1586
    %v1654 = vpop.f32.mrf.mxu0
    %v1655 = vadd.f32 0.0, %v1654
    %v1656 = vpop.f32.mrf.mxu0
    %1657 = vdwg.mxu0
    %v1658 = vadd.f32 %v1585, %v1655
    %v1659 = vtanh.pop %v1658
    %v1660 = vxor.u32 %v1658, 2147483648
    %v1661 = vmul.f32 %v1660, 1.442695
    %v1662 = vpow.pop %v1661
    %v1663 = vadd.f32 %v1662, 1.0
    %v1664 = vrcp.pop %v1663
    %v1665 = vmul.f32 1.0, %v1664
    %v1666 = vsel %vm107, %v1659, %v1665
    %v1667 = vmul.f32 %v1666, %v1573
    %1669 = vrot.lane.b32.xlu0 %v1666, 64
    %v1670 = vpop.permute.xlu0 %1669
    %v1672 = vmul.f32 %v1666, %v1670
    %1674 = vrot.lane.b32.xlu0 %v1672, 32
    %v1675 = vpop.permute.xlu0 %1674
    %v1677 = vadd.f32 %v1667, %v1675
    %v1678 = vtanh.pop %v1677
    %1680 = vrot.lane.b32.xlu0 %v1678, 64
    %v1681 = vpop.permute.xlu0 %1680
    %v1683 = vmul.f32 %v1666, %v1681
    %1685 = vrot.lane.b32.xlu0 %v1683, 32
    %v1686 = vpop.permute.xlu0 %1685
    %1688 = vst.msk [vmem:[%s689] sm:$0xff] %vm268, %v1686
    %v1689 = vld [vmem:[%s691] sm:$0xff]
    %v1690 = vsel %vm268, %v1686, 0
    %1692 = vmatprep.subr.mxu0 0.0
    %1693 = vmatpush1.msra.mxu0 0.0
    %1694 = vmatprep.subr.mxu0 0.0
    %1695 = vmatpush1.msra.mxu0 0.0
    %1696 = vmatprep.subr.mxu0 0.0
    %1697 = vmatpush1.msra.mxu0 0.0
    %1698 = vmatprep.subr.mxu0 0.0
    %1699 = vmatpush1.msra.mxu0 0.0
    %1700 = vmatprep.subr.mxu0 0.0
    %1701 = vmatpush1.msra.mxu0 0.0
    %1702 = vmatprep.subr.mxu0 0.0
    %1703 = vmatpush1.msra.mxu0 0.0
    %1704 = vmatprep.subr.mxu0 0.0
    %1705 = vmatpush1.msra.mxu0 0.0
    %1706 = vmatprep.subr.mxu0 0.0
    %1707 = vmatpush1.msra.mxu0 0.0
    %1708 = vmatprep.subr.mxu0 0.0
    %1709 = vmatpush1.msra.mxu0 0.0
    %1710 = vmatprep.subr.mxu0 0.0
    %1711 = vmatpush1.msra.mxu0 0.0
    %1712 = vmatprep.subr.mxu0 0.0
    %1713 = vmatpush1.msra.mxu0 0.0
    %1714 = vmatprep.subr.mxu0 0.0
    %1715 = vmatpush1.msra.mxu0 0.0
    %1716 = vmatprep.subr.mxu0 0.0
    %1717 = vmatpush1.msra.mxu0 %v1274
    %1718 = vmatprep.subr.mxu0 0.0
    %1719 = vmatpush1.msra.mxu0 %v1273
    %1720 = vmatprep.subr.mxu0 0.0
    %1721 = vmatpush1.msra.mxu0 %v1272
    %1722 = vmatprep.subr.mxu0 0.0
    %1723 = vmatpush1.msra.mxu0 %v1271
    %1724 = vmatprep.subr.mxu0 0.0
    %1725 = vmatpush2.msra.mxu0 0.0
    %1726 = vmatprep.subr.mxu0 0.0
    %1727 = vmatpush2.msra.mxu0 0.0
    %1728 = vmatprep.subr.mxu0 0.0
    %1729 = vmatpush2.msra.mxu0 0.0
    %1730 = vmatprep.subr.mxu0 0.0
    %1731 = vmatpush2.msra.mxu0 0.0
    %1732 = vmatprep.subr.mxu0 0.0
    %1733 = vmatpush2.msra.mxu0 0.0
    %1734 = vmatprep.subr.mxu0 0.0
    %1735 = vmatpush2.msra.mxu0 0.0
    %1736 = vmatprep.subr.mxu0 0.0
    %1737 = vmatpush2.msra.mxu0 0.0
    %1738 = vmatprep.subr.mxu0 0.0
    %1739 = vmatpush2.msra.mxu0 0.0
    %1740 = vmatprep.subr.mxu0 0.0
    %1741 = vmatpush2.msra.mxu0 0.0
    %1742 = vmatprep.subr.mxu0 0.0
    %1743 = vmatpush2.msra.mxu0 0.0
    %1744 = vmatprep.subr.mxu0 0.0
    %1745 = vmatpush2.msra.mxu0 0.0
    %1746 = vmatprep.subr.mxu0 0.0
    %1747 = vmatpush2.msra.mxu0 0.0
    %1748 = vmatprep.subr.mxu0 0.0
    %1749 = vmatpush2.msra.mxu0 0.0
    %1750 = vmatprep.subr.mxu0 0.0
    %1751 = vmatpush2.msra.mxu0 0.0
    %1752 = vmatprep.subr.mxu0 0.0
    %1753 = vmatpush2.msra.mxu0 0.0
    %1754 = vmatprep.subr.mxu0 0.0
    %1755 = vmatpush2.msra.mxu0 0.0
    %1756 = vmatprep.mubr.f32.mxu0 0.0
    %1757 = vmatmul.mubr.f32.gmra.mxu0 %v1690
    %v1758 = vpop.f32.mrf.mxu0
    %v1759 = vadd.f32 0.0, %v1758
    %v1760 = vpop.f32.mrf.mxu0
    %1761 = vdwg.mxu0
    %v1762 = vadd.f32 %v1689, %v1759
    %v1763 = vtanh.pop %v1762
    %v1764 = vxor.u32 %v1762, 2147483648
    %v1765 = vmul.f32 %v1764, 1.442695
    %v1766 = vpow.pop %v1765
    %v1767 = vadd.f32 %v1766, 1.0
    %v1768 = vrcp.pop %v1767
    %v1769 = vmul.f32 1.0, %v1768
    %v1770 = vsel %vm107, %v1763, %v1769
    %v1771 = vmul.f32 %v1770, %v1677
    %1773 = vrot.lane.b32.xlu0 %v1770, 64
    %v1774 = vpop.permute.xlu0 %1773
    %v1776 = vmul.f32 %v1770, %v1774
    %1778 = vrot.lane.b32.xlu0 %v1776, 32
    %v1779 = vpop.permute.xlu0 %1778
    %v1781 = vadd.f32 %v1771, %v1779
    %v1782 = vtanh.pop %v1781
    %1784 = vrot.lane.b32.xlu0 %v1782, 64
    %v1785 = vpop.permute.xlu0 %1784
    %v1787 = vmul.f32 %v1770, %v1785
    %1789 = vrot.lane.b32.xlu0 %v1787, 32
    %v1790 = vpop.permute.xlu0 %1789
    %1792 = vst.msk [vmem:[%s795] sm:$0xff] %vm268, %v1790
    %v1793 = vld [vmem:[%s797] sm:$0xff]
    %v1794 = vsel %vm268, %v1790, 0
    %1796 = vmatprep.subr.mxu0 0.0
    %1797 = vmatpush1.msra.mxu0 0.0
    %1798 = vmatprep.subr.mxu0 0.0
    %1799 = vmatpush1.msra.mxu0 0.0
    %1800 = vmatprep.subr.mxu0 0.0
    %1801 = vmatpush1.msra.mxu0 0.0
    %1802 = vmatprep.subr.mxu0 0.0
    %1803 = vmatpush1.msra.mxu0 0.0
    %1804 = vmatprep.subr.mxu0 0.0
    %1805 = vmatpush1.msra.mxu0 0.0
    %1806 = vmatprep.subr.mxu0 0.0
    %1807 = vmatpush1.msra.mxu0 0.0
    %1808 = vmatprep.subr.mxu0 0.0
    %1809 = vmatpush1.msra.mxu0 0.0
    %1810 = vmatprep.subr.mxu0 0.0
    %1811 = vmatpush1.msra.mxu0 0.0
    %1812 = vmatprep.subr.mxu0 0.0
    %1813 = vmatpush1.msra.mxu0 0.0
    %1814 = vmatprep.subr.mxu0 0.0
    %1815 = vmatpush1.msra.mxu0 0.0
    %1816 = vmatprep.subr.mxu0 0.0
    %1817 = vmatpush1.msra.mxu0 0.0
    %1818 = vmatprep.subr.mxu0 0.0
    %1819 = vmatpush1.msra.mxu0 0.0
    %1820 = vmatprep.subr.mxu0 0.0
    %1821 = vmatpush1.msra.mxu0 %v1274
    %1822 = vmatprep.subr.mxu0 0.0
    %1823 = vmatpush1.msra.mxu0 %v1273
    %1824 = vmatprep.subr.mxu0 0.0
    %1825 = vmatpush1.msra.mxu0 %v1272
    %1826 = vmatprep.subr.mxu0 0.0
    %1827 = vmatpush1.msra.mxu0 %v1271
    %1828 = vmatprep.subr.mxu0 0.0
    %1829 = vmatpush2.msra.mxu0 0.0
    %1830 = vmatprep.subr.mxu0 0.0
    %1831 = vmatpush2.msra.mxu0 0.0
    %1832 = vmatprep.subr.mxu0 0.0
    %1833 = vmatpush2.msra.mxu0 0.0
    %1834 = vmatprep.subr.mxu0 0.0
    %1835 = vmatpush2.msra.mxu0 0.0
    %1836 = vmatprep.subr.mxu0 0.0
    %1837 = vmatpush2.msra.mxu0 0.0
    %1838 = vmatprep.subr.mxu0 0.0
    %1839 = vmatpush2.msra.mxu0 0.0
    %1840 = vmatprep.subr.mxu0 0.0
    %1841 = vmatpush2.msra.mxu0 0.0
    %1842 = vmatprep.subr.mxu0 0.0
    %1843 = vmatpush2.msra.mxu0 0.0
    %1844 = vmatprep.subr.mxu0 0.0
    %1845 = vmatpush2.msra.mxu0 0.0
    %1846 = vmatprep.subr.mxu0 0.0
    %1847 = vmatpush2.msra.mxu0 0.0
    %1848 = vmatprep.subr.mxu0 0.0
    %1849 = vmatpush2.msra.mxu0 0.0
    %1850 = vmatprep.subr.mxu0 0.0
    %1851 = vmatpush2.msra.mxu0 0.0
    %1852 = vmatprep.subr.mxu0 0.0
    %1853 = vmatpush2.msra.mxu0 0.0
    %1854 = vmatprep.subr.mxu0 0.0
    %1855 = vmatpush2.msra.mxu0 0.0
    %1856 = vmatprep.subr.mxu0 0.0
    %1857 = vmatpush2.msra.mxu0 0.0
    %1858 = vmatprep.subr.mxu0 0.0
    %1859 = vmatpush2.msra.mxu0 0.0
    %1860 = vmatprep.mubr.f32.mxu0 0.0
    %1861 = vmatmul.mubr.f32.gmra.mxu0 %v1794
    %v1862 = vpop.f32.mrf.mxu0
    %v1863 = vadd.f32 0.0, %v1862
    %v1864 = vpop.f32.mrf.mxu0
    %1865 = vdwg.mxu0
    %v1866 = vadd.f32 %v1793, %v1863
    %v1867 = vtanh.pop %v1866
    %v1868 = vxor.u32 %v1866, 2147483648
    %v1869 = vmul.f32 %v1868, 1.442695
    %v1870 = vpow.pop %v1869
    %v1871 = vadd.f32 %v1870, 1.0
    %v1872 = vrcp.pop %v1871
    %v1873 = vmul.f32 1.0, %v1872
    %v1874 = vsel %vm107, %v1867, %v1873
    %v1875 = vmul.f32 %v1874, %v1781
    %1877 = vrot.lane.b32.xlu0 %v1874, 64
    %v1878 = vpop.permute.xlu0 %1877
    %v1880 = vmul.f32 %v1874, %v1878
    %1882 = vrot.lane.b32.xlu0 %v1880, 32
    %v1883 = vpop.permute.xlu0 %1882
    %v1885 = vadd.f32 %v1875, %v1883
    %v1886 = vtanh.pop %v1885
    %1888 = vrot.lane.b32.xlu0 %v1886, 64
    %v1889 = vpop.permute.xlu0 %1888
    %v1891 = vmul.f32 %v1874, %v1889
    %1893 = vrot.lane.b32.xlu0 %v1891, 32
    %v1894 = vpop.permute.xlu0 %1893
    %1896 = vst.msk [vmem:[%s901] sm:$0xff] %vm268, %v1894
    %v1897 = vld [vmem:[%s903] sm:$0xff]
    %v1898 = vsel %vm268, %v1894, 0
    %1900 = vmatprep.subr.mxu0 0.0
    %1901 = vmatpush1.msra.mxu0 0.0
    %1902 = vmatprep.subr.mxu0 0.0
    %1903 = vmatpush1.msra.mxu0 0.0
    %1904 = vmatprep.subr.mxu0 0.0
    %1905 = vmatpush1.msra.mxu0 0.0
    %1906 = vmatprep.subr.mxu0 0.0
    %1907 = vmatpush1.msra.mxu0 0.0
    %1908 = vmatprep.subr.mxu0 0.0
    %1909 = vmatpush1.msra.mxu0 0.0
    %1910 = vmatprep.subr.mxu0 0.0
    %1911 = vmatpush1.msra.mxu0 0.0
    %1912 = vmatprep.subr.mxu0 0.0
    %1913 = vmatpush1.msra.mxu0 0.0
    %1914 = vmatprep.subr.mxu0 0.0
    %1915 = vmatpush1.msra.mxu0 0.0
    %1916 = vmatprep.subr.mxu0 0.0
    %1917 = vmatpush1.msra.mxu0 0.0
    %1918 = vmatprep.subr.mxu0 0.0
    %1919 = vmatpush1.msra.mxu0 0.0
    %1920 = vmatprep.subr.mxu0 0.0
    %1921 = vmatpush1.msra.mxu0 0.0
    %1922 = vmatprep.subr.mxu0 0.0
    %1923 = vmatpush1.msra.mxu0 0.0
    %1924 = vmatprep.subr.mxu0 0.0
    %1925 = vmatpush1.msra.mxu0 %v1274
    %1926 = vmatprep.subr.mxu0 0.0
    %1927 = vmatpush1.msra.mxu0 %v1273
    %1928 = vmatprep.subr.mxu0 0.0
    %1929 = vmatpush1.msra.mxu0 %v1272
    %1930 = vmatprep.subr.mxu0 0.0
    %1931 = vmatpush1.msra.mxu0 %v1271
    %1932 = vmatprep.subr.mxu0 0.0
    %1933 = vmatpush2.msra.mxu0 0.0
    %1934 = vmatprep.subr.mxu0 0.0
    %1935 = vmatpush2.msra.mxu0 0.0
    %1936 = vmatprep.subr.mxu0 0.0
    %1937 = vmatpush2.msra.mxu0 0.0
    %1938 = vmatprep.subr.mxu0 0.0
    %1939 = vmatpush2.msra.mxu0 0.0
    %1940 = vmatprep.subr.mxu0 0.0
    %1941 = vmatpush2.msra.mxu0 0.0
    %1942 = vmatprep.subr.mxu0 0.0
    %1943 = vmatpush2.msra.mxu0 0.0
    %1944 = vmatprep.subr.mxu0 0.0
    %1945 = vmatpush2.msra.mxu0 0.0
    %1946 = vmatprep.subr.mxu0 0.0
    %1947 = vmatpush2.msra.mxu0 0.0
    %1948 = vmatprep.subr.mxu0 0.0
    %1949 = vmatpush2.msra.mxu0 0.0
    %1950 = vmatprep.subr.mxu0 0.0
    %1951 = vmatpush2.msra.mxu0 0.0
    %1952 = vmatprep.subr.mxu0 0.0
    %1953 = vmatpush2.msra.mxu0 0.0
    %1954 = vmatprep.subr.mxu0 0.0
    %1955 = vmatpush2.msra.mxu0 0.0
    %1956 = vmatprep.subr.mxu0 0.0
    %1957 = vmatpush2.msra.mxu0 0.0
    %1958 = vmatprep.subr.mxu0 0.0
    %1959 = vmatpush2.msra.mxu0 0.0
    %1960 = vmatprep.subr.mxu0 0.0
    %1961 = vmatpush2.msra.mxu0 0.0
    %1962 = vmatprep.subr.mxu0 0.0
    %1963 = vmatpush2.msra.mxu0 0.0
    %1964 = vmatprep.mubr.f32.mxu0 0.0
    %1965 = vmatmul.mubr.f32.gmra.mxu0 %v1898
    %v1966 = vpop.f32.mrf.mxu0
    %v1967 = vadd.f32 0.0, %v1966
    %v1968 = vpop.f32.mrf.mxu0
    %1969 = vdwg.mxu0
    %v1970 = vadd.f32 %v1897, %v1967
    %v1971 = vtanh.pop %v1970
    %v1972 = vxor.u32 %v1970, 2147483648
    %v1973 = vmul.f32 %v1972, 1.442695
    %v1974 = vpow.pop %v1973
    %v1975 = vadd.f32 %v1974, 1.0
    %v1976 = vrcp.pop %v1975
    %v1977 = vmul.f32 1.0, %v1976
    %v1978 = vsel %vm107, %v1971, %v1977
    %v1979 = vmul.f32 %v1978, %v1885
    %1981 = vrot.lane.b32.xlu0 %v1978, 64
    %v1982 = vpop.permute.xlu0 %1981
    %v1984 = vmul.f32 %v1978, %v1982
    %1986 = vrot.lane.b32.xlu0 %v1984, 32
    %v1987 = vpop.permute.xlu0 %1986
    %v1989 = vadd.f32 %v1979, %v1987
    %v1990 = vtanh.pop %v1989
    %1992 = vrot.lane.b32.xlu0 %v1990, 64
    %v1993 = vpop.permute.xlu0 %1992
    %v1995 = vmul.f32 %v1978, %v1993
    %1997 = vrot.lane.b32.xlu0 %v1995, 32
    %v1998 = vpop.permute.xlu0 %1997
    %2000 = vst.msk [vmem:[%s1007] sm:$0xff] %vm268, %v1998
    %v2001 = vld [vmem:[%s1009] sm:$0xff]
    %v2002 = vsel %vm268, %v1998, 0
    %2004 = vmatprep.subr.mxu0 0.0
    %2005 = vmatpush1.msra.mxu0 0.0
    %2006 = vmatprep.subr.mxu0 0.0
    %2007 = vmatpush1.msra.mxu0 0.0
    %2008 = vmatprep.subr.mxu0 0.0
    %2009 = vmatpush1.msra.mxu0 0.0
    %2010 = vmatprep.subr.mxu0 0.0
    %2011 = vmatpush1.msra.mxu0 0.0
    %2012 = vmatprep.subr.mxu0 0.0
    %2013 = vmatpush1.msra.mxu0 0.0
    %2014 = vmatprep.subr.mxu0 0.0
    %2015 = vmatpush1.msra.mxu0 0.0
    %2016 = vmatprep.subr.mxu0 0.0
    %2017 = vmatpush1.msra.mxu0 0.0
    %2018 = vmatprep.subr.mxu0 0.0
    %2019 = vmatpush1.msra.mxu0 0.0
    %2020 = vmatprep.subr.mxu0 0.0
    %2021 = vmatpush1.msra.mxu0 0.0
    %2022 = vmatprep.subr.mxu0 0.0
    %2023 = vmatpush1.msra.mxu0 0.0
    %2024 = vmatprep.subr.mxu0 0.0
    %2025 = vmatpush1.msra.mxu0 0.0
    %2026 = vmatprep.subr.mxu0 0.0
    %2027 = vmatpush1.msra.mxu0 0.0
    %2028 = vmatprep.subr.mxu0 0.0
    %2029 = vmatpush1.msra.mxu0 %v1274
    %2030 = vmatprep.subr.mxu0 0.0
    %2031 = vmatpush1.msra.mxu0 %v1273
    %2032 = vmatprep.subr.mxu0 0.0
    %2033 = vmatpush1.msra.mxu0 %v1272
    %2034 = vmatprep.subr.mxu0 0.0
    %2035 = vmatpush1.msra.mxu0 %v1271
    %2036 = vmatprep.subr.mxu0 0.0
    %2037 = vmatpush2.msra.mxu0 0.0
    %2038 = vmatprep.subr.mxu0 0.0
    %2039 = vmatpush2.msra.mxu0 0.0
    %2040 = vmatprep.subr.mxu0 0.0
    %2041 = vmatpush2.msra.mxu0 0.0
    %2042 = vmatprep.subr.mxu0 0.0
    %2043 = vmatpush2.msra.mxu0 0.0
    %2044 = vmatprep.subr.mxu0 0.0
    %2045 = vmatpush2.msra.mxu0 0.0
    %2046 = vmatprep.subr.mxu0 0.0
    %2047 = vmatpush2.msra.mxu0 0.0
    %2048 = vmatprep.subr.mxu0 0.0
    %2049 = vmatpush2.msra.mxu0 0.0
    %2050 = vmatprep.subr.mxu0 0.0
    %2051 = vmatpush2.msra.mxu0 0.0
    %2052 = vmatprep.subr.mxu0 0.0
    %2053 = vmatpush2.msra.mxu0 0.0
    %2054 = vmatprep.subr.mxu0 0.0
    %2055 = vmatpush2.msra.mxu0 0.0
    %2056 = vmatprep.subr.mxu0 0.0
    %2057 = vmatpush2.msra.mxu0 0.0
    %2058 = vmatprep.subr.mxu0 0.0
    %2059 = vmatpush2.msra.mxu0 0.0
    %2060 = vmatprep.subr.mxu0 0.0
    %2061 = vmatpush2.msra.mxu0 0.0
    %2062 = vmatprep.subr.mxu0 0.0
    %2063 = vmatpush2.msra.mxu0 0.0
    %2064 = vmatprep.subr.mxu0 0.0
    %2065 = vmatpush2.msra.mxu0 0.0
    %2066 = vmatprep.subr.mxu0 0.0
    %2067 = vmatpush2.msra.mxu0 0.0
    %2068 = vmatprep.mubr.f32.mxu0 0.0
    %2069 = vmatmul.mubr.f32.gmra.mxu0 %v2002
    %v2070 = vpop.f32.mrf.mxu0
    %v2071 = vadd.f32 0.0, %v2070
    %v2072 = vpop.f32.mrf.mxu0
    %2073 = vdwg.mxu0
    %v2074 = vadd.f32 %v2001, %v2071
    %v2075 = vtanh.pop %v2074
    %v2076 = vxor.u32 %v2074, 2147483648
    %v2077 = vmul.f32 %v2076, 1.442695
    %v2078 = vpow.pop %v2077
    %v2079 = vadd.f32 %v2078, 1.0
    %v2080 = vrcp.pop %v2079
    %v2081 = vmul.f32 1.0, %v2080
    %v2082 = vsel %vm107, %v2075, %v2081
    %v2083 = vmul.f32 %v2082, %v1989
    %2085 = vrot.lane.b32.xlu0 %v2082, 64
    %v2086 = vpop.permute.xlu0 %2085
    %v2088 = vmul.f32 %v2082, %v2086
    %2090 = vrot.lane.b32.xlu0 %v2088, 32
    %v2091 = vpop.permute.xlu0 %2090
    %v2093 = vadd.f32 %v2083, %v2091
    %v2094 = vtanh.pop %v2093
    %2096 = vrot.lane.b32.xlu0 %v2094, 64
    %v2097 = vpop.permute.xlu0 %2096
    %v2099 = vmul.f32 %v2082, %v2097
    %2101 = vrot.lane.b32.xlu0 %v2099, 32
    %v2102 = vpop.permute.xlu0 %2101
    %2104 = vst.msk [vmem:[%s1113] sm:$0xff] %vm268, %v2102
    %v2105 = vld [vmem:[%s7] sm:$0x1]
    %v2106 = vld [vmem:[#allocation3] sm:$0xff]
    %v2107 = vld [vmem:[#allocation3 + $0x8] sm:$0xff]
    %v2108 = vld [vmem:[#allocation3 + $0x10] sm:$0xff]
    %v2109 = vld [vmem:[#allocation3 + $0x18] sm:$0xff]
    %v2110 = vld [vmem:[#allocation3 + $0x20] sm:$0xff]
    %v2111 = vld [vmem:[#allocation3 + $0x28] sm:$0xff]
    %v2112 = vld [vmem:[#allocation3 + $0x30] sm:$0xff]
    %v2113 = vld [vmem:[#allocation3 + $0x38] sm:$0xff]
    %v2115 = vlaneseq
    %v2116 = vshrl.u32 %v2115, 7
    %v2117 = vsub.s32 0, %v2116
    %v2118 = vrot.slane %v2105, %v2117
    %v2120 = vmul.f32 %v2106, %v2118
    %v2121 = vmul.f32 %v2107, %v2118
    %v2122 = vmul.f32 %v2108, %v2118
    %v2123 = vmul.f32 %v2109, %v2118
    %v2124 = vmul.f32 %v2110, %v2118
    %v2125 = vmul.f32 %v2111, %v2118
    %v2126 = vmul.f32 %v2112, %v2118
    %v2127 = vmul.f32 %v2113, %v2118
    %v2128 = vsel %vm268, %v2120, 0.0
    %2129 = vadd.xlane.f32.xlu0 %v2128
    %v2130 = vpop.xlane.xlu0 %2129
    %v2131 = vsel %vm268, %v2121, 0.0
    %2132 = vadd.xlane.f32.xlu0 %v2131
    %v2133 = vpop.xlane.xlu0 %2132
    %v2134 = vsel %vm268, %v2122, 0.0
    %2135 = vadd.xlane.f32.xlu0 %v2134
    %v2136 = vpop.xlane.xlu0 %2135
    %v2137 = vsel %vm268, %v2123, 0.0
    %2138 = vadd.xlane.f32.xlu0 %v2137
    %v2139 = vpop.xlane.xlu0 %2138
    %v2140 = vsel %vm268, %v2124, 0.0
    %2141 = vadd.xlane.f32.xlu0 %v2140
    %v2142 = vpop.xlane.xlu0 %2141
    %v2143 = vsel %vm268, %v2125, 0.0
    %2144 = vadd.xlane.f32.xlu0 %v2143
    %v2145 = vpop.xlane.xlu0 %2144
    %v2146 = vsel %vm268, %v2126, 0.0
    %2147 = vadd.xlane.f32.xlu0 %v2146
    %v2148 = vpop.xlane.xlu0 %2147
    %v2149 = vsel %vm268, %v2127, 0.0
    %2150 = vadd.xlane.f32.xlu0 %v2149
    %v2151 = vpop.xlane.xlu0 %2150
    %v2152 = vld [vmem:[#allocation4] sm:$0x1]
    %v2154 = vlaneseq
    %v2155 = vshrl.u32 %v2154, 7
    %v2156 = vsub.s32 0, %v2155
    %v2157 = vrot.slane %v2152, %v2156
    %2158 = vset.pattern.permute.xlu0 0
    %2159 = vperm.xlu0 %2158, %v2157
    %v2160 = vpop.permute.xlu0 %2159
    %v2162 = vadd.f32 %v2130, %v2160
    %v2163 = vadd.f32 %v2133, %v2160
    %v2164 = vadd.f32 %v2136, %v2160
    %v2165 = vadd.f32 %v2139, %v2160
    %v2166 = vadd.f32 %v2142, %v2160
    %v2167 = vadd.f32 %v2145, %v2160
    %v2168 = vadd.f32 %v2148, %v2160
    %v2169 = vadd.f32 %v2151, %v2160
    %v2170 = vxor.u32 %v2162, 2147483648
    %v2171 = vxor.u32 %v2163, 2147483648
    %v2172 = vxor.u32 %v2164, 2147483648
    %v2173 = vxor.u32 %v2165, 2147483648
    %v2174 = vxor.u32 %v2166, 2147483648
    %v2175 = vxor.u32 %v2167, 2147483648
    %v2176 = vxor.u32 %v2168, 2147483648
    %v2177 = vxor.u32 %v2169, 2147483648
    %v2178 = vmul.f32 %v2170, 1.442695
    %v2179 = vpow.pop %v2178
    %v2180 = vmul.f32 %v2171, 1.442695
    %v2181 = vpow.pop %v2180
    %v2182 = vmul.f32 %v2172, 1.442695
    %v2183 = vpow.pop %v2182
    %v2184 = vmul.f32 %v2173, 1.442695
    %v2185 = vpow.pop %v2184
    %v2186 = vmul.f32 %v2174, 1.442695
    %v2187 = vpow.pop %v2186
    %v2188 = vmul.f32 %v2175, 1.442695
    %v2189 = vpow.pop %v2188
    %v2190 = vmul.f32 %v2176, 1.442695
    %v2191 = vpow.pop %v2190
    %v2192 = vmul.f32 %v2177, 1.442695
    %v2193 = vpow.pop %v2192
    %v2194 = vadd.f32 %v2179, 1.0
    %v2195 = vadd.f32 %v2181, 1.0
    %v2196 = vadd.f32 %v2183, 1.0
    %v2197 = vadd.f32 %v2185, 1.0
    %v2198 = vadd.f32 %v2187, 1.0
    %v2199 = vadd.f32 %v2189, 1.0
    %v2200 = vadd.f32 %v2191, 1.0
    %v2201 = vadd.f32 %v2193, 1.0
    %v2202 = vrcp.pop %v2194
    %v2203 = vmul.f32 1.0, %v2202
    %v2204 = vrcp.pop %v2195
    %v2205 = vmul.f32 1.0, %v2204
    %v2206 = vrcp.pop %v2196
    %v2207 = vmul.f32 1.0, %v2206
    %v2208 = vrcp.pop %v2197
    %v2209 = vmul.f32 1.0, %v2208
    %v2210 = vrcp.pop %v2198
    %v2211 = vmul.f32 1.0, %v2210
    %v2212 = vrcp.pop %v2199
    %v2213 = vmul.f32 1.0, %v2212
    %v2214 = vrcp.pop %v2200
    %v2215 = vmul.f32 1.0, %v2214
    %v2216 = vrcp.pop %v2201
    %v2217 = vmul.f32 1.0, %v2216
    %v2226 = vlaneseq
    %v2227 = vshrl.u32 %v2226, 7
    %v2228 = vsub.s32 %v104, %v2227
    %v2229 = vrot.slane %v2203, %v2228
    %v2230 = vlaneseq
    %v2231 = vshrl.u32 %v2230, 7
    %v2232 = vsub.s32 %v104, %v2231
    %v2233 = vrot.slane %v2205, %v2232
    %v2234 = vlaneseq
    %v2235 = vshrl.u32 %v2234, 7
    %v2236 = vsub.s32 %v104, %v2235
    %v2237 = vrot.slane %v2207, %v2236
    %v2238 = vlaneseq
    %v2239 = vshrl.u32 %v2238, 7
    %v2240 = vsub.s32 %v104, %v2239
    %v2241 = vrot.slane %v2209, %v2240
    %v2242 = vlaneseq
    %v2243 = vshrl.u32 %v2242, 7
    %v2244 = vsub.s32 %v104, %v2243
    %v2245 = vrot.slane %v2211, %v2244
    %v2246 = vlaneseq
    %v2247 = vshrl.u32 %v2246, 7
    %v2248 = vsub.s32 %v104, %v2247
    %v2249 = vrot.slane %v2213, %v2248
    %v2250 = vlaneseq
    %v2251 = vshrl.u32 %v2250, 7
    %v2252 = vsub.s32 %v104, %v2251
    %v2253 = vrot.slane %v2215, %v2252
    %v2254 = vlaneseq
    %v2255 = vshrl.u32 %v2254, 7
    %v2256 = vsub.s32 %v104, %v2255
    %v2257 = vrot.slane %v2217, %v2256
    %vm2258 = vcmask 1041409
    %v2259 = vsel %vm2258, %v2233, %v2229
    %vm2260 = vcmask 1042434
    %v2261 = vsel %vm2260, %v2237, %v2259
    %vm2262 = vcmask 1043459
    %v2263 = vsel %vm2262, %v2241, %v2261
    %vm2264 = vcmask 1044484
    %v2265 = vsel %vm2264, %v2245, %v2263
    %vm2266 = vcmask 1045509
    %v2267 = vsel %vm2266, %v2249, %v2265
    %vm2268 = vcmask 1046534
    %v2269 = vsel %vm2268, %v2253, %v2267
    %vm2270 = vcmask 1047559
    %v2271 = vsel %vm2270, %v2257, %v2269
    %vm2273 = vcmask 64512
    %2274 = vst.msk [vmem:[#allocation14] sm:$0xff] %vm2273, %v2271
    // Predicated region
    $region58: #{tpu_custom_call.1} parent=1 // pred_check
      _
    $region59: #{tpu_custom_call.1} parent=1 // pred_check_branch
      %2276 = sbr.rel (0) target = $region61
    $region60: #{tpu_custom_call.1} parent=1 // pred_region
      %s2278 = ssub.s32 128, 128
      %2279 = vsyncadd [#allocation7], %s2278
      %s2281 = sshll.u32 [#allocation14], 4
      %s2282 = int_to_ptr.vmem [resolvable:$true] %s2281
      %2284 = dma.vmem_to_hbm [thread:$0]  %s2282, 128, %s9, [#allocation7]
    $region61: #{tpu_custom_call.1} parent=1 // pred_fallthru
      _
    // Predicated region
    $region62: #{tpu_custom_call.1} parent=1 // pred_check
      _
    $region63: #{tpu_custom_call.1} parent=1 // pred_check_branch
      %2286 = sbr.rel (0) target = $region65
    $region64: #{tpu_custom_call.1} parent=1 // pred_region
      %2287 = dma.done [#allocation7], 128
    $region65: #{tpu_custom_call.1} parent=1 // pred_fallthru
      _
    %2288 = vsyncpa [#allocation6], 1
    %2289 = vsyncpa [#allocation9], 1
    %2290 = vsyncpa [#allocation12], 1
    %2291 = vsyncpa [#allocation7], 1

</llo_original>
